<compile_context>
chip_gen: v5e
topology: v5e:2x2
jax: 0.10.0
libtpu: 0.0.40
codegen_flags: <defaults>
</compile_context>

<pallas_src>
import jax
import jax.numpy as jnp
from jax.experimental import pallas as pl
from jax.experimental.pallas import tpu as pltpu

# ---- logical problem sizes (consistent with the module's forward) ----
INPUT_DIM = 16
HIDDEN_DIM = 32
OUTPUT_DIM = 8
DEPTH = 2
LN_EPS = 1e-5  # PyTorch nn.LayerNorm default

# ---- TPU layout ----
PAD = 128           # hidden/output feature axes padded to one full lane-width
BATCH = 1024        # demo batch
BATCH_TILE = 256    # rows per grid step (grid=(4,): 2 steps per core on v7x)

N_MATS = 2 * DEPTH + 2      # w_in, (w1, w2) x DEPTH, w_out
N_LN_ROWS = 4 * DEPTH       # (ln1_g, ln1_b, ln2_g, ln2_b) x DEPTH
B_IN_ROW = N_LN_ROWS        # row index of b_in in the merged param buffer
B_OUT_ROW = N_LN_ROWS + 1   # row index of b_out
N_PARAM_ROWS = N_LN_ROWS + 2


def residual_branch_kernel(x_ref, w_ref, p_ref, o_ref):
    # x_ref : (BATCH_TILE, INPUT_DIM)  f32 input rows (unpadded)
    # w_ref : (N_MATS, PAD, PAD)       bf16 zero-padded weight stack
    # p_ref : (N_PARAM_ROWS, PAD)      f32 LN gamma/beta rows + b_in + b_out (zero-padded)
    # o_ref : (BATCH_TILE, PAD)        f32 lane-dense output (real cols sliced in wrapper)
    inv_h = jnp.float32(1.0 / HIDDEN_DIM)
    # mask of real hidden lanes -- built once, reused by all LayerNorm calls
    lane_mask = jax.lax.broadcasted_iota(jnp.int32, (1, PAD), 1) < HIDDEN_DIM

    def layernorm(h, row):
        gamma = p_ref[row:row + 1, :]
        beta = p_ref[row + 1:row + 2, :]
        # padded lanes of h are exactly 0, so the 128-lane sum == sum over HIDDEN_DIM lanes
        mu = jnp.sum(h, axis=-1, keepdims=True) * inv_h
        # two-pass variance (numerically robust); mask so padded lanes don't add (-mu)^2
        c = jnp.where(lane_mask, h - mu, 0.0)
        var = jnp.sum(c * c, axis=-1, keepdims=True) * inv_h
        # gamma/beta are zero in padded lanes -> padded lanes stay exactly 0
        return c * jax.lax.rsqrt(var + LN_EPS) * gamma + beta

    # input2hidden: Linear + SiLU (+ Dropout == identity in eval mode)
    x = x_ref[...]                                    # (BATCH_TILE, INPUT_DIM) f32
    w_in = w_ref[0][:INPUT_DIM, :]                    # (INPUT_DIM, PAD) bf16, tile-aligned slice
    h = jnp.dot(x.astype(jnp.bfloat16), w_in,
                preferred_element_type=jnp.float32) + p_ref[B_IN_ROW:B_IN_ROW + 1, :]
    h = jax.nn.silu(h)

    # residual hidden blocks (DEPTH is static -> unrolled)
    for d in range(DEPTH):
        t = layernorm(h, 4 * d)
        t = jnp.dot(t.astype(jnp.bfloat16), w_ref[1 + 2 * d],
                    preferred_element_type=jnp.float32)
        t = jax.nn.silu(t)
        # Dropout == identity (eval mode)
        t = jnp.dot(t.astype(jnp.bfloat16), w_ref[2 + 2 * d],
                    preferred_element_type=jnp.float32)
        h = layernorm(h + t, 4 * d + 2)

    # hidden2output
    out = jnp.dot(h.astype(jnp.bfloat16), w_ref[N_MATS - 1],
                  preferred_element_type=jnp.float32) + p_ref[B_OUT_ROW:B_OUT_ROW + 1, :]
    o_ref[...] = out.astype(o_ref.dtype)


def residual_branch(x, packed):
    w, p = packed
    batch = x.shape[0]
    assert batch % BATCH_TILE == 0
    out = pl.pallas_call(
        residual_branch_kernel,
        out_shape=jax.ShapeDtypeStruct((batch, PAD), jnp.float32),
        grid=(batch // BATCH_TILE,),
        in_specs=[
            pl.BlockSpec((BATCH_TILE, INPUT_DIM), lambda i: (i, 0)),   # unpadded input rows
            pl.BlockSpec((N_MATS, PAD, PAD), lambda i: (0, 0, 0)),     # resident bf16 weights
            pl.BlockSpec((N_PARAM_ROWS, PAD), lambda i: (0, 0)),       # resident LN + bias rows
        ],
        out_specs=pl.BlockSpec((BATCH_TILE, PAD), lambda i: (i, 0)),
        compiler_params=pltpu.CompilerParams(dimension_semantics=("parallel",)),
    )(x, w, p)
    # TODO(synk): lane-pack OUTPUT_DIM columns (16 rows x 8 cols per 128-lane slab) if
    # output writeback bandwidth ever matters; keeping the f32 lane-dense store for now.
    return out[:, :OUTPUT_DIM]


# ------------------------- host-side parameter handling -------------------------

def init_params(key):
    ks = jax.random.split(key, 10)
    scale = 0.1
    w_in = scale * jax.random.normal(ks[0], (INPUT_DIM, HIDDEN_DIM), jnp.float32)
    b_in = scale * jax.random.normal(ks[1], (HIDDEN_DIM,), jnp.float32)
    ln1_g = 1.0 + scale * jax.random.normal(ks[2], (DEPTH, HIDDEN_DIM), jnp.float32)
    ln1_b = scale * jax.random.normal(ks[3], (DEPTH, HIDDEN_DIM), jnp.float32)
    w1 = scale * jax.random.normal(ks[4], (DEPTH, HIDDEN_DIM, HIDDEN_DIM), jnp.float32)
    w2 = scale * jax.random.normal(ks[5], (DEPTH, HIDDEN_DIM, HIDDEN_DIM), jnp.float32)
    ln2_g = 1.0 + scale * jax.random.normal(ks[6], (DEPTH, HIDDEN_DIM), jnp.float32)
    ln2_b = scale * jax.random.normal(ks[7], (DEPTH, HIDDEN_DIM), jnp.float32)
    w_out = scale * jax.random.normal(ks[8], (HIDDEN_DIM, OUTPUT_DIM), jnp.float32)
    b_out = scale * jax.random.normal(ks[9], (OUTPUT_DIM,), jnp.float32)
    return (w_in, b_in, ln1_g, ln1_b, w1, w2, ln2_g, ln2_b, w_out, b_out)


def _pad2(a):
    out = jnp.zeros((PAD, PAD), jnp.float32)
    return out.at[: a.shape[0], : a.shape[1]].set(a)


def pack_params(params):
    """Zero-pad feature axes to PAD; weights -> one bf16 stack, LN+bias -> one f32 buffer."""
    (w_in, b_in, ln1_g, ln1_b, w1, w2, ln2_g, ln2_b, w_out, b_out) = params

    mats = [_pad2(w_in)]
    for d in range(DEPTH):
        mats.append(_pad2(w1[d]))
        mats.append(_pad2(w2[d]))
    mats.append(_pad2(w_out))
    w = jnp.stack(mats, axis=0).astype(jnp.bfloat16)              # (N_MATS, PAD, PAD) bf16

    ln_rows = []
    for d in range(DEPTH):
        ln_rows += [ln1_g[d], ln1_b[d], ln2_g[d], ln2_b[d]]
    p = jnp.zeros((N_PARAM_ROWS, PAD), jnp.float32)
    p = p.at[:N_LN_ROWS, :HIDDEN_DIM].set(jnp.stack(ln_rows, axis=0))
    p = p.at[B_IN_ROW, :HIDDEN_DIM].set(b_in)
    p = p.at[B_OUT_ROW, :OUTPUT_DIM].set(b_out)                   # (N_PARAM_ROWS, PAD)
    return (w, p)


# ------------------------- references -------------------------

def _ln_ref(h, g, beta):
    mu = jnp.mean(h, axis=-1, keepdims=True)
    var = jnp.mean((h - mu) ** 2, axis=-1, keepdims=True)
    return (h - mu) * jax.lax.rsqrt(var + LN_EPS) * g + beta


def reference_f32(x, params):
    (w_in, b_in, ln1_g, ln1_b, w1, w2, ln2_g, ln2_b, w_out, b_out) = params
    h = jax.nn.silu(x @ w_in + b_in)
    for d in range(DEPTH):
        t = _ln_ref(h, ln1_g[d], ln1_b[d])
        t = jax.nn.silu(t @ w1[d]) @ w2[d]
        h = _ln_ref(h + t, ln2_g[d], ln2_b[d])
    return h @ w_out + b_out


def reference_bf16(x, params):
    """Same math as the kernel: bf16 dot operands, f32 accumulation / LN / SiLU."""
    (w_in, b_in, ln1_g, ln1_b, w1, w2, ln2_g, ln2_b, w_out, b_out) = params

    def mm(a, b):
        return jnp.dot(a.astype(jnp.bfloat16), b.astype(jnp.bfloat16),
                       preferred_element_type=jnp.float32)

    h = jax.nn.silu(mm(x, w_in) + b_in)
    for d in range(DEPTH):
        t = _ln_ref(h, ln1_g[d], ln1_b[d])
        t = mm(jax.nn.silu(mm(t, w1[d])), w2[d])
        h = _ln_ref(h + t, ln2_g[d], ln2_b[d])
    return mm(h, w_out) + b_out


if __name__ == "__main__":
    key = jax.random.PRNGKey(0)
    kx, kp = jax.random.split(key)
    x = jax.random.normal(kx, (BATCH, INPUT_DIM), jnp.float32)
    params = init_params(kp)
    packed = pack_params(params)

    out = residual_branch(x, packed)
    out = jax.block_until_ready(out)
    assert out.shape == (BATCH, OUTPUT_DIM)

    ref_b = reference_bf16(x, params)   # matches kernel numerics closely
    ref_f = reference_f32(x, params)    # full-f32 module semantics (looser: bf16 operands)
    assert jnp.allclose(out, ref_b, atol=2e-3, rtol=2e-3), "mismatch vs bf16-operand reference"
    assert jnp.allclose(out, ref_f, atol=5e-2, rtol=5e-2), "mismatch vs f32 reference"
    print("KERNEL_OK")
</pallas_src>

<mosaic_0001>
module attributes {stable_mosaic.version = 11 : i64} {
  func.func @residual_branch_kernel(%arg0: i32, %arg1: memref<256x16xf32, #tpu.memory_space<vmem>>, %arg2: memref<6x128x128xbf16, #tpu.memory_space<vmem>>, %arg3: memref<10x128xf32, #tpu.memory_space<vmem>>, %arg4: memref<256x128xf32, #tpu.memory_space<vmem>>) attributes {dimension_semantics = [#tpu.dimension_semantics<parallel>], iteration_bounds = array<i64: 4>, scalar_prefetch = 0 : i64, scratch_operands = 0 : i64, tpu.core_type = #tpu.core_type<tc>, window_params = [{transform_indices = @transform_0, window_bounds = array<i64: 256, 16>}, {pipeline_mode = #tpu.pipeline_mode<synchronous>, transform_indices = @transform_1, window_bounds = array<i64: 6, 128, 128>}, {pipeline_mode = #tpu.pipeline_mode<synchronous>, transform_indices = @transform_2, window_bounds = array<i64: 10, 128>}, {transform_indices = @transform_3, window_bounds = array<i64: 256, 128>}]} {
    %0 = tpu.iota {dimensions = array<i32: 1>} : vector<1x128xi32>
    %c32_i32 = arith.constant 32 : i32
    %1 = vector.broadcast %c32_i32 : i32 to vector<1x128xi32>
    %2 = arith.cmpi slt, %0, %1 : vector<1x128xi32>
    %c0 = arith.constant 0 : index
    %c0_0 = arith.constant 0 : index
    %3 = vector.load %arg1[%c0, %c0_0] : memref<256x16xf32, #tpu.memory_space<vmem>>, vector<256x16xf32>
    %c0_1 = arith.constant 0 : index
    %c0_2 = arith.constant 0 : index
    %c0_3 = arith.constant 0 : index
    %4 = vector.load %arg2[%c0_1, %c0_2, %c0_3] : memref<6x128x128xbf16, #tpu.memory_space<vmem>>, vector<1x128x128xbf16>
    %5 = vector.shape_cast %4 : vector<1x128x128xbf16> to vector<128x128xbf16>
    %6 = vector.extract_strided_slice %5 {offsets = [0, 0], sizes = [16, 128], strides = [1, 1]} : vector<128x128xbf16> to vector<16x128xbf16>
    %7 = arith.truncf %3 : vector<256x16xf32> to vector<256x16xbf16>
    %cst = arith.constant dense<0.000000e+00> : vector<256x128xf32>
    %8 = tpu.matmul %7, %6, %cst {dimension_numbers = #tpu.dot_dimension_numbers<[1], [0], [0], [1], [0, 0, 1, 1], [], []>} : vector<256x16xbf16>, vector<16x128xbf16>, vector<256x128xf32> -> vector<256x128xf32>
    %c8 = arith.constant 8 : index
    %c0_4 = arith.constant 0 : index
    %9 = vector.load %arg3[%c8, %c0_4] : memref<10x128xf32, #tpu.memory_space<vmem>>, vector<1x128xf32>
    %10 = vector.broadcast %9 : vector<1x128xf32> to vector<256x128xf32>
    %11 = arith.addf %8, %10 : vector<256x128xf32>
    %12 = arith.negf %11 : vector<256x128xf32>
    %13 = math.exp %12 : vector<256x128xf32>
    %cst_5 = arith.constant 1.000000e+00 : f32
    %14 = vector.broadcast %cst_5 : f32 to vector<256x128xf32>
    %15 = arith.addf %14, %13 : vector<256x128xf32>
    %16 = arith.divf %14, %15 : vector<256x128xf32>
    %17 = arith.mulf %11, %16 : vector<256x128xf32>
    %c0_6 = arith.constant 0 : index
    %c0_7 = arith.constant 0 : index
    %18 = vector.load %arg3[%c0_6, %c0_7] : memref<10x128xf32, #tpu.memory_space<vmem>>, vector<1x128xf32>
    %c1 = arith.constant 1 : index
    %c0_8 = arith.constant 0 : index
    %19 = vector.load %arg3[%c1, %c0_8] : memref<10x128xf32, #tpu.memory_space<vmem>>, vector<1x128xf32>
    %cst_9 = arith.constant dense<0.000000e+00> : vector<256xf32>
    %20 = vector.multi_reduction <add>, %17, %cst_9 [1] : vector<256x128xf32> to vector<256xf32>
    %21 = vector.shape_cast %20 : vector<256xf32> to vector<256x1xf32>
    %cst_10 = arith.constant 3.125000e-02 : f32
    %22 = vector.broadcast %cst_10 : f32 to vector<256x1xf32>
    %23 = arith.mulf %21, %22 : vector<256x1xf32>
    %24 = vector.broadcast %23 : vector<256x1xf32> to vector<256x128xf32>
    %25 = arith.subf %17, %24 : vector<256x128xf32>
    %cst_11 = arith.constant 0.000000e+00 : f32
    %26 = vector.shape_cast %2 : vector<1x128xi1> to vector<1x128xi1>
    %27 = vector.broadcast %26 : vector<1x128xi1> to vector<256x128xi1>
    %28 = vector.broadcast %cst_11 : f32 to vector<256x128xf32>
    %29 = arith.select %27, %25, %28 : vector<256x128xi1>, vector<256x128xf32>
    %30 = arith.mulf %29, %29 : vector<256x128xf32>
    %cst_12 = arith.constant dense<0.000000e+00> : vector<256xf32>
    %31 = vector.multi_reduction <add>, %30, %cst_12 [1] : vector<256x128xf32> to vector<256xf32>
    %32 = vector.shape_cast %31 : vector<256xf32> to vector<256x1xf32>
    %cst_13 = arith.constant 3.125000e-02 : f32
    %33 = vector.broadcast %cst_13 : f32 to vector<256x1xf32>
    %34 = arith.mulf %32, %33 : vector<256x1xf32>
    %cst_14 = arith.constant 9.99999974E-6 : f32
    %35 = vector.broadcast %cst_14 : f32 to vector<256x1xf32>
    %36 = arith.addf %34, %35 : vector<256x1xf32>
    %37 = math.rsqrt %36 : vector<256x1xf32>
    %38 = vector.broadcast %37 : vector<256x1xf32> to vector<256x128xf32>
    %39 = arith.mulf %29, %38 : vector<256x128xf32>
    %40 = vector.broadcast %18 : vector<1x128xf32> to vector<256x128xf32>
    %41 = arith.mulf %39, %40 : vector<256x128xf32>
    %42 = vector.broadcast %19 : vector<1x128xf32> to vector<256x128xf32>
    %43 = arith.addf %41, %42 : vector<256x128xf32>
    %44 = arith.truncf %43 : vector<256x128xf32> to vector<256x128xbf16>
    %c1_15 = arith.constant 1 : index
    %c0_16 = arith.constant 0 : index
    %c0_17 = arith.constant 0 : index
    %45 = vector.load %arg2[%c1_15, %c0_16, %c0_17] : memref<6x128x128xbf16, #tpu.memory_space<vmem>>, vector<1x128x128xbf16>
    %46 = vector.shape_cast %45 : vector<1x128x128xbf16> to vector<128x128xbf16>
    %cst_18 = arith.constant dense<0.000000e+00> : vector<256x128xf32>
    %47 = tpu.matmul %44, %46, %cst_18 {dimension_numbers = #tpu.dot_dimension_numbers<[1], [0], [0], [1], [0, 0, 1, 1], [], []>} : vector<256x128xbf16>, vector<128x128xbf16>, vector<256x128xf32> -> vector<256x128xf32>
    %48 = arith.negf %47 : vector<256x128xf32>
    %49 = math.exp %48 : vector<256x128xf32>
    %cst_19 = arith.constant 1.000000e+00 : f32
    %50 = vector.broadcast %cst_19 : f32 to vector<256x128xf32>
    %51 = arith.addf %50, %49 : vector<256x128xf32>
    %52 = arith.divf %50, %51 : vector<256x128xf32>
    %53 = arith.mulf %47, %52 : vector<256x128xf32>
    %54 = arith.truncf %53 : vector<256x128xf32> to vector<256x128xbf16>
    %c2 = arith.constant 2 : index
    %c0_20 = arith.constant 0 : index
    %c0_21 = arith.constant 0 : index
    %55 = vector.load %arg2[%c2, %c0_20, %c0_21] : memref<6x128x128xbf16, #tpu.memory_space<vmem>>, vector<1x128x128xbf16>
    %56 = vector.shape_cast %55 : vector<1x128x128xbf16> to vector<128x128xbf16>
    %cst_22 = arith.constant dense<0.000000e+00> : vector<256x128xf32>
    %57 = tpu.matmul %54, %56, %cst_22 {dimension_numbers = #tpu.dot_dimension_numbers<[1], [0], [0], [1], [0, 0, 1, 1], [], []>} : vector<256x128xbf16>, vector<128x128xbf16>, vector<256x128xf32> -> vector<256x128xf32>
    %58 = arith.addf %17, %57 : vector<256x128xf32>
    %c2_23 = arith.constant 2 : index
    %c0_24 = arith.constant 0 : index
    %59 = vector.load %arg3[%c2_23, %c0_24] : memref<10x128xf32, #tpu.memory_space<vmem>>, vector<1x128xf32>
    %c3 = arith.constant 3 : index
    %c0_25 = arith.constant 0 : index
    %60 = vector.load %arg3[%c3, %c0_25] : memref<10x128xf32, #tpu.memory_space<vmem>>, vector<1x128xf32>
    %cst_26 = arith.constant dense<0.000000e+00> : vector<256xf32>
    %61 = vector.multi_reduction <add>, %58, %cst_26 [1] : vector<256x128xf32> to vector<256xf32>
    %62 = vector.shape_cast %61 : vector<256xf32> to vector<256x1xf32>
    %cst_27 = arith.constant 3.125000e-02 : f32
    %63 = vector.broadcast %cst_27 : f32 to vector<256x1xf32>
    %64 = arith.mulf %62, %63 : vector<256x1xf32>
    %65 = vector.broadcast %64 : vector<256x1xf32> to vector<256x128xf32>
    %66 = arith.subf %58, %65 : vector<256x128xf32>
    %cst_28 = arith.constant 0.000000e+00 : f32
    %67 = vector.shape_cast %2 : vector<1x128xi1> to vector<1x128xi1>
    %68 = vector.broadcast %67 : vector<1x128xi1> to vector<256x128xi1>
    %69 = vector.broadcast %cst_28 : f32 to vector<256x128xf32>
    %70 = arith.select %68, %66, %69 : vector<256x128xi1>, vector<256x128xf32>
    %71 = arith.mulf %70, %70 : vector<256x128xf32>
    %cst_29 = arith.constant dense<0.000000e+00> : vector<256xf32>
    %72 = vector.multi_reduction <add>, %71, %cst_29 [1] : vector<256x128xf32> to vector<256xf32>
    %73 = vector.shape_cast %72 : vector<256xf32> to vector<256x1xf32>
    %cst_30 = arith.constant 3.125000e-02 : f32
    %74 = vector.broadcast %cst_30 : f32 to vector<256x1xf32>
    %75 = arith.mulf %73, %74 : vector<256x1xf32>
    %cst_31 = arith.constant 9.99999974E-6 : f32
    %76 = vector.broadcast %cst_31 : f32 to vector<256x1xf32>
    %77 = arith.addf %75, %76 : vector<256x1xf32>
    %78 = math.rsqrt %77 : vector<256x1xf32>
    %79 = vector.broadcast %78 : vector<256x1xf32> to vector<256x128xf32>
    %80 = arith.mulf %70, %79 : vector<256x128xf32>
    %81 = vector.broadcast %59 : vector<1x128xf32> to vector<256x128xf32>
    %82 = arith.mulf %80, %81 : vector<256x128xf32>
    %83 = vector.broadcast %60 : vector<1x128xf32> to vector<256x128xf32>
    %84 = arith.addf %82, %83 : vector<256x128xf32>
    %c4 = arith.constant 4 : index
    %c0_32 = arith.constant 0 : index
    %85 = vector.load %arg3[%c4, %c0_32] : memref<10x128xf32, #tpu.memory_space<vmem>>, vector<1x128xf32>
    %c5 = arith.constant 5 : index
    %c0_33 = arith.constant 0 : index
    %86 = vector.load %arg3[%c5, %c0_33] : memref<10x128xf32, #tpu.memory_space<vmem>>, vector<1x128xf32>
    %cst_34 = arith.constant dense<0.000000e+00> : vector<256xf32>
    %87 = vector.multi_reduction <add>, %84, %cst_34 [1] : vector<256x128xf32> to vector<256xf32>
    %88 = vector.shape_cast %87 : vector<256xf32> to vector<256x1xf32>
    %cst_35 = arith.constant 3.125000e-02 : f32
    %89 = vector.broadcast %cst_35 : f32 to vector<256x1xf32>
    %90 = arith.mulf %88, %89 : vector<256x1xf32>
    %91 = vector.broadcast %90 : vector<256x1xf32> to vector<256x128xf32>
    %92 = arith.subf %84, %91 : vector<256x128xf32>
    %cst_36 = arith.constant 0.000000e+00 : f32
    %93 = vector.shape_cast %2 : vector<1x128xi1> to vector<1x128xi1>
    %94 = vector.broadcast %93 : vector<1x128xi1> to vector<256x128xi1>
    %95 = vector.broadcast %cst_36 : f32 to vector<256x128xf32>
    %96 = arith.select %94, %92, %95 : vector<256x128xi1>, vector<256x128xf32>
    %97 = arith.mulf %96, %96 : vector<256x128xf32>
    %cst_37 = arith.constant dense<0.000000e+00> : vector<256xf32>
    %98 = vector.multi_reduction <add>, %97, %cst_37 [1] : vector<256x128xf32> to vector<256xf32>
    %99 = vector.shape_cast %98 : vector<256xf32> to vector<256x1xf32>
    %cst_38 = arith.constant 3.125000e-02 : f32
    %100 = vector.broadcast %cst_38 : f32 to vector<256x1xf32>
    %101 = arith.mulf %99, %100 : vector<256x1xf32>
    %cst_39 = arith.constant 9.99999974E-6 : f32
    %102 = vector.broadcast %cst_39 : f32 to vector<256x1xf32>
    %103 = arith.addf %101, %102 : vector<256x1xf32>
    %104 = math.rsqrt %103 : vector<256x1xf32>
    %105 = vector.broadcast %104 : vector<256x1xf32> to vector<256x128xf32>
    %106 = arith.mulf %96, %105 : vector<256x128xf32>
    %107 = vector.broadcast %85 : vector<1x128xf32> to vector<256x128xf32>
    %108 = arith.mulf %106, %107 : vector<256x128xf32>
    %109 = vector.broadcast %86 : vector<1x128xf32> to vector<256x128xf32>
    %110 = arith.addf %108, %109 : vector<256x128xf32>
    %111 = arith.truncf %110 : vector<256x128xf32> to vector<256x128xbf16>
    %c3_40 = arith.constant 3 : index
    %c0_41 = arith.constant 0 : index
    %c0_42 = arith.constant 0 : index
    %112 = vector.load %arg2[%c3_40, %c0_41, %c0_42] : memref<6x128x128xbf16, #tpu.memory_space<vmem>>, vector<1x128x128xbf16>
    %113 = vector.shape_cast %112 : vector<1x128x128xbf16> to vector<128x128xbf16>
    %cst_43 = arith.constant dense<0.000000e+00> : vector<256x128xf32>
    %114 = tpu.matmul %111, %113, %cst_43 {dimension_numbers = #tpu.dot_dimension_numbers<[1], [0], [0], [1], [0, 0, 1, 1], [], []>} : vector<256x128xbf16>, vector<128x128xbf16>, vector<256x128xf32> -> vector<256x128xf32>
    %115 = arith.negf %114 : vector<256x128xf32>
    %116 = math.exp %115 : vector<256x128xf32>
    %cst_44 = arith.constant 1.000000e+00 : f32
    %117 = vector.broadcast %cst_44 : f32 to vector<256x128xf32>
    %118 = arith.addf %117, %116 : vector<256x128xf32>
    %119 = arith.divf %117, %118 : vector<256x128xf32>
    %120 = arith.mulf %114, %119 : vector<256x128xf32>
    %121 = arith.truncf %120 : vector<256x128xf32> to vector<256x128xbf16>
    %c4_45 = arith.constant 4 : index
    %c0_46 = arith.constant 0 : index
    %c0_47 = arith.constant 0 : index
    %122 = vector.load %arg2[%c4_45, %c0_46, %c0_47] : memref<6x128x128xbf16, #tpu.memory_space<vmem>>, vector<1x128x128xbf16>
    %123 = vector.shape_cast %122 : vector<1x128x128xbf16> to vector<128x128xbf16>
    %cst_48 = arith.constant dense<0.000000e+00> : vector<256x128xf32>
    %124 = tpu.matmul %121, %123, %cst_48 {dimension_numbers = #tpu.dot_dimension_numbers<[1], [0], [0], [1], [0, 0, 1, 1], [], []>} : vector<256x128xbf16>, vector<128x128xbf16>, vector<256x128xf32> -> vector<256x128xf32>
    %125 = arith.addf %84, %124 : vector<256x128xf32>
    %c6 = arith.constant 6 : index
    %c0_49 = arith.constant 0 : index
    %126 = vector.load %arg3[%c6, %c0_49] : memref<10x128xf32, #tpu.memory_space<vmem>>, vector<1x128xf32>
    %c7 = arith.constant 7 : index
    %c0_50 = arith.constant 0 : index
    %127 = vector.load %arg3[%c7, %c0_50] : memref<10x128xf32, #tpu.memory_space<vmem>>, vector<1x128xf32>
    %cst_51 = arith.constant dense<0.000000e+00> : vector<256xf32>
    %128 = vector.multi_reduction <add>, %125, %cst_51 [1] : vector<256x128xf32> to vector<256xf32>
    %129 = vector.shape_cast %128 : vector<256xf32> to vector<256x1xf32>
    %cst_52 = arith.constant 3.125000e-02 : f32
    %130 = vector.broadcast %cst_52 : f32 to vector<256x1xf32>
    %131 = arith.mulf %129, %130 : vector<256x1xf32>
    %132 = vector.broadcast %131 : vector<256x1xf32> to vector<256x128xf32>
    %133 = arith.subf %125, %132 : vector<256x128xf32>
    %cst_53 = arith.constant 0.000000e+00 : f32
    %134 = vector.shape_cast %2 : vector<1x128xi1> to vector<1x128xi1>
    %135 = vector.broadcast %134 : vector<1x128xi1> to vector<256x128xi1>
    %136 = vector.broadcast %cst_53 : f32 to vector<256x128xf32>
    %137 = arith.select %135, %133, %136 : vector<256x128xi1>, vector<256x128xf32>
    %138 = arith.mulf %137, %137 : vector<256x128xf32>
    %cst_54 = arith.constant dense<0.000000e+00> : vector<256xf32>
    %139 = vector.multi_reduction <add>, %138, %cst_54 [1] : vector<256x128xf32> to vector<256xf32>
    %140 = vector.shape_cast %139 : vector<256xf32> to vector<256x1xf32>
    %cst_55 = arith.constant 3.125000e-02 : f32
    %141 = vector.broadcast %cst_55 : f32 to vector<256x1xf32>
    %142 = arith.mulf %140, %141 : vector<256x1xf32>
    %cst_56 = arith.constant 9.99999974E-6 : f32
    %143 = vector.broadcast %cst_56 : f32 to vector<256x1xf32>
    %144 = arith.addf %142, %143 : vector<256x1xf32>
    %145 = math.rsqrt %144 : vector<256x1xf32>
    %146 = vector.broadcast %145 : vector<256x1xf32> to vector<256x128xf32>
    %147 = arith.mulf %137, %146 : vector<256x128xf32>
    %148 = vector.broadcast %126 : vector<1x128xf32> to vector<256x128xf32>
    %149 = arith.mulf %147, %148 : vector<256x128xf32>
    %150 = vector.broadcast %127 : vector<1x128xf32> to vector<256x128xf32>
    %151 = arith.addf %149, %150 : vector<256x128xf32>
    %152 = arith.truncf %151 : vector<256x128xf32> to vector<256x128xbf16>
    %c5_57 = arith.constant 5 : index
    %c0_58 = arith.constant 0 : index
    %c0_59 = arith.constant 0 : index
    %153 = vector.load %arg2[%c5_57, %c0_58, %c0_59] : memref<6x128x128xbf16, #tpu.memory_space<vmem>>, vector<1x128x128xbf16>
    %154 = vector.shape_cast %153 : vector<1x128x128xbf16> to vector<128x128xbf16>
    %cst_60 = arith.constant dense<0.000000e+00> : vector<256x128xf32>
    %155 = tpu.matmul %152, %154, %cst_60 {dimension_numbers = #tpu.dot_dimension_numbers<[1], [0], [0], [1], [0, 0, 1, 1], [], []>} : vector<256x128xbf16>, vector<128x128xbf16>, vector<256x128xf32> -> vector<256x128xf32>
    %c9 = arith.constant 9 : index
    %c0_61 = arith.constant 0 : index
    %156 = vector.load %arg3[%c9, %c0_61] : memref<10x128xf32, #tpu.memory_space<vmem>>, vector<1x128xf32>
    %157 = vector.broadcast %156 : vector<1x128xf32> to vector<256x128xf32>
    %158 = arith.addf %155, %157 : vector<256x128xf32>
    %c0_62 = arith.constant 0 : index
    %c0_63 = arith.constant 0 : index
    %159 = vector.load %arg4[%c0_62, %c0_63] : memref<256x128xf32, #tpu.memory_space<vmem>>, vector<256x128xf32>
    tpu.vector_store %arg4[%c0_62, %c0_63], %158 {strides = array<i32>} : memref<256x128xf32, #tpu.memory_space<vmem>>, vector<256x128xf32>,
    return
  }
  func.func @transform_0(%arg0: i32) -> (i32, i32) {
    %c0_i32 = arith.constant 0 : i32
    %c0_i32_0 = arith.constant 0 : i32
    return %arg0, %c0_i32 : i32, i32
  }
  func.func @transform_1(%arg0: i32) -> (i32, i32, i32) {
    %c0_i32 = arith.constant 0 : i32
    %c0_i32_0 = arith.constant 0 : i32
    %c0_i32_1 = arith.constant 0 : i32
    %c0_i32_2 = arith.constant 0 : i32
    return %c0_i32, %c0_i32_0, %c0_i32_1 : i32, i32, i32
  }
  func.func @transform_2(%arg0: i32) -> (i32, i32) {
    %c0_i32 = arith.constant 0 : i32
    %c0_i32_0 = arith.constant 0 : i32
    %c0_i32_1 = arith.constant 0 : i32
    return %c0_i32, %c0_i32_0 : i32, i32
  }
  func.func @transform_3(%arg0: i32) -> (i32, i32) {
    %c0_i32 = arith.constant 0 : i32
    %c0_i32_0 = arith.constant 0 : i32
    return %arg0, %c0_i32 : i32, i32
  }
}

</mosaic_0001>

<llo_original>
// kernel: tpu_custom_call.1
$region0: #{tpu_custom_call.1}
  #allocation0 [shape = 'u32[]', space=smem, size = 0x4, offset = 0x4, fixed_abs, tag = 'smem constant byte address 0x4 - core index']
  #allocation1 [shape = 'u32[72,128]{1,0:T(1,128)}', space=vmem, size = 0x9000, scoped, tag = 'internal scratch']
  %s0 = inlined_call_operand.vmem [shape: f32[1024,16], index: 0, kind: input, shape index: {}]
  %s1 = inlined_call_operand.vmem [shape: bf16[6,128,128], index: 1, kind: input, shape index: {}]
  %s2 = inlined_call_operand.vmem [shape: f32[10,128], index: 2, kind: input, shape index: {}]
  %s3 = inlined_call_operand.hbm [shape: f32[1024,128], index: 3, kind: output, shape index: {}]
  %s4 = sld [smem:[#allocation0]]
  $region45: #{tpu_custom_call.1} parent=0
    _
  %s6 = ssub.s32 1, %s4
  %s7 = scalar_select 0, %s6, %s4
  $region1: #{tpu_custom_call.1} parent=0
    #allocation2 [shape = 'u8[262144]{0}', space=vmem, size = 0x40000, scoped, tag = 'output window, operand 0']
    #allocation3 [shape = 's32[2]{0}', space=sflag, size = 0x8, scoped, tag = 'scoped memory for tpu_custom_call.1']
    %8 = vsyncpa [#allocation3], 0
    %s9 = scalar_lea.sflag [#allocation3], 1
    %10 = vsyncpa %s9, 0
    loop: start=0, step=1, limit=6
    $region2: #{tpu_custom_call.1} parent=1 // loop_pre_header
      _
    $region3: #{tpu_custom_call.1} parent=1 // loop_header
      %s12 = sphi 0, %s16
      %p13 = scmp.ge.s32.totalorder %s12, 6
      %s22 = sphi 0, %s24
      %s25 = sphi 0, %s22
      %s26 = sphi 0, %s25
      %s42 = sphi 0, %s26
      %s46 = sphi 0, %s46
      %s48 = sphi 0, %s46
      %s49 = sphi 0, %s48
      %s63 = sphi 0, %s49
      %s67 = sphi 0, %s67
      %s69 = sphi 0, %s67
      %s70 = sphi 0, %s69
      %s84 = sphi 0, %s70
      %s90 = sphi 0, %s92
      %s93 = sphi 0, %s90
      %s94 = sphi 0, %s93
      %s110 = sphi 0, %s94
    $region4: #{tpu_custom_call.1} parent=1 // loop_header_branch
      %15 = sbr.rel (%p13) target = $region8
    $region5: #{tpu_custom_call.1} parent=1 // loop_body
      %s17 = ssub.s32 %s12, 1
      %s18 = ssub.s32 %s12, 2
      %s19 = sadd.s32 %s12, 1
      %s20 = ssub.s32 %s12, %s19
      %p21 = scmp.eq.s32.totalorder %s20, 0
      %s23 = sadd.s32 %s22, 1
      %s24 = scalar_select %p21, %s22, %s23
      %p27 = pneg %p21
      %p28 = scmp.eq.s32.totalorder %s12, 3
      %p29 = por %p27, %p28
      %p30 = scmp.ne.s32.totalorder %s22, %s25
      %p31 = scmp.eq.s32.totalorder %s12, 0
      %p32 = por %p30, %p31
      %p33 = scmp.ne.s32.totalorder %s22, %s25
      %p34 = scmp.eq.s32.totalorder %s17, 3
      %p35 = por %p33, %p34
      %p36 = scmp.ne.s32.totalorder %s25, %s26
      %p37 = scmp.eq.s32.totalorder %s17, 0
      %p38 = por %p36, %p37
      %p39 = scmp.ne.s32.totalorder %s25, %s26
      %p40 = scmp.eq.s32.totalorder %s18, 3
      %p41 = por %p39, %p40
      %p43 = scmp.ne.s32.totalorder %s26, %s42
      %p44 = scmp.eq.s32.totalorder %s18, 0
      %p45 = por %p43, %p44
      %s47 = sadd.s32 %s46, 1
      %p50 = scmp.eq.s32.totalorder %s12, 3
      %p51 = scmp.ne.s32.totalorder %s46, %s48
      %p52 = scmp.eq.s32.totalorder %s12, 0
      %p53 = por %p51, %p52
      %p54 = scmp.ne.s32.totalorder %s46, %s48
      %p55 = scmp.eq.s32.totalorder %s17, 3
      %p56 = por %p54, %p55
      %p57 = scmp.ne.s32.totalorder %s48, %s49
      %p58 = scmp.eq.s32.totalorder %s17, 0
      %p59 = por %p57, %p58
      %p60 = scmp.ne.s32.totalorder %s48, %s49
      %p61 = scmp.eq.s32.totalorder %s18, 3
      %p62 = por %p60, %p61
      %p64 = scmp.ne.s32.totalorder %s49, %s63
      %p65 = scmp.eq.s32.totalorder %s18, 0
      %p66 = por %p64, %p65
      %s68 = sadd.s32 %s67, 1
      %p71 = scmp.eq.s32.totalorder %s12, 3
      %p72 = scmp.ne.s32.totalorder %s67, %s69
      %p73 = scmp.eq.s32.totalorder %s12, 0
      %p74 = por %p72, %p73
      %p75 = scmp.ne.s32.totalorder %s67, %s69
      %p76 = scmp.eq.s32.totalorder %s17, 3
      %p77 = por %p75, %p76
      %p78 = scmp.ne.s32.totalorder %s69, %s70
      %p79 = scmp.eq.s32.totalorder %s17, 0
      %p80 = por %p78, %p79
      %p81 = scmp.ne.s32.totalorder %s69, %s70
      %p82 = scmp.eq.s32.totalorder %s18, 3
      %p83 = por %p81, %p82
      %p85 = scmp.ne.s32.totalorder %s70, %s84
      %p86 = scmp.eq.s32.totalorder %s18, 0
      %p87 = por %p85, %p86
      %s88 = ssub.s32 %s12, %s19
      %p89 = scmp.eq.s32.totalorder %s88, 0
      %s91 = sadd.s32 %s90, 1
      %s92 = scalar_select %p89, %s90, %s91
      %p95 = pneg %p89
      %p96 = scmp.eq.s32.totalorder %s12, 3
      %p97 = por %p95, %p96
      %p98 = scmp.ne.s32.totalorder %s90, %s93
      %p99 = scmp.eq.s32.totalorder %s12, 0
      %p100 = por %p98, %p99
      %p101 = scmp.ne.s32.totalorder %s90, %s93
      %p102 = scmp.eq.s32.totalorder %s17, 3
      %p103 = por %p101, %p102
      %p104 = scmp.ne.s32.totalorder %s93, %s94
      %p105 = scmp.eq.s32.totalorder %s17, 0
      %p106 = por %p104, %p105
      %p107 = scmp.ne.s32.totalorder %s93, %s94
      %p108 = scmp.eq.s32.totalorder %s18, 3
      %p109 = por %p107, %p108
      %p111 = scmp.ne.s32.totalorder %s94, %s110
      %p112 = scmp.eq.s32.totalorder %s18, 0
      %p113 = por %p111, %p112
      %p114 = scmp.le.s32.totalorder 1, %s12
      %p115 = scmp.lt.s32.totalorder %s12, 5
      %p116 = pnand %p114, %p115
      %p117 = pneg %p116
      // Predicated region
      $region9: #{tpu_custom_call.1} parent=5 // pred_check
        _
      $region10: #{tpu_custom_call.1} parent=5 // pred_check_branch
        %119 = sbr.rel (%p116) target = $region12
      $region11: #{tpu_custom_call.1} parent=5 // pred_region
        %s120 = ssub.s32 %s12, 1
        // Predicated region
        $region13: #{tpu_custom_call.1} parent=11 // pred_check
          %p121 = pneg %p59
        $region14: #{tpu_custom_call.1} parent=11 // pred_check_branch
          %123 = sbr.rel (%p121) target = $region16
        $region15: #{tpu_custom_call.1} parent=11 // pred_region
          _
        $region16: #{tpu_custom_call.1} parent=11 // pred_fallthru
          _
        // Predicated region
        $region17: #{tpu_custom_call.1} parent=11 // pred_check
          %p124 = pneg %p80
        $region18: #{tpu_custom_call.1} parent=11 // pred_check_branch
          %126 = sbr.rel (%p124) target = $region20
        $region19: #{tpu_custom_call.1} parent=11 // pred_region
          _
        $region20: #{tpu_custom_call.1} parent=11 // pred_fallthru
          _
      $region12: #{tpu_custom_call.1} parent=5 // pred_fallthru
        _
      %p127 = scmp.lt.s32.totalorder %s12, 4
      // Predicated region
      $region21: #{tpu_custom_call.1} parent=5 // pred_check
        %p128 = pneg %p127
      $region22: #{tpu_custom_call.1} parent=5 // pred_check_branch
        %130 = sbr.rel (%p128) target = $region24
      $region23: #{tpu_custom_call.1} parent=5 // pred_region
        // Predicated region
        $region25: #{tpu_custom_call.1} parent=23 // pred_check
          %p131 = pneg %p32
        $region26: #{tpu_custom_call.1} parent=23 // pred_check_branch
          %133 = sbr.rel (%p131) target = $region28
        $region27: #{tpu_custom_call.1} parent=23 // pred_region
          %s134 = smul.u32 32, %s12
          %p135 = scmp.lt.s32.totalorder %s134, 127
          %s136 = scalar_select %p135, %s134, 127
          %s137 = smul.addr %s136, 8
          %s138 = scalar_lea.vmem %s0, %s137
          %s139 = smul.u32 32, %s12
        $region28: #{tpu_custom_call.1} parent=23 // pred_fallthru
          _
      $region24: #{tpu_custom_call.1} parent=5 // pred_fallthru
        _
      %p140 = scmp.le.s32.totalorder 1, %s12
      %p141 = scmp.lt.s32.totalorder %s12, 5
      %p142 = pnand %p140, %p141
      %p143 = pneg %p142
      // Predicated region
      $region29: #{tpu_custom_call.1} parent=5 // pred_check
        _
      $region30: #{tpu_custom_call.1} parent=5 // pred_check_branch
        %145 = sbr.rel (%p142) target = $region32
      $region31: #{tpu_custom_call.1} parent=5 // pred_region
        %s146 = ssub.s32 %s12, 1
        %s147 = smul.u32 32, %s17
        %p148 = scmp.lt.s32.totalorder %s147, 127
        %s149 = scalar_select %p148, %s147, 127
        %s150 = smul.addr %s149, 8
        %s151 = scalar_lea.vmem %s0, %s150
        %p152 = pneg %p38
        %p153 = pneg %p35
        %p154 = pneg %p59
        %p155 = pneg %p56
        %p156 = pneg %p80
        %p157 = pneg %p77
        %p158 = pneg %p106
        %p159 = pneg %p103
        %s160 = sand.u32 %s93, 1
        %s161 = scalar_lea.sflag [#allocation3], %s160
        %s162 = sand.u32 %s93, 1
        %s163 = smul.addr %s162, 256
        %s164 = scalar_lea.vmem [#allocation2], %s163
        %s165 = smul.u32 32, %s17
        %p166 = scmp.lt.s32.totalorder %s165, 127
        %s167 = scalar_select %p166, %s165, 127
        %s168 = smul.addr %s167, 8
        %s169 = scalar_lea.vmem %s0, %s168
        %s170 = smul.u32 32, %s17
        %s171 = smul.u32 32, %s17
        %v173 = vlaneseq
        %v174 = vand.u32 %v173, 127
        %vm175 = vcmp.lt.s32.totalorder %v174, 32
        %v176 = vld [vmem:[%s169] sm:$0xff]
        %v177 = vld [vmem:[%s169 + $0x8] sm:$0xff]
        %v178 = vld [vmem:[%s169 + $0x10] sm:$0xff]
        %v179 = vld [vmem:[%s169 + $0x18] sm:$0xff]
        %v180 = vld [vmem:[%s169 + $0x20] sm:$0xff]
        %v181 = vld [vmem:[%s169 + $0x28] sm:$0xff]
        %v182 = vld [vmem:[%s169 + $0x30] sm:$0xff]
        %v183 = vld [vmem:[%s169 + $0x38] sm:$0xff]
        %v184 = vld [vmem:[%s169 + $0x40] sm:$0xff]
        %v185 = vld [vmem:[%s169 + $0x48] sm:$0xff]
        %v186 = vld [vmem:[%s169 + $0x50] sm:$0xff]
        %v187 = vld [vmem:[%s169 + $0x58] sm:$0xff]
        %v188 = vld [vmem:[%s169 + $0x60] sm:$0xff]
        %v189 = vld [vmem:[%s169 + $0x68] sm:$0xff]
        %v190 = vld [vmem:[%s169 + $0x70] sm:$0xff]
        %v191 = vld [vmem:[%s169 + $0x78] sm:$0xff]
        %v192 = vld [vmem:[%s169 + $0x80] sm:$0xff]
        %v193 = vld [vmem:[%s169 + $0x88] sm:$0xff]
        %v194 = vld [vmem:[%s169 + $0x90] sm:$0xff]
        %v195 = vld [vmem:[%s169 + $0x98] sm:$0xff]
        %v196 = vld [vmem:[%s169 + $0xa0] sm:$0xff]
        %v197 = vld [vmem:[%s169 + $0xa8] sm:$0xff]
        %v198 = vld [vmem:[%s169 + $0xb0] sm:$0xff]
        %v199 = vld [vmem:[%s169 + $0xb8] sm:$0xff]
        %v200 = vld [vmem:[%s169 + $0xc0] sm:$0xff]
        %v201 = vld [vmem:[%s169 + $0xc8] sm:$0xff]
        %v202 = vld [vmem:[%s169 + $0xd0] sm:$0xff]
        %v203 = vld [vmem:[%s169 + $0xd8] sm:$0xff]
        %v204 = vld [vmem:[%s169 + $0xe0] sm:$0xff]
        %v205 = vld [vmem:[%s169 + $0xe8] sm:$0xff]
        %v206 = vld [vmem:[%s169 + $0xf0] sm:$0xff]
        %v207 = vld [vmem:[%s169 + $0xf8] sm:$0xff]
        %v208 = vld [vmem:[%s1] sm:$0xf]
        %v209 = vld [vmem:[%s1 + $0x4] sm:$0xf]
        %v210 = vpack.c.bf16 %v177, %v176
        %v211 = vpack.c.bf16 %v179, %v178
        %v212 = vpack.c.bf16 %v181, %v180
        %v213 = vpack.c.bf16 %v183, %v182
        %v214 = vpack.c.bf16 %v185, %v184
        %v215 = vpack.c.bf16 %v187, %v186
        %v216 = vpack.c.bf16 %v189, %v188
        %v217 = vpack.c.bf16 %v191, %v190
        %v218 = vpack.c.bf16 %v193, %v192
        %v219 = vpack.c.bf16 %v195, %v194
        %v220 = vpack.c.bf16 %v197, %v196
        %v221 = vpack.c.bf16 %v199, %v198
        %v222 = vpack.c.bf16 %v201, %v200
        %v223 = vpack.c.bf16 %v203, %v202
        %v224 = vpack.c.bf16 %v205, %v204
        %v225 = vpack.c.bf16 %v207, %v206
        %v226 = vld [vmem:[%s2 + $0x8] sm:$0x1]
        %v227 = vperm.slane %v226, 0
        %v230 = vunpack.c.l.b16 %v208
        %v231 = vunpack.c.l.b16 %v209
        %v232 = vpack.c.b16 %v231, %v230
        %vm234 = vcmask 130048
        %v236 = vsel %vm234, %v210, 0
        %v239 = vsel %vm234, %v211, 0
        %v242 = vsel %vm234, %v212, 0
        %v245 = vsel %vm234, %v213, 0
        %v248 = vsel %vm234, %v214, 0
        %v251 = vsel %vm234, %v215, 0
        %v254 = vsel %vm234, %v216, 0
        %v257 = vsel %vm234, %v217, 0
        %v260 = vsel %vm234, %v218, 0
        %v263 = vsel %vm234, %v219, 0
        %v266 = vsel %vm234, %v220, 0
        %v269 = vsel %vm234, %v221, 0
        %v272 = vsel %vm234, %v222, 0
        %v275 = vsel %vm234, %v223, 0
        %v278 = vsel %vm234, %v224, 0
        %v281 = vsel %vm234, %v225, 0
        %283 = vmatpush.bf16.msra.mxu0 0
        %284 = vmatpush.bf16.msra.mxu0 0
        %285 = vmatpush.bf16.msra.mxu0 0
        %286 = vmatpush.bf16.msra.mxu0 0
        %287 = vmatpush.bf16.msra.mxu0 0
        %288 = vmatpush.bf16.msra.mxu0 0
        %289 = vmatpush.bf16.msra.mxu0 0
        %290 = vmatpush.bf16.msra.mxu0 %v232
        %291 = vmatmul.bf16.gmra.mxu0 %v236
        %v292 = vpop.f32.mrf.mxu0
        %v293 = vadd.f32 %v227, %v292
        %v294 = vpop.f32.mrf.mxu0
        %v295 = vadd.f32 %v227, %v294
        %296 = vmatmul.bf16.gmra.mxu0 %v239
        %v297 = vpop.f32.mrf.mxu0
        %v298 = vadd.f32 %v227, %v297
        %v299 = vpop.f32.mrf.mxu0
        %v300 = vadd.f32 %v227, %v299
        %301 = vmatmul.bf16.gmra.mxu0 %v242
        %v302 = vpop.f32.mrf.mxu0
        %v303 = vadd.f32 %v227, %v302
        %v304 = vpop.f32.mrf.mxu0
        %v305 = vadd.f32 %v227, %v304
        %306 = vmatmul.bf16.gmra.mxu0 %v245
        %v307 = vpop.f32.mrf.mxu0
        %v308 = vadd.f32 %v227, %v307
        %v309 = vpop.f32.mrf.mxu0
        %v310 = vadd.f32 %v227, %v309
        %311 = vmatmul.bf16.gmra.mxu0 %v248
        %v312 = vpop.f32.mrf.mxu0
        %v313 = vadd.f32 %v227, %v312
        %v314 = vpop.f32.mrf.mxu0
        %v315 = vadd.f32 %v227, %v314
        %316 = vmatmul.bf16.gmra.mxu0 %v251
        %v317 = vpop.f32.mrf.mxu0
        %v318 = vadd.f32 %v227, %v317
        %v319 = vpop.f32.mrf.mxu0
        %v320 = vadd.f32 %v227, %v319
        %321 = vmatmul.bf16.gmra.mxu0 %v254
        %v322 = vpop.f32.mrf.mxu0
        %v323 = vadd.f32 %v227, %v322
        %v324 = vpop.f32.mrf.mxu0
        %v325 = vadd.f32 %v227, %v324
        %326 = vmatmul.bf16.gmra.mxu0 %v257
        %v327 = vpop.f32.mrf.mxu0
        %v328 = vadd.f32 %v227, %v327
        %v329 = vpop.f32.mrf.mxu0
        %v330 = vadd.f32 %v227, %v329
        %331 = vmatmul.bf16.gmra.mxu0 %v260
        %v332 = vpop.f32.mrf.mxu0
        %v333 = vadd.f32 %v227, %v332
        %v334 = vpop.f32.mrf.mxu0
        %v335 = vadd.f32 %v227, %v334
        %336 = vmatmul.bf16.gmra.mxu0 %v263
        %v337 = vpop.f32.mrf.mxu0
        %v338 = vadd.f32 %v227, %v337
        %v339 = vpop.f32.mrf.mxu0
        %v340 = vadd.f32 %v227, %v339
        %341 = vmatmul.bf16.gmra.mxu0 %v266
        %v342 = vpop.f32.mrf.mxu0
        %v343 = vadd.f32 %v227, %v342
        %v344 = vpop.f32.mrf.mxu0
        %v345 = vadd.f32 %v227, %v344
        %346 = vmatmul.bf16.gmra.mxu0 %v269
        %v347 = vpop.f32.mrf.mxu0
        %v348 = vadd.f32 %v227, %v347
        %v349 = vpop.f32.mrf.mxu0
        %v350 = vadd.f32 %v227, %v349
        %351 = vmatmul.bf16.gmra.mxu0 %v272
        %v352 = vpop.f32.mrf.mxu0
        %v353 = vadd.f32 %v227, %v352
        %v354 = vpop.f32.mrf.mxu0
        %v355 = vadd.f32 %v227, %v354
        %356 = vmatmul.bf16.gmra.mxu0 %v275
        %v357 = vpop.f32.mrf.mxu0
        %v358 = vadd.f32 %v227, %v357
        %v359 = vpop.f32.mrf.mxu0
        %v360 = vadd.f32 %v227, %v359
        %361 = vmatmul.bf16.gmra.mxu0 %v278
        %v362 = vpop.f32.mrf.mxu0
        %v363 = vadd.f32 %v227, %v362
        %v364 = vpop.f32.mrf.mxu0
        %v365 = vadd.f32 %v227, %v364
        %366 = vmatmul.bf16.gmra.mxu0 %v281
        %v367 = vpop.f32.mrf.mxu0
        %v368 = vadd.f32 %v227, %v367
        %v369 = vpop.f32.mrf.mxu0
        %v370 = vadd.f32 %v227, %v369
        %371 = vdwg.mxu0
        %v372 = vxor.u32 %v293, 2147483648
        %v373 = vxor.u32 %v295, 2147483648
        %v374 = vxor.u32 %v298, 2147483648
        %v375 = vxor.u32 %v300, 2147483648
        %v376 = vxor.u32 %v303, 2147483648
        %v377 = vxor.u32 %v305, 2147483648
        %v378 = vxor.u32 %v308, 2147483648
        %v379 = vxor.u32 %v310, 2147483648
        %v380 = vxor.u32 %v313, 2147483648
        %v381 = vxor.u32 %v315, 2147483648
        %v382 = vxor.u32 %v318, 2147483648
        %v383 = vxor.u32 %v320, 2147483648
        %v384 = vxor.u32 %v323, 2147483648
        %v385 = vxor.u32 %v325, 2147483648
        %v386 = vxor.u32 %v328, 2147483648
        %v387 = vxor.u32 %v330, 2147483648
        %v388 = vxor.u32 %v333, 2147483648
        %v389 = vxor.u32 %v335, 2147483648
        %v390 = vxor.u32 %v338, 2147483648
        %v391 = vxor.u32 %v340, 2147483648
        %v392 = vxor.u32 %v343, 2147483648
        %v393 = vxor.u32 %v345, 2147483648
        %v394 = vxor.u32 %v348, 2147483648
        %v395 = vxor.u32 %v350, 2147483648
        %v396 = vxor.u32 %v353, 2147483648
        %v397 = vxor.u32 %v355, 2147483648
        %v398 = vxor.u32 %v358, 2147483648
        %v399 = vxor.u32 %v360, 2147483648
        %v400 = vxor.u32 %v363, 2147483648
        %v401 = vxor.u32 %v365, 2147483648
        %v402 = vxor.u32 %v368, 2147483648
        %v403 = vxor.u32 %v370, 2147483648
        %v404 = vmul.f32 %v372, 1.442695
        %v405 = vpow.pop %v404
        %v406 = vmul.f32 %v373, 1.442695
        %v407 = vpow.pop %v406
        %v408 = vmul.f32 %v374, 1.442695
        %v409 = vpow.pop %v408
        %v410 = vmul.f32 %v375, 1.442695
        %v411 = vpow.pop %v410
        %v412 = vmul.f32 %v376, 1.442695
        %v413 = vpow.pop %v412
        %v414 = vmul.f32 %v377, 1.442695
        %v415 = vpow.pop %v414
        %v416 = vmul.f32 %v378, 1.442695
        %v417 = vpow.pop %v416
        %v418 = vmul.f32 %v379, 1.442695
        %v419 = vpow.pop %v418
        %v420 = vmul.f32 %v380, 1.442695
        %v421 = vpow.pop %v420
        %v422 = vmul.f32 %v381, 1.442695
        %v423 = vpow.pop %v422
        %v424 = vmul.f32 %v382, 1.442695
        %v425 = vpow.pop %v424
        %v426 = vmul.f32 %v383, 1.442695
        %v427 = vpow.pop %v426
        %v428 = vmul.f32 %v384, 1.442695
        %v429 = vpow.pop %v428
        %v430 = vmul.f32 %v385, 1.442695
        %v431 = vpow.pop %v430
        %v432 = vmul.f32 %v386, 1.442695
        %v433 = vpow.pop %v432
        %v434 = vmul.f32 %v387, 1.442695
        %v435 = vpow.pop %v434
        %v436 = vmul.f32 %v388, 1.442695
        %v437 = vpow.pop %v436
        %v438 = vmul.f32 %v389, 1.442695
        %v439 = vpow.pop %v438
        %v440 = vmul.f32 %v390, 1.442695
        %v441 = vpow.pop %v440
        %v442 = vmul.f32 %v391, 1.442695
        %v443 = vpow.pop %v442
        %v444 = vmul.f32 %v392, 1.442695
        %v445 = vpow.pop %v444
        %v446 = vmul.f32 %v393, 1.442695
        %v447 = vpow.pop %v446
        %v448 = vmul.f32 %v394, 1.442695
        %v449 = vpow.pop %v448
        %v450 = vmul.f32 %v395, 1.442695
        %v451 = vpow.pop %v450
        %v452 = vmul.f32 %v396, 1.442695
        %v453 = vpow.pop %v452
        %v454 = vmul.f32 %v397, 1.442695
        %v455 = vpow.pop %v454
        %v456 = vmul.f32 %v398, 1.442695
        %v457 = vpow.pop %v456
        %v458 = vmul.f32 %v399, 1.442695
        %v459 = vpow.pop %v458
        %v460 = vmul.f32 %v400, 1.442695
        %v461 = vpow.pop %v460
        %v462 = vmul.f32 %v401, 1.442695
        %v463 = vpow.pop %v462
        %v464 = vmul.f32 %v402, 1.442695
        %v465 = vpow.pop %v464
        %v466 = vmul.f32 %v403, 1.442695
        %v467 = vpow.pop %v466
        %v468 = vadd.f32 %v405, 1.0
        %v469 = vadd.f32 %v407, 1.0
        %v470 = vadd.f32 %v409, 1.0
        %v471 = vadd.f32 %v411, 1.0
        %v472 = vadd.f32 %v413, 1.0
        %v473 = vadd.f32 %v415, 1.0
        %v474 = vadd.f32 %v417, 1.0
        %v475 = vadd.f32 %v419, 1.0
        %v476 = vadd.f32 %v421, 1.0
        %v477 = vadd.f32 %v423, 1.0
        %v478 = vadd.f32 %v425, 1.0
        %v479 = vadd.f32 %v427, 1.0
        %v480 = vadd.f32 %v429, 1.0
        %v481 = vadd.f32 %v431, 1.0
        %v482 = vadd.f32 %v433, 1.0
        %v483 = vadd.f32 %v435, 1.0
        %v484 = vadd.f32 %v437, 1.0
        %v485 = vadd.f32 %v439, 1.0
        %v486 = vadd.f32 %v441, 1.0
        %v487 = vadd.f32 %v443, 1.0
        %v488 = vadd.f32 %v445, 1.0
        %v489 = vadd.f32 %v447, 1.0
        %v490 = vadd.f32 %v449, 1.0
        %v491 = vadd.f32 %v451, 1.0
        %v492 = vadd.f32 %v453, 1.0
        %v493 = vadd.f32 %v455, 1.0
        %v494 = vadd.f32 %v457, 1.0
        %v495 = vadd.f32 %v459, 1.0
        %v496 = vadd.f32 %v461, 1.0
        %v497 = vadd.f32 %v463, 1.0
        %v498 = vadd.f32 %v465, 1.0
        %v499 = vadd.f32 %v467, 1.0
        %v500 = vrcp.pop %v468
        %v501 = vmul.f32 %v468, %v500
        %v502 = vsub.f32 1.0, %v501
        %v503 = vmul.f32 %v500, %v502
        %v504 = vadd.f32 %v500, %v503
        %vm505 = vweird.f32 %v468
        %vm506 = vweird.f32 %v500
        %vm507 = vmor %vm505, %vm506
        %v508 = vsel %vm507, %v500, %v504
        %v509 = vand.u32 2147483647, %v468
        %vm510 = vcmp.eq.f32.partialorder %v509, 8.507059e+37
        %v511 = vand.u32 %v468, 2147483648
        %v512 = vor.u32 1.1754944e-38, %v511
        %v513 = vsel %vm510, %v512, %v508
        %v514 = vmul.f32 1.0, %v513
        %v515 = vrcp.pop %v469
        %v516 = vmul.f32 %v469, %v515
        %v517 = vsub.f32 1.0, %v516
        %v518 = vmul.f32 %v515, %v517
        %v519 = vadd.f32 %v515, %v518
        %vm520 = vweird.f32 %v469
        %vm521 = vweird.f32 %v515
        %vm522 = vmor %vm520, %vm521
        %v523 = vsel %vm522, %v515, %v519
        %v524 = vand.u32 2147483647, %v469
        %vm525 = vcmp.eq.f32.partialorder %v524, 8.507059e+37
        %v526 = vand.u32 %v469, 2147483648
        %v527 = vor.u32 1.1754944e-38, %v526
        %v528 = vsel %vm525, %v527, %v523
        %v529 = vmul.f32 1.0, %v528
        %v530 = vrcp.pop %v470
        %v531 = vmul.f32 %v470, %v530
        %v532 = vsub.f32 1.0, %v531
        %v533 = vmul.f32 %v530, %v532
        %v534 = vadd.f32 %v530, %v533
        %vm535 = vweird.f32 %v470
        %vm536 = vweird.f32 %v530
        %vm537 = vmor %vm535, %vm536
        %v538 = vsel %vm537, %v530, %v534
        %v539 = vand.u32 2147483647, %v470
        %vm540 = vcmp.eq.f32.partialorder %v539, 8.507059e+37
        %v541 = vand.u32 %v470, 2147483648
        %v542 = vor.u32 1.1754944e-38, %v541
        %v543 = vsel %vm540, %v542, %v538
        %v544 = vmul.f32 1.0, %v543
        %v545 = vrcp.pop %v471
        %v546 = vmul.f32 %v471, %v545
        %v547 = vsub.f32 1.0, %v546
        %v548 = vmul.f32 %v545, %v547
        %v549 = vadd.f32 %v545, %v548
        %vm550 = vweird.f32 %v471
        %vm551 = vweird.f32 %v545
        %vm552 = vmor %vm550, %vm551
        %v553 = vsel %vm552, %v545, %v549
        %v554 = vand.u32 2147483647, %v471
        %vm555 = vcmp.eq.f32.partialorder %v554, 8.507059e+37
        %v556 = vand.u32 %v471, 2147483648
        %v557 = vor.u32 1.1754944e-38, %v556
        %v558 = vsel %vm555, %v557, %v553
        %v559 = vmul.f32 1.0, %v558
        %v560 = vrcp.pop %v472
        %v561 = vmul.f32 %v472, %v560
        %v562 = vsub.f32 1.0, %v561
        %v563 = vmul.f32 %v560, %v562
        %v564 = vadd.f32 %v560, %v563
        %vm565 = vweird.f32 %v472
        %vm566 = vweird.f32 %v560
        %vm567 = vmor %vm565, %vm566
        %v568 = vsel %vm567, %v560, %v564
        %v569 = vand.u32 2147483647, %v472
        %vm570 = vcmp.eq.f32.partialorder %v569, 8.507059e+37
        %v571 = vand.u32 %v472, 2147483648
        %v572 = vor.u32 1.1754944e-38, %v571
        %v573 = vsel %vm570, %v572, %v568
        %v574 = vmul.f32 1.0, %v573
        %v575 = vrcp.pop %v473
        %v576 = vmul.f32 %v473, %v575
        %v577 = vsub.f32 1.0, %v576
        %v578 = vmul.f32 %v575, %v577
        %v579 = vadd.f32 %v575, %v578
        %vm580 = vweird.f32 %v473
        %vm581 = vweird.f32 %v575
        %vm582 = vmor %vm580, %vm581
        %v583 = vsel %vm582, %v575, %v579
        %v584 = vand.u32 2147483647, %v473
        %vm585 = vcmp.eq.f32.partialorder %v584, 8.507059e+37
        %v586 = vand.u32 %v473, 2147483648
        %v587 = vor.u32 1.1754944e-38, %v586
        %v588 = vsel %vm585, %v587, %v583
        %v589 = vmul.f32 1.0, %v588
        %v590 = vrcp.pop %v474
        %v591 = vmul.f32 %v474, %v590
        %v592 = vsub.f32 1.0, %v591
        %v593 = vmul.f32 %v590, %v592
        %v594 = vadd.f32 %v590, %v593
        %vm595 = vweird.f32 %v474
        %vm596 = vweird.f32 %v590
        %vm597 = vmor %vm595, %vm596
        %v598 = vsel %vm597, %v590, %v594
        %v599 = vand.u32 2147483647, %v474
        %vm600 = vcmp.eq.f32.partialorder %v599, 8.507059e+37
        %v601 = vand.u32 %v474, 2147483648
        %v602 = vor.u32 1.1754944e-38, %v601
        %v603 = vsel %vm600, %v602, %v598
        %v604 = vmul.f32 1.0, %v603
        %v605 = vrcp.pop %v475
        %v606 = vmul.f32 %v475, %v605
        %v607 = vsub.f32 1.0, %v606
        %v608 = vmul.f32 %v605, %v607
        %v609 = vadd.f32 %v605, %v608
        %vm610 = vweird.f32 %v475
        %vm611 = vweird.f32 %v605
        %vm612 = vmor %vm610, %vm611
        %v613 = vsel %vm612, %v605, %v609
        %v614 = vand.u32 2147483647, %v475
        %vm615 = vcmp.eq.f32.partialorder %v614, 8.507059e+37
        %v616 = vand.u32 %v475, 2147483648
        %v617 = vor.u32 1.1754944e-38, %v616
        %v618 = vsel %vm615, %v617, %v613
        %v619 = vmul.f32 1.0, %v618
        %v620 = vrcp.pop %v476
        %v621 = vmul.f32 %v476, %v620
        %v622 = vsub.f32 1.0, %v621
        %v623 = vmul.f32 %v620, %v622
        %v624 = vadd.f32 %v620, %v623
        %vm625 = vweird.f32 %v476
        %vm626 = vweird.f32 %v620
        %vm627 = vmor %vm625, %vm626
        %v628 = vsel %vm627, %v620, %v624
        %v629 = vand.u32 2147483647, %v476
        %vm630 = vcmp.eq.f32.partialorder %v629, 8.507059e+37
        %v631 = vand.u32 %v476, 2147483648
        %v632 = vor.u32 1.1754944e-38, %v631
        %v633 = vsel %vm630, %v632, %v628
        %v634 = vmul.f32 1.0, %v633
        %v635 = vrcp.pop %v477
        %v636 = vmul.f32 %v477, %v635
        %v637 = vsub.f32 1.0, %v636
        %v638 = vmul.f32 %v635, %v637
        %v639 = vadd.f32 %v635, %v638
        %vm640 = vweird.f32 %v477
        %vm641 = vweird.f32 %v635
        %vm642 = vmor %vm640, %vm641
        %v643 = vsel %vm642, %v635, %v639
        %v644 = vand.u32 2147483647, %v477
        %vm645 = vcmp.eq.f32.partialorder %v644, 8.507059e+37
        %v646 = vand.u32 %v477, 2147483648
        %v647 = vor.u32 1.1754944e-38, %v646
        %v648 = vsel %vm645, %v647, %v643
        %v649 = vmul.f32 1.0, %v648
        %v650 = vrcp.pop %v478
        %v651 = vmul.f32 %v478, %v650
        %v652 = vsub.f32 1.0, %v651
        %v653 = vmul.f32 %v650, %v652
        %v654 = vadd.f32 %v650, %v653
        %vm655 = vweird.f32 %v478
        %vm656 = vweird.f32 %v650
        %vm657 = vmor %vm655, %vm656
        %v658 = vsel %vm657, %v650, %v654
        %v659 = vand.u32 2147483647, %v478
        %vm660 = vcmp.eq.f32.partialorder %v659, 8.507059e+37
        %v661 = vand.u32 %v478, 2147483648
        %v662 = vor.u32 1.1754944e-38, %v661
        %v663 = vsel %vm660, %v662, %v658
        %v664 = vmul.f32 1.0, %v663
        %v665 = vrcp.pop %v479
        %v666 = vmul.f32 %v479, %v665
        %v667 = vsub.f32 1.0, %v666
        %v668 = vmul.f32 %v665, %v667
        %v669 = vadd.f32 %v665, %v668
        %vm670 = vweird.f32 %v479
        %vm671 = vweird.f32 %v665
        %vm672 = vmor %vm670, %vm671
        %v673 = vsel %vm672, %v665, %v669
        %v674 = vand.u32 2147483647, %v479
        %vm675 = vcmp.eq.f32.partialorder %v674, 8.507059e+37
        %v676 = vand.u32 %v479, 2147483648
        %v677 = vor.u32 1.1754944e-38, %v676
        %v678 = vsel %vm675, %v677, %v673
        %v679 = vmul.f32 1.0, %v678
        %v680 = vrcp.pop %v480
        %v681 = vmul.f32 %v480, %v680
        %v682 = vsub.f32 1.0, %v681
        %v683 = vmul.f32 %v680, %v682
        %v684 = vadd.f32 %v680, %v683
        %vm685 = vweird.f32 %v480
        %vm686 = vweird.f32 %v680
        %vm687 = vmor %vm685, %vm686
        %v688 = vsel %vm687, %v680, %v684
        %v689 = vand.u32 2147483647, %v480
        %vm690 = vcmp.eq.f32.partialorder %v689, 8.507059e+37
        %v691 = vand.u32 %v480, 2147483648
        %v692 = vor.u32 1.1754944e-38, %v691
        %v693 = vsel %vm690, %v692, %v688
        %v694 = vmul.f32 1.0, %v693
        %v695 = vrcp.pop %v481
        %v696 = vmul.f32 %v481, %v695
        %v697 = vsub.f32 1.0, %v696
        %v698 = vmul.f32 %v695, %v697
        %v699 = vadd.f32 %v695, %v698
        %vm700 = vweird.f32 %v481
        %vm701 = vweird.f32 %v695
        %vm702 = vmor %vm700, %vm701
        %v703 = vsel %vm702, %v695, %v699
        %v704 = vand.u32 2147483647, %v481
        %vm705 = vcmp.eq.f32.partialorder %v704, 8.507059e+37
        %v706 = vand.u32 %v481, 2147483648
        %v707 = vor.u32 1.1754944e-38, %v706
        %v708 = vsel %vm705, %v707, %v703
        %v709 = vmul.f32 1.0, %v708
        %v710 = vrcp.pop %v482
        %v711 = vmul.f32 %v482, %v710
        %v712 = vsub.f32 1.0, %v711
        %v713 = vmul.f32 %v710, %v712
        %v714 = vadd.f32 %v710, %v713
        %vm715 = vweird.f32 %v482
        %vm716 = vweird.f32 %v710
        %vm717 = vmor %vm715, %vm716
        %v718 = vsel %vm717, %v710, %v714
        %v719 = vand.u32 2147483647, %v482
        %vm720 = vcmp.eq.f32.partialorder %v719, 8.507059e+37
        %v721 = vand.u32 %v482, 2147483648
        %v722 = vor.u32 1.1754944e-38, %v721
        %v723 = vsel %vm720, %v722, %v718
        %v724 = vmul.f32 1.0, %v723
        %v725 = vrcp.pop %v483
        %v726 = vmul.f32 %v483, %v725
        %v727 = vsub.f32 1.0, %v726
        %v728 = vmul.f32 %v725, %v727
        %v729 = vadd.f32 %v725, %v728
        %vm730 = vweird.f32 %v483
        %vm731 = vweird.f32 %v725
        %vm732 = vmor %vm730, %vm731
        %v733 = vsel %vm732, %v725, %v729
        %v734 = vand.u32 2147483647, %v483
        %vm735 = vcmp.eq.f32.partialorder %v734, 8.507059e+37
        %v736 = vand.u32 %v483, 2147483648
        %v737 = vor.u32 1.1754944e-38, %v736
        %v738 = vsel %vm735, %v737, %v733
        %v739 = vmul.f32 1.0, %v738
        %v740 = vrcp.pop %v484
        %v741 = vmul.f32 %v484, %v740
        %v742 = vsub.f32 1.0, %v741
        %v743 = vmul.f32 %v740, %v742
        %v744 = vadd.f32 %v740, %v743
        %vm745 = vweird.f32 %v484
        %vm746 = vweird.f32 %v740
        %vm747 = vmor %vm745, %vm746
        %v748 = vsel %vm747, %v740, %v744
        %v749 = vand.u32 2147483647, %v484
        %vm750 = vcmp.eq.f32.partialorder %v749, 8.507059e+37
        %v751 = vand.u32 %v484, 2147483648
        %v752 = vor.u32 1.1754944e-38, %v751
        %v753 = vsel %vm750, %v752, %v748
        %v754 = vmul.f32 1.0, %v753
        %v755 = vrcp.pop %v485
        %v756 = vmul.f32 %v485, %v755
        %v757 = vsub.f32 1.0, %v756
        %v758 = vmul.f32 %v755, %v757
        %v759 = vadd.f32 %v755, %v758
        %vm760 = vweird.f32 %v485
        %vm761 = vweird.f32 %v755
        %vm762 = vmor %vm760, %vm761
        %v763 = vsel %vm762, %v755, %v759
        %v764 = vand.u32 2147483647, %v485
        %vm765 = vcmp.eq.f32.partialorder %v764, 8.507059e+37
        %v766 = vand.u32 %v485, 2147483648
        %v767 = vor.u32 1.1754944e-38, %v766
        %v768 = vsel %vm765, %v767, %v763
        %v769 = vmul.f32 1.0, %v768
        %v770 = vrcp.pop %v486
        %v771 = vmul.f32 %v486, %v770
        %v772 = vsub.f32 1.0, %v771
        %v773 = vmul.f32 %v770, %v772
        %v774 = vadd.f32 %v770, %v773
        %vm775 = vweird.f32 %v486
        %vm776 = vweird.f32 %v770
        %vm777 = vmor %vm775, %vm776
        %v778 = vsel %vm777, %v770, %v774
        %v779 = vand.u32 2147483647, %v486
        %vm780 = vcmp.eq.f32.partialorder %v779, 8.507059e+37
        %v781 = vand.u32 %v486, 2147483648
        %v782 = vor.u32 1.1754944e-38, %v781
        %v783 = vsel %vm780, %v782, %v778
        %v784 = vmul.f32 1.0, %v783
        %v785 = vrcp.pop %v487
        %v786 = vmul.f32 %v487, %v785
        %v787 = vsub.f32 1.0, %v786
        %v788 = vmul.f32 %v785, %v787
        %v789 = vadd.f32 %v785, %v788
        %vm790 = vweird.f32 %v487
        %vm791 = vweird.f32 %v785
        %vm792 = vmor %vm790, %vm791
        %v793 = vsel %vm792, %v785, %v789
        %v794 = vand.u32 2147483647, %v487
        %vm795 = vcmp.eq.f32.partialorder %v794, 8.507059e+37
        %v796 = vand.u32 %v487, 2147483648
        %v797 = vor.u32 1.1754944e-38, %v796
        %v798 = vsel %vm795, %v797, %v793
        %v799 = vmul.f32 1.0, %v798
        %v800 = vrcp.pop %v488
        %v801 = vmul.f32 %v488, %v800
        %v802 = vsub.f32 1.0, %v801
        %v803 = vmul.f32 %v800, %v802
        %v804 = vadd.f32 %v800, %v803
        %vm805 = vweird.f32 %v488
        %vm806 = vweird.f32 %v800
        %vm807 = vmor %vm805, %vm806
        %v808 = vsel %vm807, %v800, %v804
        %v809 = vand.u32 2147483647, %v488
        %vm810 = vcmp.eq.f32.partialorder %v809, 8.507059e+37
        %v811 = vand.u32 %v488, 2147483648
        %v812 = vor.u32 1.1754944e-38, %v811
        %v813 = vsel %vm810, %v812, %v808
        %v814 = vmul.f32 1.0, %v813
        %v815 = vrcp.pop %v489
        %v816 = vmul.f32 %v489, %v815
        %v817 = vsub.f32 1.0, %v816
        %v818 = vmul.f32 %v815, %v817
        %v819 = vadd.f32 %v815, %v818
        %vm820 = vweird.f32 %v489
        %vm821 = vweird.f32 %v815
        %vm822 = vmor %vm820, %vm821
        %v823 = vsel %vm822, %v815, %v819
        %v824 = vand.u32 2147483647, %v489
        %vm825 = vcmp.eq.f32.partialorder %v824, 8.507059e+37
        %v826 = vand.u32 %v489, 2147483648
        %v827 = vor.u32 1.1754944e-38, %v826
        %v828 = vsel %vm825, %v827, %v823
        %v829 = vmul.f32 1.0, %v828
        %v830 = vrcp.pop %v490
        %v831 = vmul.f32 %v490, %v830
        %v832 = vsub.f32 1.0, %v831
        %v833 = vmul.f32 %v830, %v832
        %v834 = vadd.f32 %v830, %v833
        %vm835 = vweird.f32 %v490
        %vm836 = vweird.f32 %v830
        %vm837 = vmor %vm835, %vm836
        %v838 = vsel %vm837, %v830, %v834
        %v839 = vand.u32 2147483647, %v490
        %vm840 = vcmp.eq.f32.partialorder %v839, 8.507059e+37
        %v841 = vand.u32 %v490, 2147483648
        %v842 = vor.u32 1.1754944e-38, %v841
        %v843 = vsel %vm840, %v842, %v838
        %v844 = vmul.f32 1.0, %v843
        %v845 = vrcp.pop %v491
        %v846 = vmul.f32 %v491, %v845
        %v847 = vsub.f32 1.0, %v846
        %v848 = vmul.f32 %v845, %v847
        %v849 = vadd.f32 %v845, %v848
        %vm850 = vweird.f32 %v491
        %vm851 = vweird.f32 %v845
        %vm852 = vmor %vm850, %vm851
        %v853 = vsel %vm852, %v845, %v849
        %v854 = vand.u32 2147483647, %v491
        %vm855 = vcmp.eq.f32.partialorder %v854, 8.507059e+37
        %v856 = vand.u32 %v491, 2147483648
        %v857 = vor.u32 1.1754944e-38, %v856
        %v858 = vsel %vm855, %v857, %v853
        %v859 = vmul.f32 1.0, %v858
        %v860 = vrcp.pop %v492
        %v861 = vmul.f32 %v492, %v860
        %v862 = vsub.f32 1.0, %v861
        %v863 = vmul.f32 %v860, %v862
        %v864 = vadd.f32 %v860, %v863
        %vm865 = vweird.f32 %v492
        %vm866 = vweird.f32 %v860
        %vm867 = vmor %vm865, %vm866
        %v868 = vsel %vm867, %v860, %v864
        %v869 = vand.u32 2147483647, %v492
        %vm870 = vcmp.eq.f32.partialorder %v869, 8.507059e+37
        %v871 = vand.u32 %v492, 2147483648
        %v872 = vor.u32 1.1754944e-38, %v871
        %v873 = vsel %vm870, %v872, %v868
        %v874 = vmul.f32 1.0, %v873
        %v875 = vrcp.pop %v493
        %v876 = vmul.f32 %v493, %v875
        %v877 = vsub.f32 1.0, %v876
        %v878 = vmul.f32 %v875, %v877
        %v879 = vadd.f32 %v875, %v878
        %vm880 = vweird.f32 %v493
        %vm881 = vweird.f32 %v875
        %vm882 = vmor %vm880, %vm881
        %v883 = vsel %vm882, %v875, %v879
        %v884 = vand.u32 2147483647, %v493
        %vm885 = vcmp.eq.f32.partialorder %v884, 8.507059e+37
        %v886 = vand.u32 %v493, 2147483648
        %v887 = vor.u32 1.1754944e-38, %v886
        %v888 = vsel %vm885, %v887, %v883
        %v889 = vmul.f32 1.0, %v888
        %v890 = vrcp.pop %v494
        %v891 = vmul.f32 %v494, %v890
        %v892 = vsub.f32 1.0, %v891
        %v893 = vmul.f32 %v890, %v892
        %v894 = vadd.f32 %v890, %v893
        %vm895 = vweird.f32 %v494
        %vm896 = vweird.f32 %v890
        %vm897 = vmor %vm895, %vm896
        %v898 = vsel %vm897, %v890, %v894
        %v899 = vand.u32 2147483647, %v494
        %vm900 = vcmp.eq.f32.partialorder %v899, 8.507059e+37
        %v901 = vand.u32 %v494, 2147483648
        %v902 = vor.u32 1.1754944e-38, %v901
        %v903 = vsel %vm900, %v902, %v898
        %v904 = vmul.f32 1.0, %v903
        %v905 = vrcp.pop %v495
        %v906 = vmul.f32 %v495, %v905
        %v907 = vsub.f32 1.0, %v906
        %v908 = vmul.f32 %v905, %v907
        %v909 = vadd.f32 %v905, %v908
        %vm910 = vweird.f32 %v495
        %vm911 = vweird.f32 %v905
        %vm912 = vmor %vm910, %vm911
        %v913 = vsel %vm912, %v905, %v909
        %v914 = vand.u32 2147483647, %v495
        %vm915 = vcmp.eq.f32.partialorder %v914, 8.507059e+37
        %v916 = vand.u32 %v495, 2147483648
        %v917 = vor.u32 1.1754944e-38, %v916
        %v918 = vsel %vm915, %v917, %v913
        %v919 = vmul.f32 1.0, %v918
        %v920 = vrcp.pop %v496
        %v921 = vmul.f32 %v496, %v920
        %v922 = vsub.f32 1.0, %v921
        %v923 = vmul.f32 %v920, %v922
        %v924 = vadd.f32 %v920, %v923
        %vm925 = vweird.f32 %v496
        %vm926 = vweird.f32 %v920
        %vm927 = vmor %vm925, %vm926
        %v928 = vsel %vm927, %v920, %v924
        %v929 = vand.u32 2147483647, %v496
        %vm930 = vcmp.eq.f32.partialorder %v929, 8.507059e+37
        %v931 = vand.u32 %v496, 2147483648
        %v932 = vor.u32 1.1754944e-38, %v931
        %v933 = vsel %vm930, %v932, %v928
        %v934 = vmul.f32 1.0, %v933
        %v935 = vrcp.pop %v497
        %v936 = vmul.f32 %v497, %v935
        %v937 = vsub.f32 1.0, %v936
        %v938 = vmul.f32 %v935, %v937
        %v939 = vadd.f32 %v935, %v938
        %vm940 = vweird.f32 %v497
        %vm941 = vweird.f32 %v935
        %vm942 = vmor %vm940, %vm941
        %v943 = vsel %vm942, %v935, %v939
        %v944 = vand.u32 2147483647, %v497
        %vm945 = vcmp.eq.f32.partialorder %v944, 8.507059e+37
        %v946 = vand.u32 %v497, 2147483648
        %v947 = vor.u32 1.1754944e-38, %v946
        %v948 = vsel %vm945, %v947, %v943
        %v949 = vmul.f32 1.0, %v948
        %v950 = vrcp.pop %v498
        %v951 = vmul.f32 %v498, %v950
        %v952 = vsub.f32 1.0, %v951
        %v953 = vmul.f32 %v950, %v952
        %v954 = vadd.f32 %v950, %v953
        %vm955 = vweird.f32 %v498
        %vm956 = vweird.f32 %v950
        %vm957 = vmor %vm955, %vm956
        %v958 = vsel %vm957, %v950, %v954
        %v959 = vand.u32 2147483647, %v498
        %vm960 = vcmp.eq.f32.partialorder %v959, 8.507059e+37
        %v961 = vand.u32 %v498, 2147483648
        %v962 = vor.u32 1.1754944e-38, %v961
        %v963 = vsel %vm960, %v962, %v958
        %v964 = vmul.f32 1.0, %v963
        %v965 = vrcp.pop %v499
        %v966 = vmul.f32 %v499, %v965
        %v967 = vsub.f32 1.0, %v966
        %v968 = vmul.f32 %v965, %v967
        %v969 = vadd.f32 %v965, %v968
        %vm970 = vweird.f32 %v499
        %vm971 = vweird.f32 %v965
        %vm972 = vmor %vm970, %vm971
        %v973 = vsel %vm972, %v965, %v969
        %v974 = vand.u32 2147483647, %v499
        %vm975 = vcmp.eq.f32.partialorder %v974, 8.507059e+37
        %v976 = vand.u32 %v499, 2147483648
        %v977 = vor.u32 1.1754944e-38, %v976
        %v978 = vsel %vm975, %v977, %v973
        %v979 = vmul.f32 1.0, %v978
        %v980 = vmul.f32 %v293, %v514
        %v981 = vmul.f32 %v295, %v529
        %v982 = vmul.f32 %v298, %v544
        %v983 = vmul.f32 %v300, %v559
        %v984 = vmul.f32 %v303, %v574
        %v985 = vmul.f32 %v305, %v589
        %v986 = vmul.f32 %v308, %v604
        %v987 = vmul.f32 %v310, %v619
        %v988 = vmul.f32 %v313, %v634
        %v989 = vmul.f32 %v315, %v649
        %v990 = vmul.f32 %v318, %v664
        %v991 = vmul.f32 %v320, %v679
        %v992 = vmul.f32 %v323, %v694
        %v993 = vmul.f32 %v325, %v709
        %v994 = vmul.f32 %v328, %v724
        %v995 = vmul.f32 %v330, %v739
        %v996 = vmul.f32 %v333, %v754
        %v997 = vmul.f32 %v335, %v769
        %v998 = vmul.f32 %v338, %v784
        %v999 = vmul.f32 %v340, %v799
        %v1000 = vmul.f32 %v343, %v814
        %v1001 = vmul.f32 %v345, %v829
        %v1002 = vmul.f32 %v348, %v844
        %v1003 = vmul.f32 %v350, %v859
        %v1004 = vmul.f32 %v353, %v874
        %v1005 = vmul.f32 %v355, %v889
        %v1006 = vmul.f32 %v358, %v904
        %v1007 = vmul.f32 %v360, %v919
        %v1008 = vmul.f32 %v363, %v934
        %v1009 = vmul.f32 %v365, %v949
        %v1010 = vmul.f32 %v368, %v964
        %v1011 = vmul.f32 %v370, %v979
        %v1012 = vld [vmem:[%s2] sm:$0x1]
        %v1013 = vld [vmem:[%s2 + $0x1] sm:$0x1]
        %1014 = vadd.xlane.f32.xlu0 %v980
        %v1015 = vpop.xlane.xlu0 %1014
        %1016 = vadd.xlane.f32.xlu0 %v981
        %v1017 = vpop.xlane.xlu0 %1016
        %1018 = vadd.xlane.f32.xlu0 %v982
        %v1019 = vpop.xlane.xlu0 %1018
        %1020 = vadd.xlane.f32.xlu0 %v983
        %v1021 = vpop.xlane.xlu0 %1020
        %1022 = vadd.xlane.f32.xlu0 %v984
        %v1023 = vpop.xlane.xlu0 %1022
        %1024 = vadd.xlane.f32.xlu0 %v985
        %v1025 = vpop.xlane.xlu0 %1024
        %1026 = vadd.xlane.f32.xlu0 %v986
        %v1027 = vpop.xlane.xlu0 %1026
        %1028 = vadd.xlane.f32.xlu0 %v987
        %v1029 = vpop.xlane.xlu0 %1028
        %1030 = vadd.xlane.f32.xlu0 %v988
        %v1031 = vpop.xlane.xlu0 %1030
        %1032 = vadd.xlane.f32.xlu0 %v989
        %v1033 = vpop.xlane.xlu0 %1032
        %1034 = vadd.xlane.f32.xlu0 %v990
        %v1035 = vpop.xlane.xlu0 %1034
        %1036 = vadd.xlane.f32.xlu0 %v991
        %v1037 = vpop.xlane.xlu0 %1036
        %1038 = vadd.xlane.f32.xlu0 %v992
        %v1039 = vpop.xlane.xlu0 %1038
        %1040 = vadd.xlane.f32.xlu0 %v993
        %v1041 = vpop.xlane.xlu0 %1040
        %1042 = vadd.xlane.f32.xlu0 %v994
        %v1043 = vpop.xlane.xlu0 %1042
        %1044 = vadd.xlane.f32.xlu0 %v995
        %v1045 = vpop.xlane.xlu0 %1044
        %1046 = vadd.xlane.f32.xlu0 %v996
        %v1047 = vpop.xlane.xlu0 %1046
        %1048 = vadd.xlane.f32.xlu0 %v997
        %v1049 = vpop.xlane.xlu0 %1048
        %1050 = vadd.xlane.f32.xlu0 %v998
        %v1051 = vpop.xlane.xlu0 %1050
        %1052 = vadd.xlane.f32.xlu0 %v999
        %v1053 = vpop.xlane.xlu0 %1052
        %1054 = vadd.xlane.f32.xlu0 %v1000
        %v1055 = vpop.xlane.xlu0 %1054
        %1056 = vadd.xlane.f32.xlu0 %v1001
        %v1057 = vpop.xlane.xlu0 %1056
        %1058 = vadd.xlane.f32.xlu0 %v1002
        %v1059 = vpop.xlane.xlu0 %1058
        %1060 = vadd.xlane.f32.xlu0 %v1003
        %v1061 = vpop.xlane.xlu0 %1060
        %1062 = vadd.xlane.f32.xlu0 %v1004
        %v1063 = vpop.xlane.xlu0 %1062
        %1064 = vadd.xlane.f32.xlu0 %v1005
        %v1065 = vpop.xlane.xlu0 %1064
        %1066 = vadd.xlane.f32.xlu0 %v1006
        %v1067 = vpop.xlane.xlu0 %1066
        %1068 = vadd.xlane.f32.xlu0 %v1007
        %v1069 = vpop.xlane.xlu0 %1068
        %1070 = vadd.xlane.f32.xlu0 %v1008
        %v1071 = vpop.xlane.xlu0 %1070
        %1072 = vadd.xlane.f32.xlu0 %v1009
        %v1073 = vpop.xlane.xlu0 %1072
        %1074 = vadd.xlane.f32.xlu0 %v1010
        %v1075 = vpop.xlane.xlu0 %1074
        %1076 = vadd.xlane.f32.xlu0 %v1011
        %v1077 = vpop.xlane.xlu0 %1076
        %v1078 = vmul.f32 %v1015, 0.03125
        %v1079 = vmul.f32 %v1017, 0.03125
        %v1080 = vmul.f32 %v1019, 0.03125
        %v1081 = vmul.f32 %v1021, 0.03125
        %v1082 = vmul.f32 %v1023, 0.03125
        %v1083 = vmul.f32 %v1025, 0.03125
        %v1084 = vmul.f32 %v1027, 0.03125
        %v1085 = vmul.f32 %v1029, 0.03125
        %v1086 = vmul.f32 %v1031, 0.03125
        %v1087 = vmul.f32 %v1033, 0.03125
        %v1088 = vmul.f32 %v1035, 0.03125
        %v1089 = vmul.f32 %v1037, 0.03125
        %v1090 = vmul.f32 %v1039, 0.03125
        %v1091 = vmul.f32 %v1041, 0.03125
        %v1092 = vmul.f32 %v1043, 0.03125
        %v1093 = vmul.f32 %v1045, 0.03125
        %v1094 = vmul.f32 %v1047, 0.03125
        %v1095 = vmul.f32 %v1049, 0.03125
        %v1096 = vmul.f32 %v1051, 0.03125
        %v1097 = vmul.f32 %v1053, 0.03125
        %v1098 = vmul.f32 %v1055, 0.03125
        %v1099 = vmul.f32 %v1057, 0.03125
        %v1100 = vmul.f32 %v1059, 0.03125
        %v1101 = vmul.f32 %v1061, 0.03125
        %v1102 = vmul.f32 %v1063, 0.03125
        %v1103 = vmul.f32 %v1065, 0.03125
        %v1104 = vmul.f32 %v1067, 0.03125
        %v1105 = vmul.f32 %v1069, 0.03125
        %v1106 = vmul.f32 %v1071, 0.03125
        %v1107 = vmul.f32 %v1073, 0.03125
        %v1108 = vmul.f32 %v1075, 0.03125
        %v1109 = vmul.f32 %v1077, 0.03125
        %v1110 = vsub.f32 %v980, %v1078
        %v1111 = vsub.f32 %v981, %v1079
        %v1112 = vsub.f32 %v982, %v1080
        %v1113 = vsub.f32 %v983, %v1081
        %v1114 = vsub.f32 %v984, %v1082
        %v1115 = vsub.f32 %v985, %v1083
        %v1116 = vsub.f32 %v986, %v1084
        %v1117 = vsub.f32 %v987, %v1085
        %v1118 = vsub.f32 %v988, %v1086
        %v1119 = vsub.f32 %v989, %v1087
        %v1120 = vsub.f32 %v990, %v1088
        %v1121 = vsub.f32 %v991, %v1089
        %v1122 = vsub.f32 %v992, %v1090
        %v1123 = vsub.f32 %v993, %v1091
        %v1124 = vsub.f32 %v994, %v1092
        %v1125 = vsub.f32 %v995, %v1093
        %v1126 = vsub.f32 %v996, %v1094
        %v1127 = vsub.f32 %v997, %v1095
        %v1128 = vsub.f32 %v998, %v1096
        %v1129 = vsub.f32 %v999, %v1097
        %v1130 = vsub.f32 %v1000, %v1098
        %v1131 = vsub.f32 %v1001, %v1099
        %v1132 = vsub.f32 %v1002, %v1100
        %v1133 = vsub.f32 %v1003, %v1101
        %v1134 = vsub.f32 %v1004, %v1102
        %v1135 = vsub.f32 %v1005, %v1103
        %v1136 = vsub.f32 %v1006, %v1104
        %v1137 = vsub.f32 %v1007, %v1105
        %v1138 = vsub.f32 %v1008, %v1106
        %v1139 = vsub.f32 %v1009, %v1107
        %v1140 = vsub.f32 %v1010, %v1108
        %v1141 = vsub.f32 %v1011, %v1109
        %v1142 = vsel %vm175, 1, 0
        %vm1143 = vcmp.eq.s32.totalorder %v1142, 1
        %v1144 = vsel %vm1143, %v1110, 0.0
        %v1145 = vsel %vm1143, %v1111, 0.0
        %v1146 = vsel %vm1143, %v1112, 0.0
        %v1147 = vsel %vm1143, %v1113, 0.0
        %v1148 = vsel %vm1143, %v1114, 0.0
        %v1149 = vsel %vm1143, %v1115, 0.0
        %v1150 = vsel %vm1143, %v1116, 0.0
        %v1151 = vsel %vm1143, %v1117, 0.0
        %v1152 = vsel %vm1143, %v1118, 0.0
        %v1153 = vsel %vm1143, %v1119, 0.0
        %v1154 = vsel %vm1143, %v1120, 0.0
        %v1155 = vsel %vm1143, %v1121, 0.0
        %v1156 = vsel %vm1143, %v1122, 0.0
        %v1157 = vsel %vm1143, %v1123, 0.0
        %v1158 = vsel %vm1143, %v1124, 0.0
        %v1159 = vsel %vm1143, %v1125, 0.0
        %v1160 = vsel %vm1143, %v1126, 0.0
        %v1161 = vsel %vm1143, %v1127, 0.0
        %v1162 = vsel %vm1143, %v1128, 0.0
        %v1163 = vsel %vm1143, %v1129, 0.0
        %v1164 = vsel %vm1143, %v1130, 0.0
        %v1165 = vsel %vm1143, %v1131, 0.0
        %v1166 = vsel %vm1143, %v1132, 0.0
        %v1167 = vsel %vm1143, %v1133, 0.0
        %v1168 = vsel %vm1143, %v1134, 0.0
        %v1169 = vsel %vm1143, %v1135, 0.0
        %v1170 = vsel %vm1143, %v1136, 0.0
        %v1171 = vsel %vm1143, %v1137, 0.0
        %v1172 = vsel %vm1143, %v1138, 0.0
        %v1173 = vsel %vm1143, %v1139, 0.0
        %v1174 = vsel %vm1143, %v1140, 0.0
        %v1175 = vsel %vm1143, %v1141, 0.0
        %v1176 = vmul.f32 %v1144, %v1144
        %v1177 = vmul.f32 %v1145, %v1145
        %v1178 = vmul.f32 %v1146, %v1146
        %v1179 = vmul.f32 %v1147, %v1147
        %v1180 = vmul.f32 %v1148, %v1148
        %v1181 = vmul.f32 %v1149, %v1149
        %v1182 = vmul.f32 %v1150, %v1150
        %v1183 = vmul.f32 %v1151, %v1151
        %v1184 = vmul.f32 %v1152, %v1152
        %v1185 = vmul.f32 %v1153, %v1153
        %v1186 = vmul.f32 %v1154, %v1154
        %v1187 = vmul.f32 %v1155, %v1155
        %v1188 = vmul.f32 %v1156, %v1156
        %v1189 = vmul.f32 %v1157, %v1157
        %v1190 = vmul.f32 %v1158, %v1158
        %v1191 = vmul.f32 %v1159, %v1159
        %v1192 = vmul.f32 %v1160, %v1160
        %v1193 = vmul.f32 %v1161, %v1161
        %v1194 = vmul.f32 %v1162, %v1162
        %v1195 = vmul.f32 %v1163, %v1163
        %v1196 = vmul.f32 %v1164, %v1164
        %v1197 = vmul.f32 %v1165, %v1165
        %v1198 = vmul.f32 %v1166, %v1166
        %v1199 = vmul.f32 %v1167, %v1167
        %v1200 = vmul.f32 %v1168, %v1168
        %v1201 = vmul.f32 %v1169, %v1169
        %v1202 = vmul.f32 %v1170, %v1170
        %v1203 = vmul.f32 %v1171, %v1171
        %v1204 = vmul.f32 %v1172, %v1172
        %v1205 = vmul.f32 %v1173, %v1173
        %v1206 = vmul.f32 %v1174, %v1174
        %v1207 = vmul.f32 %v1175, %v1175
        %1208 = vadd.xlane.f32.xlu0 %v1176
        %v1209 = vpop.xlane.xlu0 %1208
        %1210 = vadd.xlane.f32.xlu0 %v1177
        %v1211 = vpop.xlane.xlu0 %1210
        %1212 = vadd.xlane.f32.xlu0 %v1178
        %v1213 = vpop.xlane.xlu0 %1212
        %1214 = vadd.xlane.f32.xlu0 %v1179
        %v1215 = vpop.xlane.xlu0 %1214
        %1216 = vadd.xlane.f32.xlu0 %v1180
        %v1217 = vpop.xlane.xlu0 %1216
        %1218 = vadd.xlane.f32.xlu0 %v1181
        %v1219 = vpop.xlane.xlu0 %1218
        %1220 = vadd.xlane.f32.xlu0 %v1182
        %v1221 = vpop.xlane.xlu0 %1220
        %1222 = vadd.xlane.f32.xlu0 %v1183
        %v1223 = vpop.xlane.xlu0 %1222
        %1224 = vadd.xlane.f32.xlu0 %v1184
        %v1225 = vpop.xlane.xlu0 %1224
        %1226 = vadd.xlane.f32.xlu0 %v1185
        %v1227 = vpop.xlane.xlu0 %1226
        %1228 = vadd.xlane.f32.xlu0 %v1186
        %v1229 = vpop.xlane.xlu0 %1228
        %1230 = vadd.xlane.f32.xlu0 %v1187
        %v1231 = vpop.xlane.xlu0 %1230
        %1232 = vadd.xlane.f32.xlu0 %v1188
        %v1233 = vpop.xlane.xlu0 %1232
        %1234 = vadd.xlane.f32.xlu0 %v1189
        %v1235 = vpop.xlane.xlu0 %1234
        %1236 = vadd.xlane.f32.xlu0 %v1190
        %v1237 = vpop.xlane.xlu0 %1236
        %1238 = vadd.xlane.f32.xlu0 %v1191
        %v1239 = vpop.xlane.xlu0 %1238
        %1240 = vadd.xlane.f32.xlu0 %v1192
        %v1241 = vpop.xlane.xlu0 %1240
        %1242 = vadd.xlane.f32.xlu0 %v1193
        %v1243 = vpop.xlane.xlu0 %1242
        %1244 = vadd.xlane.f32.xlu0 %v1194
        %v1245 = vpop.xlane.xlu0 %1244
        %1246 = vadd.xlane.f32.xlu0 %v1195
        %v1247 = vpop.xlane.xlu0 %1246
        %1248 = vadd.xlane.f32.xlu0 %v1196
        %v1249 = vpop.xlane.xlu0 %1248
        %1250 = vadd.xlane.f32.xlu0 %v1197
        %v1251 = vpop.xlane.xlu0 %1250
        %1252 = vadd.xlane.f32.xlu0 %v1198
        %v1253 = vpop.xlane.xlu0 %1252
        %1254 = vadd.xlane.f32.xlu0 %v1199
        %v1255 = vpop.xlane.xlu0 %1254
        %1256 = vadd.xlane.f32.xlu0 %v1200
        %v1257 = vpop.xlane.xlu0 %1256
        %1258 = vadd.xlane.f32.xlu0 %v1201
        %v1259 = vpop.xlane.xlu0 %1258
        %1260 = vadd.xlane.f32.xlu0 %v1202
        %v1261 = vpop.xlane.xlu0 %1260
        %1262 = vadd.xlane.f32.xlu0 %v1203
        %v1263 = vpop.xlane.xlu0 %1262
        %1264 = vadd.xlane.f32.xlu0 %v1204
        %v1265 = vpop.xlane.xlu0 %1264
        %1266 = vadd.xlane.f32.xlu0 %v1205
        %v1267 = vpop.xlane.xlu0 %1266
        %1268 = vadd.xlane.f32.xlu0 %v1206
        %v1269 = vpop.xlane.xlu0 %1268
        %1270 = vadd.xlane.f32.xlu0 %v1207
        %v1271 = vpop.xlane.xlu0 %1270
        %v1272 = vmul.f32 %v1209, 0.03125
        %v1273 = vmul.f32 %v1211, 0.03125
        %v1274 = vmul.f32 %v1213, 0.03125
        %v1275 = vmul.f32 %v1215, 0.03125
        %v1276 = vmul.f32 %v1217, 0.03125
        %v1277 = vmul.f32 %v1219, 0.03125
        %v1278 = vmul.f32 %v1221, 0.03125
        %v1279 = vmul.f32 %v1223, 0.03125
        %v1280 = vmul.f32 %v1225, 0.03125
        %v1281 = vmul.f32 %v1227, 0.03125
        %v1282 = vmul.f32 %v1229, 0.03125
        %v1283 = vmul.f32 %v1231, 0.03125
        %v1284 = vmul.f32 %v1233, 0.03125
        %v1285 = vmul.f32 %v1235, 0.03125
        %v1286 = vmul.f32 %v1237, 0.03125
        %v1287 = vmul.f32 %v1239, 0.03125
        %v1288 = vmul.f32 %v1241, 0.03125
        %v1289 = vmul.f32 %v1243, 0.03125
        %v1290 = vmul.f32 %v1245, 0.03125
        %v1291 = vmul.f32 %v1247, 0.03125
        %v1292 = vmul.f32 %v1249, 0.03125
        %v1293 = vmul.f32 %v1251, 0.03125
        %v1294 = vmul.f32 %v1253, 0.03125
        %v1295 = vmul.f32 %v1255, 0.03125
        %v1296 = vmul.f32 %v1257, 0.03125
        %v1297 = vmul.f32 %v1259, 0.03125
        %v1298 = vmul.f32 %v1261, 0.03125
        %v1299 = vmul.f32 %v1263, 0.03125
        %v1300 = vmul.f32 %v1265, 0.03125
        %v1301 = vmul.f32 %v1267, 0.03125
        %v1302 = vmul.f32 %v1269, 0.03125
        %v1303 = vmul.f32 %v1271, 0.03125
        %v1304 = vadd.f32 %v1272, 1e-05
        %v1305 = vadd.f32 %v1273, 1e-05
        %v1306 = vadd.f32 %v1274, 1e-05
        %v1307 = vadd.f32 %v1275, 1e-05
        %v1308 = vadd.f32 %v1276, 1e-05
        %v1309 = vadd.f32 %v1277, 1e-05
        %v1310 = vadd.f32 %v1278, 1e-05
        %v1311 = vadd.f32 %v1279, 1e-05
        %v1312 = vadd.f32 %v1280, 1e-05
        %v1313 = vadd.f32 %v1281, 1e-05
        %v1314 = vadd.f32 %v1282, 1e-05
        %v1315 = vadd.f32 %v1283, 1e-05
        %v1316 = vadd.f32 %v1284, 1e-05
        %v1317 = vadd.f32 %v1285, 1e-05
        %v1318 = vadd.f32 %v1286, 1e-05
        %v1319 = vadd.f32 %v1287, 1e-05
        %v1320 = vadd.f32 %v1288, 1e-05
        %v1321 = vadd.f32 %v1289, 1e-05
        %v1322 = vadd.f32 %v1290, 1e-05
        %v1323 = vadd.f32 %v1291, 1e-05
        %v1324 = vadd.f32 %v1292, 1e-05
        %v1325 = vadd.f32 %v1293, 1e-05
        %v1326 = vadd.f32 %v1294, 1e-05
        %v1327 = vadd.f32 %v1295, 1e-05
        %v1328 = vadd.f32 %v1296, 1e-05
        %v1329 = vadd.f32 %v1297, 1e-05
        %v1330 = vadd.f32 %v1298, 1e-05
        %v1331 = vadd.f32 %v1299, 1e-05
        %v1332 = vadd.f32 %v1300, 1e-05
        %v1333 = vadd.f32 %v1301, 1e-05
        %v1334 = vadd.f32 %v1302, 1e-05
        %v1335 = vadd.f32 %v1303, 1e-05
        %v1336 = vrsqrt.pop %v1304
        %v1337 = vmul.f32 %v1336, %v1304
        %v1338 = vmul.f32 %v1337, %v1336
        %v1339 = vmul.f32 0.5, %v1338
        %v1340 = vsub.f32 1.5, %v1339
        %v1341 = vmul.f32 %v1336, %v1340
        %vm1342 = vweird.f32 %v1304
        %vm1343 = vweird.f32 %v1336
        %vm1344 = vmor %vm1342, %vm1343
        %v1345 = vsel %vm1344, %v1336, %v1341
        %v1346 = vrsqrt.pop %v1305
        %v1347 = vmul.f32 %v1346, %v1305
        %v1348 = vmul.f32 %v1347, %v1346
        %v1349 = vmul.f32 0.5, %v1348
        %v1350 = vsub.f32 1.5, %v1349
        %v1351 = vmul.f32 %v1346, %v1350
        %vm1352 = vweird.f32 %v1305
        %vm1353 = vweird.f32 %v1346
        %vm1354 = vmor %vm1352, %vm1353
        %v1355 = vsel %vm1354, %v1346, %v1351
        %v1356 = vrsqrt.pop %v1306
        %v1357 = vmul.f32 %v1356, %v1306
        %v1358 = vmul.f32 %v1357, %v1356
        %v1359 = vmul.f32 0.5, %v1358
        %v1360 = vsub.f32 1.5, %v1359
        %v1361 = vmul.f32 %v1356, %v1360
        %vm1362 = vweird.f32 %v1306
        %vm1363 = vweird.f32 %v1356
        %vm1364 = vmor %vm1362, %vm1363
        %v1365 = vsel %vm1364, %v1356, %v1361
        %v1366 = vrsqrt.pop %v1307
        %v1367 = vmul.f32 %v1366, %v1307
        %v1368 = vmul.f32 %v1367, %v1366
        %v1369 = vmul.f32 0.5, %v1368
        %v1370 = vsub.f32 1.5, %v1369
        %v1371 = vmul.f32 %v1366, %v1370
        %vm1372 = vweird.f32 %v1307
        %vm1373 = vweird.f32 %v1366
        %vm1374 = vmor %vm1372, %vm1373
        %v1375 = vsel %vm1374, %v1366, %v1371
        %v1376 = vrsqrt.pop %v1308
        %v1377 = vmul.f32 %v1376, %v1308
        %v1378 = vmul.f32 %v1377, %v1376
        %v1379 = vmul.f32 0.5, %v1378
        %v1380 = vsub.f32 1.5, %v1379
        %v1381 = vmul.f32 %v1376, %v1380
        %vm1382 = vweird.f32 %v1308
        %vm1383 = vweird.f32 %v1376
        %vm1384 = vmor %vm1382, %vm1383
        %v1385 = vsel %vm1384, %v1376, %v1381
        %v1386 = vrsqrt.pop %v1309
        %v1387 = vmul.f32 %v1386, %v1309
        %v1388 = vmul.f32 %v1387, %v1386
        %v1389 = vmul.f32 0.5, %v1388
        %v1390 = vsub.f32 1.5, %v1389
        %v1391 = vmul.f32 %v1386, %v1390
        %vm1392 = vweird.f32 %v1309
        %vm1393 = vweird.f32 %v1386
        %vm1394 = vmor %vm1392, %vm1393
        %v1395 = vsel %vm1394, %v1386, %v1391
        %v1396 = vrsqrt.pop %v1310
        %v1397 = vmul.f32 %v1396, %v1310
        %v1398 = vmul.f32 %v1397, %v1396
        %v1399 = vmul.f32 0.5, %v1398
        %v1400 = vsub.f32 1.5, %v1399
        %v1401 = vmul.f32 %v1396, %v1400
        %vm1402 = vweird.f32 %v1310
        %vm1403 = vweird.f32 %v1396
        %vm1404 = vmor %vm1402, %vm1403
        %v1405 = vsel %vm1404, %v1396, %v1401
        %v1406 = vrsqrt.pop %v1311
        %v1407 = vmul.f32 %v1406, %v1311
        %v1408 = vmul.f32 %v1407, %v1406
        %v1409 = vmul.f32 0.5, %v1408
        %v1410 = vsub.f32 1.5, %v1409
        %v1411 = vmul.f32 %v1406, %v1410
        %vm1412 = vweird.f32 %v1311
        %vm1413 = vweird.f32 %v1406
        %vm1414 = vmor %vm1412, %vm1413
        %v1415 = vsel %vm1414, %v1406, %v1411
        %v1416 = vrsqrt.pop %v1312
        %v1417 = vmul.f32 %v1416, %v1312
        %v1418 = vmul.f32 %v1417, %v1416
        %v1419 = vmul.f32 0.5, %v1418
        %v1420 = vsub.f32 1.5, %v1419
        %v1421 = vmul.f32 %v1416, %v1420
        %vm1422 = vweird.f32 %v1312
        %vm1423 = vweird.f32 %v1416
        %vm1424 = vmor %vm1422, %vm1423
        %v1425 = vsel %vm1424, %v1416, %v1421
        %v1426 = vrsqrt.pop %v1313
        %v1427 = vmul.f32 %v1426, %v1313
        %v1428 = vmul.f32 %v1427, %v1426
        %v1429 = vmul.f32 0.5, %v1428
        %v1430 = vsub.f32 1.5, %v1429
        %v1431 = vmul.f32 %v1426, %v1430
        %vm1432 = vweird.f32 %v1313
        %vm1433 = vweird.f32 %v1426
        %vm1434 = vmor %vm1432, %vm1433
        %v1435 = vsel %vm1434, %v1426, %v1431
        %v1436 = vrsqrt.pop %v1314
        %v1437 = vmul.f32 %v1436, %v1314
        %v1438 = vmul.f32 %v1437, %v1436
        %v1439 = vmul.f32 0.5, %v1438
        %v1440 = vsub.f32 1.5, %v1439
        %v1441 = vmul.f32 %v1436, %v1440
        %vm1442 = vweird.f32 %v1314
        %vm1443 = vweird.f32 %v1436
        %vm1444 = vmor %vm1442, %vm1443
        %v1445 = vsel %vm1444, %v1436, %v1441
        %v1446 = vrsqrt.pop %v1315
        %v1447 = vmul.f32 %v1446, %v1315
        %v1448 = vmul.f32 %v1447, %v1446
        %v1449 = vmul.f32 0.5, %v1448
        %v1450 = vsub.f32 1.5, %v1449
        %v1451 = vmul.f32 %v1446, %v1450
        %vm1452 = vweird.f32 %v1315
        %vm1453 = vweird.f32 %v1446
        %vm1454 = vmor %vm1452, %vm1453
        %v1455 = vsel %vm1454, %v1446, %v1451
        %v1456 = vrsqrt.pop %v1316
        %v1457 = vmul.f32 %v1456, %v1316
        %v1458 = vmul.f32 %v1457, %v1456
        %v1459 = vmul.f32 0.5, %v1458
        %v1460 = vsub.f32 1.5, %v1459
        %v1461 = vmul.f32 %v1456, %v1460
        %vm1462 = vweird.f32 %v1316
        %vm1463 = vweird.f32 %v1456
        %vm1464 = vmor %vm1462, %vm1463
        %v1465 = vsel %vm1464, %v1456, %v1461
        %v1466 = vrsqrt.pop %v1317
        %v1467 = vmul.f32 %v1466, %v1317
        %v1468 = vmul.f32 %v1467, %v1466
        %v1469 = vmul.f32 0.5, %v1468
        %v1470 = vsub.f32 1.5, %v1469
        %v1471 = vmul.f32 %v1466, %v1470
        %vm1472 = vweird.f32 %v1317
        %vm1473 = vweird.f32 %v1466
        %vm1474 = vmor %vm1472, %vm1473
        %v1475 = vsel %vm1474, %v1466, %v1471
        %v1476 = vrsqrt.pop %v1318
        %v1477 = vmul.f32 %v1476, %v1318
        %v1478 = vmul.f32 %v1477, %v1476
        %v1479 = vmul.f32 0.5, %v1478
        %v1480 = vsub.f32 1.5, %v1479
        %v1481 = vmul.f32 %v1476, %v1480
        %vm1482 = vweird.f32 %v1318
        %vm1483 = vweird.f32 %v1476
        %vm1484 = vmor %vm1482, %vm1483
        %v1485 = vsel %vm1484, %v1476, %v1481
        %v1486 = vrsqrt.pop %v1319
        %v1487 = vmul.f32 %v1486, %v1319
        %v1488 = vmul.f32 %v1487, %v1486
        %v1489 = vmul.f32 0.5, %v1488
        %v1490 = vsub.f32 1.5, %v1489
        %v1491 = vmul.f32 %v1486, %v1490
        %vm1492 = vweird.f32 %v1319
        %vm1493 = vweird.f32 %v1486
        %vm1494 = vmor %vm1492, %vm1493
        %v1495 = vsel %vm1494, %v1486, %v1491
        %v1496 = vrsqrt.pop %v1320
        %v1497 = vmul.f32 %v1496, %v1320
        %v1498 = vmul.f32 %v1497, %v1496
        %v1499 = vmul.f32 0.5, %v1498
        %v1500 = vsub.f32 1.5, %v1499
        %v1501 = vmul.f32 %v1496, %v1500
        %vm1502 = vweird.f32 %v1320
        %vm1503 = vweird.f32 %v1496
        %vm1504 = vmor %vm1502, %vm1503
        %v1505 = vsel %vm1504, %v1496, %v1501
        %v1506 = vrsqrt.pop %v1321
        %v1507 = vmul.f32 %v1506, %v1321
        %v1508 = vmul.f32 %v1507, %v1506
        %v1509 = vmul.f32 0.5, %v1508
        %v1510 = vsub.f32 1.5, %v1509
        %v1511 = vmul.f32 %v1506, %v1510
        %vm1512 = vweird.f32 %v1321
        %vm1513 = vweird.f32 %v1506
        %vm1514 = vmor %vm1512, %vm1513
        %v1515 = vsel %vm1514, %v1506, %v1511
        %v1516 = vrsqrt.pop %v1322
        %v1517 = vmul.f32 %v1516, %v1322
        %v1518 = vmul.f32 %v1517, %v1516
        %v1519 = vmul.f32 0.5, %v1518
        %v1520 = vsub.f32 1.5, %v1519
        %v1521 = vmul.f32 %v1516, %v1520
        %vm1522 = vweird.f32 %v1322
        %vm1523 = vweird.f32 %v1516
        %vm1524 = vmor %vm1522, %vm1523
        %v1525 = vsel %vm1524, %v1516, %v1521
        %v1526 = vrsqrt.pop %v1323
        %v1527 = vmul.f32 %v1526, %v1323
        %v1528 = vmul.f32 %v1527, %v1526
        %v1529 = vmul.f32 0.5, %v1528
        %v1530 = vsub.f32 1.5, %v1529
        %v1531 = vmul.f32 %v1526, %v1530
        %vm1532 = vweird.f32 %v1323
        %vm1533 = vweird.f32 %v1526
        %vm1534 = vmor %vm1532, %vm1533
        %v1535 = vsel %vm1534, %v1526, %v1531
        %v1536 = vrsqrt.pop %v1324
        %v1537 = vmul.f32 %v1536, %v1324
        %v1538 = vmul.f32 %v1537, %v1536
        %v1539 = vmul.f32 0.5, %v1538
        %v1540 = vsub.f32 1.5, %v1539
        %v1541 = vmul.f32 %v1536, %v1540
        %vm1542 = vweird.f32 %v1324
        %vm1543 = vweird.f32 %v1536
        %vm1544 = vmor %vm1542, %vm1543
        %v1545 = vsel %vm1544, %v1536, %v1541
        %v1546 = vrsqrt.pop %v1325
        %v1547 = vmul.f32 %v1546, %v1325
        %v1548 = vmul.f32 %v1547, %v1546
        %v1549 = vmul.f32 0.5, %v1548
        %v1550 = vsub.f32 1.5, %v1549
        %v1551 = vmul.f32 %v1546, %v1550
        %vm1552 = vweird.f32 %v1325
        %vm1553 = vweird.f32 %v1546
        %vm1554 = vmor %vm1552, %vm1553
        %v1555 = vsel %vm1554, %v1546, %v1551
        %v1556 = vrsqrt.pop %v1326
        %v1557 = vmul.f32 %v1556, %v1326
        %v1558 = vmul.f32 %v1557, %v1556
        %v1559 = vmul.f32 0.5, %v1558
        %v1560 = vsub.f32 1.5, %v1559
        %v1561 = vmul.f32 %v1556, %v1560
        %vm1562 = vweird.f32 %v1326
        %vm1563 = vweird.f32 %v1556
        %vm1564 = vmor %vm1562, %vm1563
        %v1565 = vsel %vm1564, %v1556, %v1561
        %v1566 = vrsqrt.pop %v1327
        %v1567 = vmul.f32 %v1566, %v1327
        %v1568 = vmul.f32 %v1567, %v1566
        %v1569 = vmul.f32 0.5, %v1568
        %v1570 = vsub.f32 1.5, %v1569
        %v1571 = vmul.f32 %v1566, %v1570
        %vm1572 = vweird.f32 %v1327
        %vm1573 = vweird.f32 %v1566
        %vm1574 = vmor %vm1572, %vm1573
        %v1575 = vsel %vm1574, %v1566, %v1571
        %v1576 = vrsqrt.pop %v1328
        %v1577 = vmul.f32 %v1576, %v1328
        %v1578 = vmul.f32 %v1577, %v1576
        %v1579 = vmul.f32 0.5, %v1578
        %v1580 = vsub.f32 1.5, %v1579
        %v1581 = vmul.f32 %v1576, %v1580
        %vm1582 = vweird.f32 %v1328
        %vm1583 = vweird.f32 %v1576
        %vm1584 = vmor %vm1582, %vm1583
        %v1585 = vsel %vm1584, %v1576, %v1581
        %v1586 = vrsqrt.pop %v1329
        %v1587 = vmul.f32 %v1586, %v1329
        %v1588 = vmul.f32 %v1587, %v1586
        %v1589 = vmul.f32 0.5, %v1588
        %v1590 = vsub.f32 1.5, %v1589
        %v1591 = vmul.f32 %v1586, %v1590
        %vm1592 = vweird.f32 %v1329
        %vm1593 = vweird.f32 %v1586
        %vm1594 = vmor %vm1592, %vm1593
        %v1595 = vsel %vm1594, %v1586, %v1591
        %v1596 = vrsqrt.pop %v1330
        %v1597 = vmul.f32 %v1596, %v1330
        %v1598 = vmul.f32 %v1597, %v1596
        %v1599 = vmul.f32 0.5, %v1598
        %v1600 = vsub.f32 1.5, %v1599
        %v1601 = vmul.f32 %v1596, %v1600
        %vm1602 = vweird.f32 %v1330
        %vm1603 = vweird.f32 %v1596
        %vm1604 = vmor %vm1602, %vm1603
        %v1605 = vsel %vm1604, %v1596, %v1601
        %v1606 = vrsqrt.pop %v1331
        %v1607 = vmul.f32 %v1606, %v1331
        %v1608 = vmul.f32 %v1607, %v1606
        %v1609 = vmul.f32 0.5, %v1608
        %v1610 = vsub.f32 1.5, %v1609
        %v1611 = vmul.f32 %v1606, %v1610
        %vm1612 = vweird.f32 %v1331
        %vm1613 = vweird.f32 %v1606
        %vm1614 = vmor %vm1612, %vm1613
        %v1615 = vsel %vm1614, %v1606, %v1611
        %v1616 = vrsqrt.pop %v1332
        %v1617 = vmul.f32 %v1616, %v1332
        %v1618 = vmul.f32 %v1617, %v1616
        %v1619 = vmul.f32 0.5, %v1618
        %v1620 = vsub.f32 1.5, %v1619
        %v1621 = vmul.f32 %v1616, %v1620
        %vm1622 = vweird.f32 %v1332
        %vm1623 = vweird.f32 %v1616
        %vm1624 = vmor %vm1622, %vm1623
        %v1625 = vsel %vm1624, %v1616, %v1621
        %v1626 = vrsqrt.pop %v1333
        %v1627 = vmul.f32 %v1626, %v1333
        %v1628 = vmul.f32 %v1627, %v1626
        %v1629 = vmul.f32 0.5, %v1628
        %v1630 = vsub.f32 1.5, %v1629
        %v1631 = vmul.f32 %v1626, %v1630
        %vm1632 = vweird.f32 %v1333
        %vm1633 = vweird.f32 %v1626
        %vm1634 = vmor %vm1632, %vm1633
        %v1635 = vsel %vm1634, %v1626, %v1631
        %v1636 = vrsqrt.pop %v1334
        %v1637 = vmul.f32 %v1636, %v1334
        %v1638 = vmul.f32 %v1637, %v1636
        %v1639 = vmul.f32 0.5, %v1638
        %v1640 = vsub.f32 1.5, %v1639
        %v1641 = vmul.f32 %v1636, %v1640
        %vm1642 = vweird.f32 %v1334
        %vm1643 = vweird.f32 %v1636
        %vm1644 = vmor %vm1642, %vm1643
        %v1645 = vsel %vm1644, %v1636, %v1641
        %v1646 = vrsqrt.pop %v1335
        %v1647 = vmul.f32 %v1646, %v1335
        %v1648 = vmul.f32 %v1647, %v1646
        %v1649 = vmul.f32 0.5, %v1648
        %v1650 = vsub.f32 1.5, %v1649
        %v1651 = vmul.f32 %v1646, %v1650
        %vm1652 = vweird.f32 %v1335
        %vm1653 = vweird.f32 %v1646
        %vm1654 = vmor %vm1652, %vm1653
        %v1655 = vsel %vm1654, %v1646, %v1651
        %v1656 = vmul.f32 %v1144, %v1345
        %v1657 = vmul.f32 %v1145, %v1355
        %v1658 = vmul.f32 %v1146, %v1365
        %v1659 = vmul.f32 %v1147, %v1375
        %v1660 = vmul.f32 %v1148, %v1385
        %v1661 = vmul.f32 %v1149, %v1395
        %v1662 = vmul.f32 %v1150, %v1405
        %v1663 = vmul.f32 %v1151, %v1415
        %v1664 = vmul.f32 %v1152, %v1425
        %v1665 = vmul.f32 %v1153, %v1435
        %v1666 = vmul.f32 %v1154, %v1445
        %v1667 = vmul.f32 %v1155, %v1455
        %v1668 = vmul.f32 %v1156, %v1465
        %v1669 = vmul.f32 %v1157, %v1475
        %v1670 = vmul.f32 %v1158, %v1485
        %v1671 = vmul.f32 %v1159, %v1495
        %v1672 = vmul.f32 %v1160, %v1505
        %v1673 = vmul.f32 %v1161, %v1515
        %v1674 = vmul.f32 %v1162, %v1525
        %v1675 = vmul.f32 %v1163, %v1535
        %v1676 = vmul.f32 %v1164, %v1545
        %v1677 = vmul.f32 %v1165, %v1555
        %v1678 = vmul.f32 %v1166, %v1565
        %v1679 = vmul.f32 %v1167, %v1575
        %v1680 = vmul.f32 %v1168, %v1585
        %v1681 = vmul.f32 %v1169, %v1595
        %v1682 = vmul.f32 %v1170, %v1605
        %v1683 = vmul.f32 %v1171, %v1615
        %v1684 = vmul.f32 %v1172, %v1625
        %v1685 = vmul.f32 %v1173, %v1635
        %v1686 = vmul.f32 %v1174, %v1645
        %v1687 = vmul.f32 %v1175, %v1655
        %v1688 = vperm.slane %v1012, 0
        %v1689 = vmul.f32 %v1656, %v1688
        %v1690 = vmul.f32 %v1657, %v1688
        %v1691 = vmul.f32 %v1658, %v1688
        %v1692 = vmul.f32 %v1659, %v1688
        %v1693 = vmul.f32 %v1660, %v1688
        %v1694 = vmul.f32 %v1661, %v1688
        %v1695 = vmul.f32 %v1662, %v1688
        %v1696 = vmul.f32 %v1663, %v1688
        %v1697 = vmul.f32 %v1664, %v1688
        %v1698 = vmul.f32 %v1665, %v1688
        %v1699 = vmul.f32 %v1666, %v1688
        %v1700 = vmul.f32 %v1667, %v1688
        %v1701 = vmul.f32 %v1668, %v1688
        %v1702 = vmul.f32 %v1669, %v1688
        %v1703 = vmul.f32 %v1670, %v1688
        %v1704 = vmul.f32 %v1671, %v1688
        %v1705 = vmul.f32 %v1672, %v1688
        %v1706 = vmul.f32 %v1673, %v1688
        %v1707 = vmul.f32 %v1674, %v1688
        %v1708 = vmul.f32 %v1675, %v1688
        %v1709 = vmul.f32 %v1676, %v1688
        %v1710 = vmul.f32 %v1677, %v1688
        %v1711 = vmul.f32 %v1678, %v1688
        %v1712 = vmul.f32 %v1679, %v1688
        %v1713 = vmul.f32 %v1680, %v1688
        %v1714 = vmul.f32 %v1681, %v1688
        %v1715 = vmul.f32 %v1682, %v1688
        %v1716 = vmul.f32 %v1683, %v1688
        %v1717 = vmul.f32 %v1684, %v1688
        %v1718 = vmul.f32 %v1685, %v1688
        %v1719 = vmul.f32 %v1686, %v1688
        %v1720 = vmul.f32 %v1687, %v1688
        %v1721 = vperm.slane %v1013, 0
        %v1722 = vadd.f32 %v1689, %v1721
        %v1723 = vadd.f32 %v1690, %v1721
        %v1724 = vadd.f32 %v1691, %v1721
        %v1725 = vadd.f32 %v1692, %v1721
        %v1726 = vadd.f32 %v1693, %v1721
        %v1727 = vadd.f32 %v1694, %v1721
        %v1728 = vadd.f32 %v1695, %v1721
        %v1729 = vadd.f32 %v1696, %v1721
        %v1730 = vadd.f32 %v1697, %v1721
        %v1731 = vadd.f32 %v1698, %v1721
        %v1732 = vadd.f32 %v1699, %v1721
        %v1733 = vadd.f32 %v1700, %v1721
        %v1734 = vadd.f32 %v1701, %v1721
        %v1735 = vadd.f32 %v1702, %v1721
        %v1736 = vadd.f32 %v1703, %v1721
        %v1737 = vadd.f32 %v1704, %v1721
        %v1738 = vadd.f32 %v1705, %v1721
        %v1739 = vadd.f32 %v1706, %v1721
        %v1740 = vadd.f32 %v1707, %v1721
        %v1741 = vadd.f32 %v1708, %v1721
        %v1742 = vadd.f32 %v1709, %v1721
        %v1743 = vadd.f32 %v1710, %v1721
        %v1744 = vadd.f32 %v1711, %v1721
        %v1745 = vadd.f32 %v1712, %v1721
        %v1746 = vadd.f32 %v1713, %v1721
        %v1747 = vadd.f32 %v1714, %v1721
        %v1748 = vadd.f32 %v1715, %v1721
        %v1749 = vadd.f32 %v1716, %v1721
        %v1750 = vadd.f32 %v1717, %v1721
        %v1751 = vadd.f32 %v1718, %v1721
        %v1752 = vadd.f32 %v1719, %v1721
        %v1753 = vadd.f32 %v1720, %v1721
        %v1754 = vpack.c.bf16 %v1723, %v1722
        %v1755 = vpack.c.bf16 %v1725, %v1724
        %v1756 = vpack.c.bf16 %v1727, %v1726
        %v1757 = vpack.c.bf16 %v1729, %v1728
        %v1758 = vpack.c.bf16 %v1731, %v1730
        %v1759 = vpack.c.bf16 %v1733, %v1732
        %v1760 = vpack.c.bf16 %v1735, %v1734
        %v1761 = vpack.c.bf16 %v1737, %v1736
        %v1762 = vpack.c.bf16 %v1739, %v1738
        %v1763 = vpack.c.bf16 %v1741, %v1740
        %v1764 = vpack.c.bf16 %v1743, %v1742
        %v1765 = vpack.c.bf16 %v1745, %v1744
        %v1766 = vpack.c.bf16 %v1747, %v1746
        %v1767 = vpack.c.bf16 %v1749, %v1748
        %v1768 = vpack.c.bf16 %v1751, %v1750
        %v1769 = vpack.c.bf16 %v1753, %v1752
        %s1770 = scalar_lea.vmem %s1, 64
        %v1771 = vld [vmem:[%s1770] sm:$0xf]
        %v1772 = vld [vmem:[%s1770 + $0x4] sm:$0xf]
        %v1773 = vld [vmem:[%s1770 + $0x8] sm:$0xf]
        %v1774 = vld [vmem:[%s1770 + $0xc] sm:$0xf]
        %v1775 = vld [vmem:[%s1770 + $0x10] sm:$0xf]
        %v1776 = vld [vmem:[%s1770 + $0x14] sm:$0xf]
        %v1777 = vld [vmem:[%s1770 + $0x18] sm:$0xf]
        %v1778 = vld [vmem:[%s1770 + $0x1c] sm:$0xf]
        %v1779 = vld [vmem:[%s1770 + $0x20] sm:$0xf]
        %v1780 = vld [vmem:[%s1770 + $0x24] sm:$0xf]
        %v1781 = vld [vmem:[%s1770 + $0x28] sm:$0xf]
        %v1782 = vld [vmem:[%s1770 + $0x2c] sm:$0xf]
        %v1783 = vld [vmem:[%s1770 + $0x30] sm:$0xf]
        %v1784 = vld [vmem:[%s1770 + $0x34] sm:$0xf]
        %v1785 = vld [vmem:[%s1770 + $0x38] sm:$0xf]
        %v1786 = vld [vmem:[%s1770 + $0x3c] sm:$0xf]
        %v1803 = vunpack.c.l.b16 %v1771
        %v1804 = vunpack.c.l.b16 %v1772
        %v1805 = vunpack.c.l.b16 %v1773
        %v1806 = vunpack.c.l.b16 %v1774
        %v1807 = vunpack.c.l.b16 %v1775
        %v1808 = vunpack.c.l.b16 %v1776
        %v1809 = vunpack.c.l.b16 %v1777
        %v1810 = vunpack.c.l.b16 %v1778
        %v1811 = vunpack.c.l.b16 %v1779
        %v1812 = vunpack.c.l.b16 %v1780
        %v1813 = vunpack.c.l.b16 %v1781
        %v1814 = vunpack.c.l.b16 %v1782
        %v1815 = vunpack.c.l.b16 %v1783
        %v1816 = vunpack.c.l.b16 %v1784
        %v1817 = vunpack.c.l.b16 %v1785
        %v1818 = vunpack.c.l.b16 %v1786
        %v1819 = vpack.c.b16 %v1804, %v1803
        %v1820 = vpack.c.b16 %v1806, %v1805
        %v1821 = vpack.c.b16 %v1808, %v1807
        %v1822 = vpack.c.b16 %v1810, %v1809
        %v1823 = vpack.c.b16 %v1812, %v1811
        %v1824 = vpack.c.b16 %v1814, %v1813
        %v1825 = vpack.c.b16 %v1816, %v1815
        %v1826 = vpack.c.b16 %v1818, %v1817
        %1835 = vmatpush.bf16.msra.mxu0 %v1826
        %1836 = vmatpush.bf16.msra.mxu0 %v1825
        %1837 = vmatpush.bf16.msra.mxu0 %v1824
        %1838 = vmatpush.bf16.msra.mxu0 %v1823
        %1839 = vmatpush.bf16.msra.mxu0 %v1822
        %1840 = vmatpush.bf16.msra.mxu0 %v1821
        %1841 = vmatpush.bf16.msra.mxu0 %v1820
        %1842 = vmatpush.bf16.msra.mxu0 %v1819
        %1843 = vmatmul.bf16.gmra.mxu0 %v1754
        %v1844 = vpop.f32.mrf.mxu0
        %v1845 = vadd.f32 0.0, %v1844
        %v1846 = vpop.f32.mrf.mxu0
        %v1847 = vadd.f32 0.0, %v1846
        %1848 = vmatmul.bf16.gmra.mxu0 %v1755
        %v1849 = vpop.f32.mrf.mxu0
        %v1850 = vadd.f32 0.0, %v1849
        %v1851 = vpop.f32.mrf.mxu0
        %v1852 = vadd.f32 0.0, %v1851
        %1853 = vmatmul.bf16.gmra.mxu0 %v1756
        %v1854 = vpop.f32.mrf.mxu0
        %v1855 = vadd.f32 0.0, %v1854
        %v1856 = vpop.f32.mrf.mxu0
        %v1857 = vadd.f32 0.0, %v1856
        %1858 = vmatmul.bf16.gmra.mxu0 %v1757
        %v1859 = vpop.f32.mrf.mxu0
        %v1860 = vadd.f32 0.0, %v1859
        %v1861 = vpop.f32.mrf.mxu0
        %v1862 = vadd.f32 0.0, %v1861
        %1863 = vmatmul.bf16.gmra.mxu0 %v1758
        %v1864 = vpop.f32.mrf.mxu0
        %v1865 = vadd.f32 0.0, %v1864
        %v1866 = vpop.f32.mrf.mxu0
        %v1867 = vadd.f32 0.0, %v1866
        %1868 = vmatmul.bf16.gmra.mxu0 %v1759
        %v1869 = vpop.f32.mrf.mxu0
        %v1870 = vadd.f32 0.0, %v1869
        %v1871 = vpop.f32.mrf.mxu0
        %v1872 = vadd.f32 0.0, %v1871
        %1873 = vmatmul.bf16.gmra.mxu0 %v1760
        %v1874 = vpop.f32.mrf.mxu0
        %v1875 = vadd.f32 0.0, %v1874
        %v1876 = vpop.f32.mrf.mxu0
        %v1877 = vadd.f32 0.0, %v1876
        %1878 = vmatmul.bf16.gmra.mxu0 %v1761
        %v1879 = vpop.f32.mrf.mxu0
        %v1880 = vadd.f32 0.0, %v1879
        %v1881 = vpop.f32.mrf.mxu0
        %v1882 = vadd.f32 0.0, %v1881
        %1883 = vmatmul.bf16.gmra.mxu0 %v1762
        %v1884 = vpop.f32.mrf.mxu0
        %v1885 = vadd.f32 0.0, %v1884
        %v1886 = vpop.f32.mrf.mxu0
        %v1887 = vadd.f32 0.0, %v1886
        %1888 = vmatmul.bf16.gmra.mxu0 %v1763
        %v1889 = vpop.f32.mrf.mxu0
        %v1890 = vadd.f32 0.0, %v1889
        %v1891 = vpop.f32.mrf.mxu0
        %v1892 = vadd.f32 0.0, %v1891
        %1893 = vmatmul.bf16.gmra.mxu0 %v1764
        %v1894 = vpop.f32.mrf.mxu0
        %v1895 = vadd.f32 0.0, %v1894
        %v1896 = vpop.f32.mrf.mxu0
        %v1897 = vadd.f32 0.0, %v1896
        %1898 = vmatmul.bf16.gmra.mxu0 %v1765
        %v1899 = vpop.f32.mrf.mxu0
        %v1900 = vadd.f32 0.0, %v1899
        %v1901 = vpop.f32.mrf.mxu0
        %v1902 = vadd.f32 0.0, %v1901
        %1903 = vmatmul.bf16.gmra.mxu0 %v1766
        %v1904 = vpop.f32.mrf.mxu0
        %v1905 = vadd.f32 0.0, %v1904
        %v1906 = vpop.f32.mrf.mxu0
        %v1907 = vadd.f32 0.0, %v1906
        %1908 = vmatmul.bf16.gmra.mxu0 %v1767
        %v1909 = vpop.f32.mrf.mxu0
        %v1910 = vadd.f32 0.0, %v1909
        %v1911 = vpop.f32.mrf.mxu0
        %v1912 = vadd.f32 0.0, %v1911
        %1913 = vmatmul.bf16.gmra.mxu0 %v1768
        %v1914 = vpop.f32.mrf.mxu0
        %v1915 = vadd.f32 0.0, %v1914
        %v1916 = vpop.f32.mrf.mxu0
        %v1917 = vadd.f32 0.0, %v1916
        %1918 = vmatmul.bf16.gmra.mxu0 %v1769
        %v1919 = vpop.f32.mrf.mxu0
        %v1920 = vadd.f32 0.0, %v1919
        %v1921 = vpop.f32.mrf.mxu0
        %v1922 = vadd.f32 0.0, %v1921
        %1923 = vdwg.mxu0
        %v1924 = vxor.u32 %v1845, 2147483648
        %v1925 = vxor.u32 %v1847, 2147483648
        %v1926 = vxor.u32 %v1850, 2147483648
        %v1927 = vxor.u32 %v1852, 2147483648
        %v1928 = vxor.u32 %v1855, 2147483648
        %v1929 = vxor.u32 %v1857, 2147483648
        %v1930 = vxor.u32 %v1860, 2147483648
        %v1931 = vxor.u32 %v1862, 2147483648
        %v1932 = vxor.u32 %v1865, 2147483648
        %v1933 = vxor.u32 %v1867, 2147483648
        %v1934 = vxor.u32 %v1870, 2147483648
        %v1935 = vxor.u32 %v1872, 2147483648
        %v1936 = vxor.u32 %v1875, 2147483648
        %v1937 = vxor.u32 %v1877, 2147483648
        %v1938 = vxor.u32 %v1880, 2147483648
        %v1939 = vxor.u32 %v1882, 2147483648
        %v1940 = vxor.u32 %v1885, 2147483648
        %v1941 = vxor.u32 %v1887, 2147483648
        %v1942 = vxor.u32 %v1890, 2147483648
        %v1943 = vxor.u32 %v1892, 2147483648
        %v1944 = vxor.u32 %v1895, 2147483648
        %v1945 = vxor.u32 %v1897, 2147483648
        %v1946 = vxor.u32 %v1900, 2147483648
        %v1947 = vxor.u32 %v1902, 2147483648
        %v1948 = vxor.u32 %v1905, 2147483648
        %v1949 = vxor.u32 %v1907, 2147483648
        %v1950 = vxor.u32 %v1910, 2147483648
        %v1951 = vxor.u32 %v1912, 2147483648
        %v1952 = vxor.u32 %v1915, 2147483648
        %v1953 = vxor.u32 %v1917, 2147483648
        %v1954 = vxor.u32 %v1920, 2147483648
        %v1955 = vxor.u32 %v1922, 2147483648
        %v1956 = vmul.f32 %v1924, 1.442695
        %v1957 = vpow.pop %v1956
        %v1958 = vmul.f32 %v1925, 1.442695
        %v1959 = vpow.pop %v1958
        %v1960 = vmul.f32 %v1926, 1.442695
        %v1961 = vpow.pop %v1960
        %v1962 = vmul.f32 %v1927, 1.442695
        %v1963 = vpow.pop %v1962
        %v1964 = vmul.f32 %v1928, 1.442695
        %v1965 = vpow.pop %v1964
        %v1966 = vmul.f32 %v1929, 1.442695
        %v1967 = vpow.pop %v1966
        %v1968 = vmul.f32 %v1930, 1.442695
        %v1969 = vpow.pop %v1968
        %v1970 = vmul.f32 %v1931, 1.442695
        %v1971 = vpow.pop %v1970
        %v1972 = vmul.f32 %v1932, 1.442695
        %v1973 = vpow.pop %v1972
        %v1974 = vmul.f32 %v1933, 1.442695
        %v1975 = vpow.pop %v1974
        %v1976 = vmul.f32 %v1934, 1.442695
        %v1977 = vpow.pop %v1976
        %v1978 = vmul.f32 %v1935, 1.442695
        %v1979 = vpow.pop %v1978
        %v1980 = vmul.f32 %v1936, 1.442695
        %v1981 = vpow.pop %v1980
        %v1982 = vmul.f32 %v1937, 1.442695
        %v1983 = vpow.pop %v1982
        %v1984 = vmul.f32 %v1938, 1.442695
        %v1985 = vpow.pop %v1984
        %v1986 = vmul.f32 %v1939, 1.442695
        %v1987 = vpow.pop %v1986
        %v1988 = vmul.f32 %v1940, 1.442695
        %v1989 = vpow.pop %v1988
        %v1990 = vmul.f32 %v1941, 1.442695
        %v1991 = vpow.pop %v1990
        %v1992 = vmul.f32 %v1942, 1.442695
        %v1993 = vpow.pop %v1992
        %v1994 = vmul.f32 %v1943, 1.442695
        %v1995 = vpow.pop %v1994
        %v1996 = vmul.f32 %v1944, 1.442695
        %v1997 = vpow.pop %v1996
        %v1998 = vmul.f32 %v1945, 1.442695
        %v1999 = vpow.pop %v1998
        %v2000 = vmul.f32 %v1946, 1.442695
        %v2001 = vpow.pop %v2000
        %v2002 = vmul.f32 %v1947, 1.442695
        %v2003 = vpow.pop %v2002
        %v2004 = vmul.f32 %v1948, 1.442695
        %v2005 = vpow.pop %v2004
        %v2006 = vmul.f32 %v1949, 1.442695
        %v2007 = vpow.pop %v2006
        %v2008 = vmul.f32 %v1950, 1.442695
        %v2009 = vpow.pop %v2008
        %v2010 = vmul.f32 %v1951, 1.442695
        %v2011 = vpow.pop %v2010
        %v2012 = vmul.f32 %v1952, 1.442695
        %v2013 = vpow.pop %v2012
        %v2014 = vmul.f32 %v1953, 1.442695
        %v2015 = vpow.pop %v2014
        %v2016 = vmul.f32 %v1954, 1.442695
        %v2017 = vpow.pop %v2016
        %v2018 = vmul.f32 %v1955, 1.442695
        %v2019 = vpow.pop %v2018
        %v2020 = vadd.f32 %v1957, 1.0
        %v2021 = vadd.f32 %v1959, 1.0
        %v2022 = vadd.f32 %v1961, 1.0
        %v2023 = vadd.f32 %v1963, 1.0
        %v2024 = vadd.f32 %v1965, 1.0
        %v2025 = vadd.f32 %v1967, 1.0
        %v2026 = vadd.f32 %v1969, 1.0
        %v2027 = vadd.f32 %v1971, 1.0
        %v2028 = vadd.f32 %v1973, 1.0
        %v2029 = vadd.f32 %v1975, 1.0
        %v2030 = vadd.f32 %v1977, 1.0
        %v2031 = vadd.f32 %v1979, 1.0
        %v2032 = vadd.f32 %v1981, 1.0
        %v2033 = vadd.f32 %v1983, 1.0
        %v2034 = vadd.f32 %v1985, 1.0
        %v2035 = vadd.f32 %v1987, 1.0
        %v2036 = vadd.f32 %v1989, 1.0
        %v2037 = vadd.f32 %v1991, 1.0
        %v2038 = vadd.f32 %v1993, 1.0
        %v2039 = vadd.f32 %v1995, 1.0
        %v2040 = vadd.f32 %v1997, 1.0
        %v2041 = vadd.f32 %v1999, 1.0
        %v2042 = vadd.f32 %v2001, 1.0
        %v2043 = vadd.f32 %v2003, 1.0
        %v2044 = vadd.f32 %v2005, 1.0
        %v2045 = vadd.f32 %v2007, 1.0
        %v2046 = vadd.f32 %v2009, 1.0
        %v2047 = vadd.f32 %v2011, 1.0
        %v2048 = vadd.f32 %v2013, 1.0
        %v2049 = vadd.f32 %v2015, 1.0
        %v2050 = vadd.f32 %v2017, 1.0
        %v2051 = vadd.f32 %v2019, 1.0
        %v2052 = vrcp.pop %v2020
        %v2053 = vmul.f32 %v2020, %v2052
        %v2054 = vsub.f32 1.0, %v2053
        %v2055 = vmul.f32 %v2052, %v2054
        %v2056 = vadd.f32 %v2052, %v2055
        %vm2057 = vweird.f32 %v2020
        %vm2058 = vweird.f32 %v2052
        %vm2059 = vmor %vm2057, %vm2058
        %v2060 = vsel %vm2059, %v2052, %v2056
        %v2061 = vand.u32 2147483647, %v2020
        %vm2062 = vcmp.eq.f32.partialorder %v2061, 8.507059e+37
        %v2063 = vand.u32 %v2020, 2147483648
        %v2064 = vor.u32 1.1754944e-38, %v2063
        %v2065 = vsel %vm2062, %v2064, %v2060
        %v2066 = vmul.f32 1.0, %v2065
        %v2067 = vrcp.pop %v2021
        %v2068 = vmul.f32 %v2021, %v2067
        %v2069 = vsub.f32 1.0, %v2068
        %v2070 = vmul.f32 %v2067, %v2069
        %v2071 = vadd.f32 %v2067, %v2070
        %vm2072 = vweird.f32 %v2021
        %vm2073 = vweird.f32 %v2067
        %vm2074 = vmor %vm2072, %vm2073
        %v2075 = vsel %vm2074, %v2067, %v2071
        %v2076 = vand.u32 2147483647, %v2021
        %vm2077 = vcmp.eq.f32.partialorder %v2076, 8.507059e+37
        %v2078 = vand.u32 %v2021, 2147483648
        %v2079 = vor.u32 1.1754944e-38, %v2078
        %v2080 = vsel %vm2077, %v2079, %v2075
        %v2081 = vmul.f32 1.0, %v2080
        %v2082 = vrcp.pop %v2022
        %v2083 = vmul.f32 %v2022, %v2082
        %v2084 = vsub.f32 1.0, %v2083
        %v2085 = vmul.f32 %v2082, %v2084
        %v2086 = vadd.f32 %v2082, %v2085
        %vm2087 = vweird.f32 %v2022
        %vm2088 = vweird.f32 %v2082
        %vm2089 = vmor %vm2087, %vm2088
        %v2090 = vsel %vm2089, %v2082, %v2086
        %v2091 = vand.u32 2147483647, %v2022
        %vm2092 = vcmp.eq.f32.partialorder %v2091, 8.507059e+37
        %v2093 = vand.u32 %v2022, 2147483648
        %v2094 = vor.u32 1.1754944e-38, %v2093
        %v2095 = vsel %vm2092, %v2094, %v2090
        %v2096 = vmul.f32 1.0, %v2095
        %v2097 = vrcp.pop %v2023
        %v2098 = vmul.f32 %v2023, %v2097
        %v2099 = vsub.f32 1.0, %v2098
        %v2100 = vmul.f32 %v2097, %v2099
        %v2101 = vadd.f32 %v2097, %v2100
        %vm2102 = vweird.f32 %v2023
        %vm2103 = vweird.f32 %v2097
        %vm2104 = vmor %vm2102, %vm2103
        %v2105 = vsel %vm2104, %v2097, %v2101
        %v2106 = vand.u32 2147483647, %v2023
        %vm2107 = vcmp.eq.f32.partialorder %v2106, 8.507059e+37
        %v2108 = vand.u32 %v2023, 2147483648
        %v2109 = vor.u32 1.1754944e-38, %v2108
        %v2110 = vsel %vm2107, %v2109, %v2105
        %v2111 = vmul.f32 1.0, %v2110
        %v2112 = vrcp.pop %v2024
        %v2113 = vmul.f32 %v2024, %v2112
        %v2114 = vsub.f32 1.0, %v2113
        %v2115 = vmul.f32 %v2112, %v2114
        %v2116 = vadd.f32 %v2112, %v2115
        %vm2117 = vweird.f32 %v2024
        %vm2118 = vweird.f32 %v2112
        %vm2119 = vmor %vm2117, %vm2118
        %v2120 = vsel %vm2119, %v2112, %v2116
        %v2121 = vand.u32 2147483647, %v2024
        %vm2122 = vcmp.eq.f32.partialorder %v2121, 8.507059e+37
        %v2123 = vand.u32 %v2024, 2147483648
        %v2124 = vor.u32 1.1754944e-38, %v2123
        %v2125 = vsel %vm2122, %v2124, %v2120
        %v2126 = vmul.f32 1.0, %v2125
        %v2127 = vrcp.pop %v2025
        %v2128 = vmul.f32 %v2025, %v2127
        %v2129 = vsub.f32 1.0, %v2128
        %v2130 = vmul.f32 %v2127, %v2129
        %v2131 = vadd.f32 %v2127, %v2130
        %vm2132 = vweird.f32 %v2025
        %vm2133 = vweird.f32 %v2127
        %vm2134 = vmor %vm2132, %vm2133
        %v2135 = vsel %vm2134, %v2127, %v2131
        %v2136 = vand.u32 2147483647, %v2025
        %vm2137 = vcmp.eq.f32.partialorder %v2136, 8.507059e+37
        %v2138 = vand.u32 %v2025, 2147483648
        %v2139 = vor.u32 1.1754944e-38, %v2138
        %v2140 = vsel %vm2137, %v2139, %v2135
        %v2141 = vmul.f32 1.0, %v2140
        %v2142 = vrcp.pop %v2026
        %v2143 = vmul.f32 %v2026, %v2142
        %v2144 = vsub.f32 1.0, %v2143
        %v2145 = vmul.f32 %v2142, %v2144
        %v2146 = vadd.f32 %v2142, %v2145
        %vm2147 = vweird.f32 %v2026
        %vm2148 = vweird.f32 %v2142
        %vm2149 = vmor %vm2147, %vm2148
        %v2150 = vsel %vm2149, %v2142, %v2146
        %v2151 = vand.u32 2147483647, %v2026
        %vm2152 = vcmp.eq.f32.partialorder %v2151, 8.507059e+37
        %v2153 = vand.u32 %v2026, 2147483648
        %v2154 = vor.u32 1.1754944e-38, %v2153
        %v2155 = vsel %vm2152, %v2154, %v2150
        %v2156 = vmul.f32 1.0, %v2155
        %v2157 = vrcp.pop %v2027
        %v2158 = vmul.f32 %v2027, %v2157
        %v2159 = vsub.f32 1.0, %v2158
        %v2160 = vmul.f32 %v2157, %v2159
        %v2161 = vadd.f32 %v2157, %v2160
        %vm2162 = vweird.f32 %v2027
        %vm2163 = vweird.f32 %v2157
        %vm2164 = vmor %vm2162, %vm2163
        %v2165 = vsel %vm2164, %v2157, %v2161
        %v2166 = vand.u32 2147483647, %v2027
        %vm2167 = vcmp.eq.f32.partialorder %v2166, 8.507059e+37
        %v2168 = vand.u32 %v2027, 2147483648
        %v2169 = vor.u32 1.1754944e-38, %v2168
        %v2170 = vsel %vm2167, %v2169, %v2165
        %v2171 = vmul.f32 1.0, %v2170
        %v2172 = vrcp.pop %v2028
        %v2173 = vmul.f32 %v2028, %v2172
        %v2174 = vsub.f32 1.0, %v2173
        %v2175 = vmul.f32 %v2172, %v2174
        %v2176 = vadd.f32 %v2172, %v2175
        %vm2177 = vweird.f32 %v2028
        %vm2178 = vweird.f32 %v2172
        %vm2179 = vmor %vm2177, %vm2178
        %v2180 = vsel %vm2179, %v2172, %v2176
        %v2181 = vand.u32 2147483647, %v2028
        %vm2182 = vcmp.eq.f32.partialorder %v2181, 8.507059e+37
        %v2183 = vand.u32 %v2028, 2147483648
        %v2184 = vor.u32 1.1754944e-38, %v2183
        %v2185 = vsel %vm2182, %v2184, %v2180
        %v2186 = vmul.f32 1.0, %v2185
        %v2187 = vrcp.pop %v2029
        %v2188 = vmul.f32 %v2029, %v2187
        %v2189 = vsub.f32 1.0, %v2188
        %v2190 = vmul.f32 %v2187, %v2189
        %v2191 = vadd.f32 %v2187, %v2190
        %vm2192 = vweird.f32 %v2029
        %vm2193 = vweird.f32 %v2187
        %vm2194 = vmor %vm2192, %vm2193
        %v2195 = vsel %vm2194, %v2187, %v2191
        %v2196 = vand.u32 2147483647, %v2029
        %vm2197 = vcmp.eq.f32.partialorder %v2196, 8.507059e+37
        %v2198 = vand.u32 %v2029, 2147483648
        %v2199 = vor.u32 1.1754944e-38, %v2198
        %v2200 = vsel %vm2197, %v2199, %v2195
        %v2201 = vmul.f32 1.0, %v2200
        %v2202 = vrcp.pop %v2030
        %v2203 = vmul.f32 %v2030, %v2202
        %v2204 = vsub.f32 1.0, %v2203
        %v2205 = vmul.f32 %v2202, %v2204
        %v2206 = vadd.f32 %v2202, %v2205
        %vm2207 = vweird.f32 %v2030
        %vm2208 = vweird.f32 %v2202
        %vm2209 = vmor %vm2207, %vm2208
        %v2210 = vsel %vm2209, %v2202, %v2206
        %v2211 = vand.u32 2147483647, %v2030
        %vm2212 = vcmp.eq.f32.partialorder %v2211, 8.507059e+37
        %v2213 = vand.u32 %v2030, 2147483648
        %v2214 = vor.u32 1.1754944e-38, %v2213
        %v2215 = vsel %vm2212, %v2214, %v2210
        %v2216 = vmul.f32 1.0, %v2215
        %v2217 = vrcp.pop %v2031
        %v2218 = vmul.f32 %v2031, %v2217
        %v2219 = vsub.f32 1.0, %v2218
        %v2220 = vmul.f32 %v2217, %v2219
        %v2221 = vadd.f32 %v2217, %v2220
        %vm2222 = vweird.f32 %v2031
        %vm2223 = vweird.f32 %v2217
        %vm2224 = vmor %vm2222, %vm2223
        %v2225 = vsel %vm2224, %v2217, %v2221
        %v2226 = vand.u32 2147483647, %v2031
        %vm2227 = vcmp.eq.f32.partialorder %v2226, 8.507059e+37
        %v2228 = vand.u32 %v2031, 2147483648
        %v2229 = vor.u32 1.1754944e-38, %v2228
        %v2230 = vsel %vm2227, %v2229, %v2225
        %v2231 = vmul.f32 1.0, %v2230
        %v2232 = vrcp.pop %v2032
        %v2233 = vmul.f32 %v2032, %v2232
        %v2234 = vsub.f32 1.0, %v2233
        %v2235 = vmul.f32 %v2232, %v2234
        %v2236 = vadd.f32 %v2232, %v2235
        %vm2237 = vweird.f32 %v2032
        %vm2238 = vweird.f32 %v2232
        %vm2239 = vmor %vm2237, %vm2238
        %v2240 = vsel %vm2239, %v2232, %v2236
        %v2241 = vand.u32 2147483647, %v2032
        %vm2242 = vcmp.eq.f32.partialorder %v2241, 8.507059e+37
        %v2243 = vand.u32 %v2032, 2147483648
        %v2244 = vor.u32 1.1754944e-38, %v2243
        %v2245 = vsel %vm2242, %v2244, %v2240
        %v2246 = vmul.f32 1.0, %v2245
        %v2247 = vrcp.pop %v2033
        %v2248 = vmul.f32 %v2033, %v2247
        %v2249 = vsub.f32 1.0, %v2248
        %v2250 = vmul.f32 %v2247, %v2249
        %v2251 = vadd.f32 %v2247, %v2250
        %vm2252 = vweird.f32 %v2033
        %vm2253 = vweird.f32 %v2247
        %vm2254 = vmor %vm2252, %vm2253
        %v2255 = vsel %vm2254, %v2247, %v2251
        %v2256 = vand.u32 2147483647, %v2033
        %vm2257 = vcmp.eq.f32.partialorder %v2256, 8.507059e+37
        %v2258 = vand.u32 %v2033, 2147483648
        %v2259 = vor.u32 1.1754944e-38, %v2258
        %v2260 = vsel %vm2257, %v2259, %v2255
        %v2261 = vmul.f32 1.0, %v2260
        %v2262 = vrcp.pop %v2034
        %v2263 = vmul.f32 %v2034, %v2262
        %v2264 = vsub.f32 1.0, %v2263
        %v2265 = vmul.f32 %v2262, %v2264
        %v2266 = vadd.f32 %v2262, %v2265
        %vm2267 = vweird.f32 %v2034
        %vm2268 = vweird.f32 %v2262
        %vm2269 = vmor %vm2267, %vm2268
        %v2270 = vsel %vm2269, %v2262, %v2266
        %v2271 = vand.u32 2147483647, %v2034
        %vm2272 = vcmp.eq.f32.partialorder %v2271, 8.507059e+37
        %v2273 = vand.u32 %v2034, 2147483648
        %v2274 = vor.u32 1.1754944e-38, %v2273
        %v2275 = vsel %vm2272, %v2274, %v2270
        %v2276 = vmul.f32 1.0, %v2275
        %v2277 = vrcp.pop %v2035
        %v2278 = vmul.f32 %v2035, %v2277
        %v2279 = vsub.f32 1.0, %v2278
        %v2280 = vmul.f32 %v2277, %v2279
        %v2281 = vadd.f32 %v2277, %v2280
        %vm2282 = vweird.f32 %v2035
        %vm2283 = vweird.f32 %v2277
        %vm2284 = vmor %vm2282, %vm2283
        %v2285 = vsel %vm2284, %v2277, %v2281
        %v2286 = vand.u32 2147483647, %v2035
        %vm2287 = vcmp.eq.f32.partialorder %v2286, 8.507059e+37
        %v2288 = vand.u32 %v2035, 2147483648
        %v2289 = vor.u32 1.1754944e-38, %v2288
        %v2290 = vsel %vm2287, %v2289, %v2285
        %v2291 = vmul.f32 1.0, %v2290
        %v2292 = vrcp.pop %v2036
        %v2293 = vmul.f32 %v2036, %v2292
        %v2294 = vsub.f32 1.0, %v2293
        %v2295 = vmul.f32 %v2292, %v2294
        %v2296 = vadd.f32 %v2292, %v2295
        %vm2297 = vweird.f32 %v2036
        %vm2298 = vweird.f32 %v2292
        %vm2299 = vmor %vm2297, %vm2298
        %v2300 = vsel %vm2299, %v2292, %v2296
        %v2301 = vand.u32 2147483647, %v2036
        %vm2302 = vcmp.eq.f32.partialorder %v2301, 8.507059e+37
        %v2303 = vand.u32 %v2036, 2147483648
        %v2304 = vor.u32 1.1754944e-38, %v2303
        %v2305 = vsel %vm2302, %v2304, %v2300
        %v2306 = vmul.f32 1.0, %v2305
        %v2307 = vrcp.pop %v2037
        %v2308 = vmul.f32 %v2037, %v2307
        %v2309 = vsub.f32 1.0, %v2308
        %v2310 = vmul.f32 %v2307, %v2309
        %v2311 = vadd.f32 %v2307, %v2310
        %vm2312 = vweird.f32 %v2037
        %vm2313 = vweird.f32 %v2307
        %vm2314 = vmor %vm2312, %vm2313
        %v2315 = vsel %vm2314, %v2307, %v2311
        %v2316 = vand.u32 2147483647, %v2037
        %vm2317 = vcmp.eq.f32.partialorder %v2316, 8.507059e+37
        %v2318 = vand.u32 %v2037, 2147483648
        %v2319 = vor.u32 1.1754944e-38, %v2318
        %v2320 = vsel %vm2317, %v2319, %v2315
        %v2321 = vmul.f32 1.0, %v2320
        %v2322 = vrcp.pop %v2038
        %v2323 = vmul.f32 %v2038, %v2322
        %v2324 = vsub.f32 1.0, %v2323
        %v2325 = vmul.f32 %v2322, %v2324
        %v2326 = vadd.f32 %v2322, %v2325
        %vm2327 = vweird.f32 %v2038
        %vm2328 = vweird.f32 %v2322
        %vm2329 = vmor %vm2327, %vm2328
        %v2330 = vsel %vm2329, %v2322, %v2326
        %v2331 = vand.u32 2147483647, %v2038
        %vm2332 = vcmp.eq.f32.partialorder %v2331, 8.507059e+37
        %v2333 = vand.u32 %v2038, 2147483648
        %v2334 = vor.u32 1.1754944e-38, %v2333
        %v2335 = vsel %vm2332, %v2334, %v2330
        %v2336 = vmul.f32 1.0, %v2335
        %v2337 = vrcp.pop %v2039
        %v2338 = vmul.f32 %v2039, %v2337
        %v2339 = vsub.f32 1.0, %v2338
        %v2340 = vmul.f32 %v2337, %v2339
        %v2341 = vadd.f32 %v2337, %v2340
        %vm2342 = vweird.f32 %v2039
        %vm2343 = vweird.f32 %v2337
        %vm2344 = vmor %vm2342, %vm2343
        %v2345 = vsel %vm2344, %v2337, %v2341
        %v2346 = vand.u32 2147483647, %v2039
        %vm2347 = vcmp.eq.f32.partialorder %v2346, 8.507059e+37
        %v2348 = vand.u32 %v2039, 2147483648
        %v2349 = vor.u32 1.1754944e-38, %v2348
        %v2350 = vsel %vm2347, %v2349, %v2345
        %v2351 = vmul.f32 1.0, %v2350
        %v2352 = vrcp.pop %v2040
        %v2353 = vmul.f32 %v2040, %v2352
        %v2354 = vsub.f32 1.0, %v2353
        %v2355 = vmul.f32 %v2352, %v2354
        %v2356 = vadd.f32 %v2352, %v2355
        %vm2357 = vweird.f32 %v2040
        %vm2358 = vweird.f32 %v2352
        %vm2359 = vmor %vm2357, %vm2358
        %v2360 = vsel %vm2359, %v2352, %v2356
        %v2361 = vand.u32 2147483647, %v2040
        %vm2362 = vcmp.eq.f32.partialorder %v2361, 8.507059e+37
        %v2363 = vand.u32 %v2040, 2147483648
        %v2364 = vor.u32 1.1754944e-38, %v2363
        %v2365 = vsel %vm2362, %v2364, %v2360
        %v2366 = vmul.f32 1.0, %v2365
        %v2367 = vrcp.pop %v2041
        %v2368 = vmul.f32 %v2041, %v2367
        %v2369 = vsub.f32 1.0, %v2368
        %v2370 = vmul.f32 %v2367, %v2369
        %v2371 = vadd.f32 %v2367, %v2370
        %vm2372 = vweird.f32 %v2041
        %vm2373 = vweird.f32 %v2367
        %vm2374 = vmor %vm2372, %vm2373
        %v2375 = vsel %vm2374, %v2367, %v2371
        %v2376 = vand.u32 2147483647, %v2041
        %vm2377 = vcmp.eq.f32.partialorder %v2376, 8.507059e+37
        %v2378 = vand.u32 %v2041, 2147483648
        %v2379 = vor.u32 1.1754944e-38, %v2378
        %v2380 = vsel %vm2377, %v2379, %v2375
        %v2381 = vmul.f32 1.0, %v2380
        %v2382 = vrcp.pop %v2042
        %v2383 = vmul.f32 %v2042, %v2382
        %v2384 = vsub.f32 1.0, %v2383
        %v2385 = vmul.f32 %v2382, %v2384
        %v2386 = vadd.f32 %v2382, %v2385
        %vm2387 = vweird.f32 %v2042
        %vm2388 = vweird.f32 %v2382
        %vm2389 = vmor %vm2387, %vm2388
        %v2390 = vsel %vm2389, %v2382, %v2386
        %v2391 = vand.u32 2147483647, %v2042
        %vm2392 = vcmp.eq.f32.partialorder %v2391, 8.507059e+37
        %v2393 = vand.u32 %v2042, 2147483648
        %v2394 = vor.u32 1.1754944e-38, %v2393
        %v2395 = vsel %vm2392, %v2394, %v2390
        %v2396 = vmul.f32 1.0, %v2395
        %v2397 = vrcp.pop %v2043
        %v2398 = vmul.f32 %v2043, %v2397
        %v2399 = vsub.f32 1.0, %v2398
        %v2400 = vmul.f32 %v2397, %v2399
        %v2401 = vadd.f32 %v2397, %v2400
        %vm2402 = vweird.f32 %v2043
        %vm2403 = vweird.f32 %v2397
        %vm2404 = vmor %vm2402, %vm2403
        %v2405 = vsel %vm2404, %v2397, %v2401
        %v2406 = vand.u32 2147483647, %v2043
        %vm2407 = vcmp.eq.f32.partialorder %v2406, 8.507059e+37
        %v2408 = vand.u32 %v2043, 2147483648
        %v2409 = vor.u32 1.1754944e-38, %v2408
        %v2410 = vsel %vm2407, %v2409, %v2405
        %v2411 = vmul.f32 1.0, %v2410
        %v2412 = vrcp.pop %v2044
        %v2413 = vmul.f32 %v2044, %v2412
        %v2414 = vsub.f32 1.0, %v2413
        %v2415 = vmul.f32 %v2412, %v2414
        %v2416 = vadd.f32 %v2412, %v2415
        %vm2417 = vweird.f32 %v2044
        %vm2418 = vweird.f32 %v2412
        %vm2419 = vmor %vm2417, %vm2418
        %v2420 = vsel %vm2419, %v2412, %v2416
        %v2421 = vand.u32 2147483647, %v2044
        %vm2422 = vcmp.eq.f32.partialorder %v2421, 8.507059e+37
        %v2423 = vand.u32 %v2044, 2147483648
        %v2424 = vor.u32 1.1754944e-38, %v2423
        %v2425 = vsel %vm2422, %v2424, %v2420
        %v2426 = vmul.f32 1.0, %v2425
        %v2427 = vrcp.pop %v2045
        %v2428 = vmul.f32 %v2045, %v2427
        %v2429 = vsub.f32 1.0, %v2428
        %v2430 = vmul.f32 %v2427, %v2429
        %v2431 = vadd.f32 %v2427, %v2430
        %vm2432 = vweird.f32 %v2045
        %vm2433 = vweird.f32 %v2427
        %vm2434 = vmor %vm2432, %vm2433
        %v2435 = vsel %vm2434, %v2427, %v2431
        %v2436 = vand.u32 2147483647, %v2045
        %vm2437 = vcmp.eq.f32.partialorder %v2436, 8.507059e+37
        %v2438 = vand.u32 %v2045, 2147483648
        %v2439 = vor.u32 1.1754944e-38, %v2438
        %v2440 = vsel %vm2437, %v2439, %v2435
        %v2441 = vmul.f32 1.0, %v2440
        %v2442 = vrcp.pop %v2046
        %v2443 = vmul.f32 %v2046, %v2442
        %v2444 = vsub.f32 1.0, %v2443
        %v2445 = vmul.f32 %v2442, %v2444
        %v2446 = vadd.f32 %v2442, %v2445
        %vm2447 = vweird.f32 %v2046
        %vm2448 = vweird.f32 %v2442
        %vm2449 = vmor %vm2447, %vm2448
        %v2450 = vsel %vm2449, %v2442, %v2446
        %v2451 = vand.u32 2147483647, %v2046
        %vm2452 = vcmp.eq.f32.partialorder %v2451, 8.507059e+37
        %v2453 = vand.u32 %v2046, 2147483648
        %v2454 = vor.u32 1.1754944e-38, %v2453
        %v2455 = vsel %vm2452, %v2454, %v2450
        %v2456 = vmul.f32 1.0, %v2455
        %v2457 = vrcp.pop %v2047
        %v2458 = vmul.f32 %v2047, %v2457
        %v2459 = vsub.f32 1.0, %v2458
        %v2460 = vmul.f32 %v2457, %v2459
        %v2461 = vadd.f32 %v2457, %v2460
        %vm2462 = vweird.f32 %v2047
        %vm2463 = vweird.f32 %v2457
        %vm2464 = vmor %vm2462, %vm2463
        %v2465 = vsel %vm2464, %v2457, %v2461
        %v2466 = vand.u32 2147483647, %v2047
        %vm2467 = vcmp.eq.f32.partialorder %v2466, 8.507059e+37
        %v2468 = vand.u32 %v2047, 2147483648
        %v2469 = vor.u32 1.1754944e-38, %v2468
        %v2470 = vsel %vm2467, %v2469, %v2465
        %v2471 = vmul.f32 1.0, %v2470
        %v2472 = vrcp.pop %v2048
        %v2473 = vmul.f32 %v2048, %v2472
        %v2474 = vsub.f32 1.0, %v2473
        %v2475 = vmul.f32 %v2472, %v2474
        %v2476 = vadd.f32 %v2472, %v2475
        %vm2477 = vweird.f32 %v2048
        %vm2478 = vweird.f32 %v2472
        %vm2479 = vmor %vm2477, %vm2478
        %v2480 = vsel %vm2479, %v2472, %v2476
        %v2481 = vand.u32 2147483647, %v2048
        %vm2482 = vcmp.eq.f32.partialorder %v2481, 8.507059e+37
        %v2483 = vand.u32 %v2048, 2147483648
        %v2484 = vor.u32 1.1754944e-38, %v2483
        %v2485 = vsel %vm2482, %v2484, %v2480
        %v2486 = vmul.f32 1.0, %v2485
        %v2487 = vrcp.pop %v2049
        %v2488 = vmul.f32 %v2049, %v2487
        %v2489 = vsub.f32 1.0, %v2488
        %v2490 = vmul.f32 %v2487, %v2489
        %v2491 = vadd.f32 %v2487, %v2490
        %vm2492 = vweird.f32 %v2049
        %vm2493 = vweird.f32 %v2487
        %vm2494 = vmor %vm2492, %vm2493
        %v2495 = vsel %vm2494, %v2487, %v2491
        %v2496 = vand.u32 2147483647, %v2049
        %vm2497 = vcmp.eq.f32.partialorder %v2496, 8.507059e+37
        %v2498 = vand.u32 %v2049, 2147483648
        %v2499 = vor.u32 1.1754944e-38, %v2498
        %v2500 = vsel %vm2497, %v2499, %v2495
        %v2501 = vmul.f32 1.0, %v2500
        %v2502 = vrcp.pop %v2050
        %v2503 = vmul.f32 %v2050, %v2502
        %v2504 = vsub.f32 1.0, %v2503
        %v2505 = vmul.f32 %v2502, %v2504
        %v2506 = vadd.f32 %v2502, %v2505
        %vm2507 = vweird.f32 %v2050
        %vm2508 = vweird.f32 %v2502
        %vm2509 = vmor %vm2507, %vm2508
        %v2510 = vsel %vm2509, %v2502, %v2506
        %v2511 = vand.u32 2147483647, %v2050
        %vm2512 = vcmp.eq.f32.partialorder %v2511, 8.507059e+37
        %v2513 = vand.u32 %v2050, 2147483648
        %v2514 = vor.u32 1.1754944e-38, %v2513
        %v2515 = vsel %vm2512, %v2514, %v2510
        %v2516 = vmul.f32 1.0, %v2515
        %v2517 = vrcp.pop %v2051
        %v2518 = vmul.f32 %v2051, %v2517
        %v2519 = vsub.f32 1.0, %v2518
        %v2520 = vmul.f32 %v2517, %v2519
        %v2521 = vadd.f32 %v2517, %v2520
        %vm2522 = vweird.f32 %v2051
        %vm2523 = vweird.f32 %v2517
        %vm2524 = vmor %vm2522, %vm2523
        %v2525 = vsel %vm2524, %v2517, %v2521
        %v2526 = vand.u32 2147483647, %v2051
        %vm2527 = vcmp.eq.f32.partialorder %v2526, 8.507059e+37
        %v2528 = vand.u32 %v2051, 2147483648
        %v2529 = vor.u32 1.1754944e-38, %v2528
        %v2530 = vsel %vm2527, %v2529, %v2525
        %v2531 = vmul.f32 1.0, %v2530
        %v2532 = vmul.f32 %v1845, %v2066
        %v2533 = vmul.f32 %v1847, %v2081
        %v2534 = vmul.f32 %v1850, %v2096
        %v2535 = vmul.f32 %v1852, %v2111
        %v2536 = vmul.f32 %v1855, %v2126
        %v2537 = vmul.f32 %v1857, %v2141
        %v2538 = vmul.f32 %v1860, %v2156
        %v2539 = vmul.f32 %v1862, %v2171
        %v2540 = vmul.f32 %v1865, %v2186
        %v2541 = vmul.f32 %v1867, %v2201
        %v2542 = vmul.f32 %v1870, %v2216
        %v2543 = vmul.f32 %v1872, %v2231
        %v2544 = vmul.f32 %v1875, %v2246
        %v2545 = vmul.f32 %v1877, %v2261
        %v2546 = vmul.f32 %v1880, %v2276
        %v2547 = vmul.f32 %v1882, %v2291
        %v2548 = vmul.f32 %v1885, %v2306
        %v2549 = vmul.f32 %v1887, %v2321
        %v2550 = vmul.f32 %v1890, %v2336
        %v2551 = vmul.f32 %v1892, %v2351
        %v2552 = vmul.f32 %v1895, %v2366
        %v2553 = vmul.f32 %v1897, %v2381
        %v2554 = vmul.f32 %v1900, %v2396
        %v2555 = vmul.f32 %v1902, %v2411
        %v2556 = vmul.f32 %v1905, %v2426
        %v2557 = vmul.f32 %v1907, %v2441
        %v2558 = vmul.f32 %v1910, %v2456
        %v2559 = vmul.f32 %v1912, %v2471
        %v2560 = vmul.f32 %v1915, %v2486
        %v2561 = vmul.f32 %v1917, %v2501
        %v2562 = vmul.f32 %v1920, %v2516
        %v2563 = vmul.f32 %v1922, %v2531
        %v2564 = vpack.c.bf16 %v2533, %v2532
        %v2565 = vpack.c.bf16 %v2535, %v2534
        %v2566 = vpack.c.bf16 %v2537, %v2536
        %v2567 = vpack.c.bf16 %v2539, %v2538
        %v2568 = vpack.c.bf16 %v2541, %v2540
        %v2569 = vpack.c.bf16 %v2543, %v2542
        %v2570 = vpack.c.bf16 %v2545, %v2544
        %v2571 = vpack.c.bf16 %v2547, %v2546
        %v2572 = vpack.c.bf16 %v2549, %v2548
        %v2573 = vpack.c.bf16 %v2551, %v2550
        %v2574 = vpack.c.bf16 %v2553, %v2552
        %v2575 = vpack.c.bf16 %v2555, %v2554
        %v2576 = vpack.c.bf16 %v2557, %v2556
        %v2577 = vpack.c.bf16 %v2559, %v2558
        %v2578 = vpack.c.bf16 %v2561, %v2560
        %v2579 = vpack.c.bf16 %v2563, %v2562
        %s2580 = scalar_lea.vmem %s1, 128
        %v2581 = vld [vmem:[%s2580] sm:$0xf]
        %v2582 = vld [vmem:[%s2580 + $0x4] sm:$0xf]
        %v2583 = vld [vmem:[%s2580 + $0x8] sm:$0xf]
        %v2584 = vld [vmem:[%s2580 + $0xc] sm:$0xf]
        %v2585 = vld [vmem:[%s2580 + $0x10] sm:$0xf]
        %v2586 = vld [vmem:[%s2580 + $0x14] sm:$0xf]
        %v2587 = vld [vmem:[%s2580 + $0x18] sm:$0xf]
        %v2588 = vld [vmem:[%s2580 + $0x1c] sm:$0xf]
        %v2589 = vld [vmem:[%s2580 + $0x20] sm:$0xf]
        %v2590 = vld [vmem:[%s2580 + $0x24] sm:$0xf]
        %v2591 = vld [vmem:[%s2580 + $0x28] sm:$0xf]
        %v2592 = vld [vmem:[%s2580 + $0x2c] sm:$0xf]
        %v2593 = vld [vmem:[%s2580 + $0x30] sm:$0xf]
        %v2594 = vld [vmem:[%s2580 + $0x34] sm:$0xf]
        %v2595 = vld [vmem:[%s2580 + $0x38] sm:$0xf]
        %v2596 = vld [vmem:[%s2580 + $0x3c] sm:$0xf]
        %v2613 = vunpack.c.l.b16 %v2581
        %v2614 = vunpack.c.l.b16 %v2582
        %v2615 = vunpack.c.l.b16 %v2583
        %v2616 = vunpack.c.l.b16 %v2584
        %v2617 = vunpack.c.l.b16 %v2585
        %v2618 = vunpack.c.l.b16 %v2586
        %v2619 = vunpack.c.l.b16 %v2587
        %v2620 = vunpack.c.l.b16 %v2588
        %v2621 = vunpack.c.l.b16 %v2589
        %v2622 = vunpack.c.l.b16 %v2590
        %v2623 = vunpack.c.l.b16 %v2591
        %v2624 = vunpack.c.l.b16 %v2592
        %v2625 = vunpack.c.l.b16 %v2593
        %v2626 = vunpack.c.l.b16 %v2594
        %v2627 = vunpack.c.l.b16 %v2595
        %v2628 = vunpack.c.l.b16 %v2596
        %v2629 = vpack.c.b16 %v2614, %v2613
        %v2630 = vpack.c.b16 %v2616, %v2615
        %v2631 = vpack.c.b16 %v2618, %v2617
        %v2632 = vpack.c.b16 %v2620, %v2619
        %v2633 = vpack.c.b16 %v2622, %v2621
        %v2634 = vpack.c.b16 %v2624, %v2623
        %v2635 = vpack.c.b16 %v2626, %v2625
        %v2636 = vpack.c.b16 %v2628, %v2627
        %2645 = vmatpush.bf16.msra.mxu0 %v2636
        %2646 = vmatpush.bf16.msra.mxu0 %v2635
        %2647 = vmatpush.bf16.msra.mxu0 %v2634
        %2648 = vmatpush.bf16.msra.mxu0 %v2633
        %2649 = vmatpush.bf16.msra.mxu0 %v2632
        %2650 = vmatpush.bf16.msra.mxu0 %v2631
        %2651 = vmatpush.bf16.msra.mxu0 %v2630
        %2652 = vmatpush.bf16.msra.mxu0 %v2629
        %2653 = vmatmul.bf16.gmra.mxu0 %v2564
        %v2654 = vpop.f32.mrf.mxu0
        %v2655 = vadd.f32 0.0, %v2654
        %v2656 = vpop.f32.mrf.mxu0
        %v2657 = vadd.f32 0.0, %v2656
        %2658 = vmatmul.bf16.gmra.mxu0 %v2565
        %v2659 = vpop.f32.mrf.mxu0
        %v2660 = vadd.f32 0.0, %v2659
        %v2661 = vpop.f32.mrf.mxu0
        %v2662 = vadd.f32 0.0, %v2661
        %2663 = vmatmul.bf16.gmra.mxu0 %v2566
        %v2664 = vpop.f32.mrf.mxu0
        %v2665 = vadd.f32 0.0, %v2664
        %v2666 = vpop.f32.mrf.mxu0
        %v2667 = vadd.f32 0.0, %v2666
        %2668 = vmatmul.bf16.gmra.mxu0 %v2567
        %v2669 = vpop.f32.mrf.mxu0
        %v2670 = vadd.f32 0.0, %v2669
        %v2671 = vpop.f32.mrf.mxu0
        %v2672 = vadd.f32 0.0, %v2671
        %2673 = vmatmul.bf16.gmra.mxu0 %v2568
        %v2674 = vpop.f32.mrf.mxu0
        %v2675 = vadd.f32 0.0, %v2674
        %v2676 = vpop.f32.mrf.mxu0
        %v2677 = vadd.f32 0.0, %v2676
        %2678 = vmatmul.bf16.gmra.mxu0 %v2569
        %v2679 = vpop.f32.mrf.mxu0
        %v2680 = vadd.f32 0.0, %v2679
        %v2681 = vpop.f32.mrf.mxu0
        %v2682 = vadd.f32 0.0, %v2681
        %2683 = vmatmul.bf16.gmra.mxu0 %v2570
        %v2684 = vpop.f32.mrf.mxu0
        %v2685 = vadd.f32 0.0, %v2684
        %v2686 = vpop.f32.mrf.mxu0
        %v2687 = vadd.f32 0.0, %v2686
        %2688 = vmatmul.bf16.gmra.mxu0 %v2571
        %v2689 = vpop.f32.mrf.mxu0
        %v2690 = vadd.f32 0.0, %v2689
        %v2691 = vpop.f32.mrf.mxu0
        %v2692 = vadd.f32 0.0, %v2691
        %2693 = vmatmul.bf16.gmra.mxu0 %v2572
        %v2694 = vpop.f32.mrf.mxu0
        %v2695 = vadd.f32 0.0, %v2694
        %v2696 = vpop.f32.mrf.mxu0
        %v2697 = vadd.f32 0.0, %v2696
        %2698 = vmatmul.bf16.gmra.mxu0 %v2573
        %v2699 = vpop.f32.mrf.mxu0
        %v2700 = vadd.f32 0.0, %v2699
        %v2701 = vpop.f32.mrf.mxu0
        %v2702 = vadd.f32 0.0, %v2701
        %2703 = vmatmul.bf16.gmra.mxu0 %v2574
        %v2704 = vpop.f32.mrf.mxu0
        %v2705 = vadd.f32 0.0, %v2704
        %v2706 = vpop.f32.mrf.mxu0
        %v2707 = vadd.f32 0.0, %v2706
        %2708 = vmatmul.bf16.gmra.mxu0 %v2575
        %v2709 = vpop.f32.mrf.mxu0
        %v2710 = vadd.f32 0.0, %v2709
        %v2711 = vpop.f32.mrf.mxu0
        %v2712 = vadd.f32 0.0, %v2711
        %2713 = vmatmul.bf16.gmra.mxu0 %v2576
        %v2714 = vpop.f32.mrf.mxu0
        %v2715 = vadd.f32 0.0, %v2714
        %v2716 = vpop.f32.mrf.mxu0
        %v2717 = vadd.f32 0.0, %v2716
        %2718 = vmatmul.bf16.gmra.mxu0 %v2577
        %v2719 = vpop.f32.mrf.mxu0
        %v2720 = vadd.f32 0.0, %v2719
        %v2721 = vpop.f32.mrf.mxu0
        %v2722 = vadd.f32 0.0, %v2721
        %2723 = vmatmul.bf16.gmra.mxu0 %v2578
        %v2724 = vpop.f32.mrf.mxu0
        %v2725 = vadd.f32 0.0, %v2724
        %v2726 = vpop.f32.mrf.mxu0
        %v2727 = vadd.f32 0.0, %v2726
        %2728 = vmatmul.bf16.gmra.mxu0 %v2579
        %v2729 = vpop.f32.mrf.mxu0
        %v2730 = vadd.f32 0.0, %v2729
        %v2731 = vpop.f32.mrf.mxu0
        %v2732 = vadd.f32 0.0, %v2731
        %2733 = vdwg.mxu0
        %v2734 = vadd.f32 %v980, %v2655
        %v2735 = vadd.f32 %v981, %v2657
        %v2736 = vadd.f32 %v982, %v2660
        %v2737 = vadd.f32 %v983, %v2662
        %v2738 = vadd.f32 %v984, %v2665
        %v2739 = vadd.f32 %v985, %v2667
        %v2740 = vadd.f32 %v986, %v2670
        %v2741 = vadd.f32 %v987, %v2672
        %v2742 = vadd.f32 %v988, %v2675
        %v2743 = vadd.f32 %v989, %v2677
        %v2744 = vadd.f32 %v990, %v2680
        %v2745 = vadd.f32 %v991, %v2682
        %v2746 = vadd.f32 %v992, %v2685
        %v2747 = vadd.f32 %v993, %v2687
        %v2748 = vadd.f32 %v994, %v2690
        %v2749 = vadd.f32 %v995, %v2692
        %v2750 = vadd.f32 %v996, %v2695
        %v2751 = vadd.f32 %v997, %v2697
        %v2752 = vadd.f32 %v998, %v2700
        %v2753 = vadd.f32 %v999, %v2702
        %v2754 = vadd.f32 %v1000, %v2705
        %v2755 = vadd.f32 %v1001, %v2707
        %v2756 = vadd.f32 %v1002, %v2710
        %v2757 = vadd.f32 %v1003, %v2712
        %v2758 = vadd.f32 %v1004, %v2715
        %v2759 = vadd.f32 %v1005, %v2717
        %v2760 = vadd.f32 %v1006, %v2720
        %v2761 = vadd.f32 %v1007, %v2722
        %v2762 = vadd.f32 %v1008, %v2725
        %v2763 = vadd.f32 %v1009, %v2727
        %v2764 = vadd.f32 %v1010, %v2730
        %v2765 = vadd.f32 %v1011, %v2732
        %v2766 = vld [vmem:[%s2 + $0x2] sm:$0x1]
        %v2767 = vld [vmem:[%s2 + $0x3] sm:$0x1]
        %2768 = vadd.xlane.f32.xlu0 %v2734
        %v2769 = vpop.xlane.xlu0 %2768
        %2770 = vadd.xlane.f32.xlu0 %v2735
        %v2771 = vpop.xlane.xlu0 %2770
        %2772 = vadd.xlane.f32.xlu0 %v2736
        %v2773 = vpop.xlane.xlu0 %2772
        %2774 = vadd.xlane.f32.xlu0 %v2737
        %v2775 = vpop.xlane.xlu0 %2774
        %2776 = vadd.xlane.f32.xlu0 %v2738
        %v2777 = vpop.xlane.xlu0 %2776
        %2778 = vadd.xlane.f32.xlu0 %v2739
        %v2779 = vpop.xlane.xlu0 %2778
        %2780 = vadd.xlane.f32.xlu0 %v2740
        %v2781 = vpop.xlane.xlu0 %2780
        %2782 = vadd.xlane.f32.xlu0 %v2741
        %v2783 = vpop.xlane.xlu0 %2782
        %2784 = vadd.xlane.f32.xlu0 %v2742
        %v2785 = vpop.xlane.xlu0 %2784
        %2786 = vadd.xlane.f32.xlu0 %v2743
        %v2787 = vpop.xlane.xlu0 %2786
        %2788 = vadd.xlane.f32.xlu0 %v2744
        %v2789 = vpop.xlane.xlu0 %2788
        %2790 = vadd.xlane.f32.xlu0 %v2745
        %v2791 = vpop.xlane.xlu0 %2790
        %2792 = vadd.xlane.f32.xlu0 %v2746
        %v2793 = vpop.xlane.xlu0 %2792
        %2794 = vadd.xlane.f32.xlu0 %v2747
        %v2795 = vpop.xlane.xlu0 %2794
        %2796 = vadd.xlane.f32.xlu0 %v2748
        %v2797 = vpop.xlane.xlu0 %2796
        %2798 = vadd.xlane.f32.xlu0 %v2749
        %v2799 = vpop.xlane.xlu0 %2798
        %2800 = vadd.xlane.f32.xlu0 %v2750
        %v2801 = vpop.xlane.xlu0 %2800
        %2802 = vadd.xlane.f32.xlu0 %v2751
        %v2803 = vpop.xlane.xlu0 %2802
        %2804 = vadd.xlane.f32.xlu0 %v2752
        %v2805 = vpop.xlane.xlu0 %2804
        %2806 = vadd.xlane.f32.xlu0 %v2753
        %v2807 = vpop.xlane.xlu0 %2806
        %2808 = vadd.xlane.f32.xlu0 %v2754
        %v2809 = vpop.xlane.xlu0 %2808
        %2810 = vadd.xlane.f32.xlu0 %v2755
        %v2811 = vpop.xlane.xlu0 %2810
        %2812 = vadd.xlane.f32.xlu0 %v2756
        %v2813 = vpop.xlane.xlu0 %2812
        %2814 = vadd.xlane.f32.xlu0 %v2757
        %v2815 = vpop.xlane.xlu0 %2814
        %2816 = vadd.xlane.f32.xlu0 %v2758
        %v2817 = vpop.xlane.xlu0 %2816
        %2818 = vadd.xlane.f32.xlu0 %v2759
        %v2819 = vpop.xlane.xlu0 %2818
        %2820 = vadd.xlane.f32.xlu0 %v2760
        %v2821 = vpop.xlane.xlu0 %2820
        %2822 = vadd.xlane.f32.xlu0 %v2761
        %v2823 = vpop.xlane.xlu0 %2822
        %2824 = vadd.xlane.f32.xlu0 %v2762
        %v2825 = vpop.xlane.xlu0 %2824
        %2826 = vadd.xlane.f32.xlu0 %v2763
        %v2827 = vpop.xlane.xlu0 %2826
        %2828 = vadd.xlane.f32.xlu0 %v2764
        %v2829 = vpop.xlane.xlu0 %2828
        %2830 = vadd.xlane.f32.xlu0 %v2765
        %v2831 = vpop.xlane.xlu0 %2830
        %v2832 = vmul.f32 %v2769, 0.03125
        %v2833 = vmul.f32 %v2771, 0.03125
        %v2834 = vmul.f32 %v2773, 0.03125
        %v2835 = vmul.f32 %v2775, 0.03125
        %v2836 = vmul.f32 %v2777, 0.03125
        %v2837 = vmul.f32 %v2779, 0.03125
        %v2838 = vmul.f32 %v2781, 0.03125
        %v2839 = vmul.f32 %v2783, 0.03125
        %v2840 = vmul.f32 %v2785, 0.03125
        %v2841 = vmul.f32 %v2787, 0.03125
        %v2842 = vmul.f32 %v2789, 0.03125
        %v2843 = vmul.f32 %v2791, 0.03125
        %v2844 = vmul.f32 %v2793, 0.03125
        %v2845 = vmul.f32 %v2795, 0.03125
        %v2846 = vmul.f32 %v2797, 0.03125
        %v2847 = vmul.f32 %v2799, 0.03125
        %v2848 = vmul.f32 %v2801, 0.03125
        %v2849 = vmul.f32 %v2803, 0.03125
        %v2850 = vmul.f32 %v2805, 0.03125
        %v2851 = vmul.f32 %v2807, 0.03125
        %v2852 = vmul.f32 %v2809, 0.03125
        %v2853 = vmul.f32 %v2811, 0.03125
        %v2854 = vmul.f32 %v2813, 0.03125
        %v2855 = vmul.f32 %v2815, 0.03125
        %v2856 = vmul.f32 %v2817, 0.03125
        %v2857 = vmul.f32 %v2819, 0.03125
        %v2858 = vmul.f32 %v2821, 0.03125
        %v2859 = vmul.f32 %v2823, 0.03125
        %v2860 = vmul.f32 %v2825, 0.03125
        %v2861 = vmul.f32 %v2827, 0.03125
        %v2862 = vmul.f32 %v2829, 0.03125
        %v2863 = vmul.f32 %v2831, 0.03125
        %v2864 = vsub.f32 %v2734, %v2832
        %v2865 = vsub.f32 %v2735, %v2833
        %v2866 = vsub.f32 %v2736, %v2834
        %v2867 = vsub.f32 %v2737, %v2835
        %v2868 = vsub.f32 %v2738, %v2836
        %v2869 = vsub.f32 %v2739, %v2837
        %v2870 = vsub.f32 %v2740, %v2838
        %v2871 = vsub.f32 %v2741, %v2839
        %v2872 = vsub.f32 %v2742, %v2840
        %v2873 = vsub.f32 %v2743, %v2841
        %v2874 = vsub.f32 %v2744, %v2842
        %v2875 = vsub.f32 %v2745, %v2843
        %v2876 = vsub.f32 %v2746, %v2844
        %v2877 = vsub.f32 %v2747, %v2845
        %v2878 = vsub.f32 %v2748, %v2846
        %v2879 = vsub.f32 %v2749, %v2847
        %v2880 = vsub.f32 %v2750, %v2848
        %v2881 = vsub.f32 %v2751, %v2849
        %v2882 = vsub.f32 %v2752, %v2850
        %v2883 = vsub.f32 %v2753, %v2851
        %v2884 = vsub.f32 %v2754, %v2852
        %v2885 = vsub.f32 %v2755, %v2853
        %v2886 = vsub.f32 %v2756, %v2854
        %v2887 = vsub.f32 %v2757, %v2855
        %v2888 = vsub.f32 %v2758, %v2856
        %v2889 = vsub.f32 %v2759, %v2857
        %v2890 = vsub.f32 %v2760, %v2858
        %v2891 = vsub.f32 %v2761, %v2859
        %v2892 = vsub.f32 %v2762, %v2860
        %v2893 = vsub.f32 %v2763, %v2861
        %v2894 = vsub.f32 %v2764, %v2862
        %v2895 = vsub.f32 %v2765, %v2863
        %v2896 = vsel %vm1143, %v2864, 0.0
        %v2897 = vsel %vm1143, %v2865, 0.0
        %v2898 = vsel %vm1143, %v2866, 0.0
        %v2899 = vsel %vm1143, %v2867, 0.0
        %v2900 = vsel %vm1143, %v2868, 0.0
        %v2901 = vsel %vm1143, %v2869, 0.0
        %v2902 = vsel %vm1143, %v2870, 0.0
        %v2903 = vsel %vm1143, %v2871, 0.0
        %v2904 = vsel %vm1143, %v2872, 0.0
        %v2905 = vsel %vm1143, %v2873, 0.0
        %v2906 = vsel %vm1143, %v2874, 0.0
        %v2907 = vsel %vm1143, %v2875, 0.0
        %v2908 = vsel %vm1143, %v2876, 0.0
        %v2909 = vsel %vm1143, %v2877, 0.0
        %v2910 = vsel %vm1143, %v2878, 0.0
        %v2911 = vsel %vm1143, %v2879, 0.0
        %v2912 = vsel %vm1143, %v2880, 0.0
        %v2913 = vsel %vm1143, %v2881, 0.0
        %v2914 = vsel %vm1143, %v2882, 0.0
        %v2915 = vsel %vm1143, %v2883, 0.0
        %v2916 = vsel %vm1143, %v2884, 0.0
        %v2917 = vsel %vm1143, %v2885, 0.0
        %v2918 = vsel %vm1143, %v2886, 0.0
        %v2919 = vsel %vm1143, %v2887, 0.0
        %v2920 = vsel %vm1143, %v2888, 0.0
        %v2921 = vsel %vm1143, %v2889, 0.0
        %v2922 = vsel %vm1143, %v2890, 0.0
        %v2923 = vsel %vm1143, %v2891, 0.0
        %v2924 = vsel %vm1143, %v2892, 0.0
        %v2925 = vsel %vm1143, %v2893, 0.0
        %v2926 = vsel %vm1143, %v2894, 0.0
        %v2927 = vsel %vm1143, %v2895, 0.0
        %v2928 = vmul.f32 %v2896, %v2896
        %v2929 = vmul.f32 %v2897, %v2897
        %v2930 = vmul.f32 %v2898, %v2898
        %v2931 = vmul.f32 %v2899, %v2899
        %v2932 = vmul.f32 %v2900, %v2900
        %v2933 = vmul.f32 %v2901, %v2901
        %v2934 = vmul.f32 %v2902, %v2902
        %v2935 = vmul.f32 %v2903, %v2903
        %v2936 = vmul.f32 %v2904, %v2904
        %v2937 = vmul.f32 %v2905, %v2905
        %v2938 = vmul.f32 %v2906, %v2906
        %v2939 = vmul.f32 %v2907, %v2907
        %v2940 = vmul.f32 %v2908, %v2908
        %v2941 = vmul.f32 %v2909, %v2909
        %v2942 = vmul.f32 %v2910, %v2910
        %v2943 = vmul.f32 %v2911, %v2911
        %v2944 = vmul.f32 %v2912, %v2912
        %v2945 = vmul.f32 %v2913, %v2913
        %v2946 = vmul.f32 %v2914, %v2914
        %v2947 = vmul.f32 %v2915, %v2915
        %v2948 = vmul.f32 %v2916, %v2916
        %v2949 = vmul.f32 %v2917, %v2917
        %v2950 = vmul.f32 %v2918, %v2918
        %v2951 = vmul.f32 %v2919, %v2919
        %v2952 = vmul.f32 %v2920, %v2920
        %v2953 = vmul.f32 %v2921, %v2921
        %v2954 = vmul.f32 %v2922, %v2922
        %v2955 = vmul.f32 %v2923, %v2923
        %v2956 = vmul.f32 %v2924, %v2924
        %v2957 = vmul.f32 %v2925, %v2925
        %v2958 = vmul.f32 %v2926, %v2926
        %v2959 = vmul.f32 %v2927, %v2927
        %2960 = vadd.xlane.f32.xlu0 %v2928
        %v2961 = vpop.xlane.xlu0 %2960
        %2962 = vadd.xlane.f32.xlu0 %v2929
        %v2963 = vpop.xlane.xlu0 %2962
        %2964 = vadd.xlane.f32.xlu0 %v2930
        %v2965 = vpop.xlane.xlu0 %2964
        %2966 = vadd.xlane.f32.xlu0 %v2931
        %v2967 = vpop.xlane.xlu0 %2966
        %2968 = vadd.xlane.f32.xlu0 %v2932
        %v2969 = vpop.xlane.xlu0 %2968
        %2970 = vadd.xlane.f32.xlu0 %v2933
        %v2971 = vpop.xlane.xlu0 %2970
        %2972 = vadd.xlane.f32.xlu0 %v2934
        %v2973 = vpop.xlane.xlu0 %2972
        %2974 = vadd.xlane.f32.xlu0 %v2935
        %v2975 = vpop.xlane.xlu0 %2974
        %2976 = vadd.xlane.f32.xlu0 %v2936
        %v2977 = vpop.xlane.xlu0 %2976
        %2978 = vadd.xlane.f32.xlu0 %v2937
        %v2979 = vpop.xlane.xlu0 %2978
        %2980 = vadd.xlane.f32.xlu0 %v2938
        %v2981 = vpop.xlane.xlu0 %2980
        %2982 = vadd.xlane.f32.xlu0 %v2939
        %v2983 = vpop.xlane.xlu0 %2982
        %2984 = vadd.xlane.f32.xlu0 %v2940
        %v2985 = vpop.xlane.xlu0 %2984
        %2986 = vadd.xlane.f32.xlu0 %v2941
        %v2987 = vpop.xlane.xlu0 %2986
        %2988 = vadd.xlane.f32.xlu0 %v2942
        %v2989 = vpop.xlane.xlu0 %2988
        %2990 = vadd.xlane.f32.xlu0 %v2943
        %v2991 = vpop.xlane.xlu0 %2990
        %2992 = vadd.xlane.f32.xlu0 %v2944
        %v2993 = vpop.xlane.xlu0 %2992
        %2994 = vadd.xlane.f32.xlu0 %v2945
        %v2995 = vpop.xlane.xlu0 %2994
        %2996 = vadd.xlane.f32.xlu0 %v2946
        %v2997 = vpop.xlane.xlu0 %2996
        %2998 = vadd.xlane.f32.xlu0 %v2947
        %v2999 = vpop.xlane.xlu0 %2998
        %3000 = vadd.xlane.f32.xlu0 %v2948
        %v3001 = vpop.xlane.xlu0 %3000
        %3002 = vadd.xlane.f32.xlu0 %v2949
        %v3003 = vpop.xlane.xlu0 %3002
        %3004 = vadd.xlane.f32.xlu0 %v2950
        %v3005 = vpop.xlane.xlu0 %3004
        %3006 = vadd.xlane.f32.xlu0 %v2951
        %v3007 = vpop.xlane.xlu0 %3006
        %3008 = vadd.xlane.f32.xlu0 %v2952
        %v3009 = vpop.xlane.xlu0 %3008
        %3010 = vadd.xlane.f32.xlu0 %v2953
        %v3011 = vpop.xlane.xlu0 %3010
        %3012 = vadd.xlane.f32.xlu0 %v2954
        %v3013 = vpop.xlane.xlu0 %3012
        %3014 = vadd.xlane.f32.xlu0 %v2955
        %v3015 = vpop.xlane.xlu0 %3014
        %3016 = vadd.xlane.f32.xlu0 %v2956
        %v3017 = vpop.xlane.xlu0 %3016
        %3018 = vadd.xlane.f32.xlu0 %v2957
        %v3019 = vpop.xlane.xlu0 %3018
        %3020 = vadd.xlane.f32.xlu0 %v2958
        %v3021 = vpop.xlane.xlu0 %3020
        %3022 = vadd.xlane.f32.xlu0 %v2959
        %v3023 = vpop.xlane.xlu0 %3022
        %v3024 = vmul.f32 %v2961, 0.03125
        %v3025 = vmul.f32 %v2963, 0.03125
        %v3026 = vmul.f32 %v2965, 0.03125
        %v3027 = vmul.f32 %v2967, 0.03125
        %v3028 = vmul.f32 %v2969, 0.03125
        %v3029 = vmul.f32 %v2971, 0.03125
        %v3030 = vmul.f32 %v2973, 0.03125
        %v3031 = vmul.f32 %v2975, 0.03125
        %v3032 = vmul.f32 %v2977, 0.03125
        %v3033 = vmul.f32 %v2979, 0.03125
        %v3034 = vmul.f32 %v2981, 0.03125
        %v3035 = vmul.f32 %v2983, 0.03125
        %v3036 = vmul.f32 %v2985, 0.03125
        %v3037 = vmul.f32 %v2987, 0.03125
        %v3038 = vmul.f32 %v2989, 0.03125
        %v3039 = vmul.f32 %v2991, 0.03125
        %v3040 = vmul.f32 %v2993, 0.03125
        %v3041 = vmul.f32 %v2995, 0.03125
        %v3042 = vmul.f32 %v2997, 0.03125
        %v3043 = vmul.f32 %v2999, 0.03125
        %v3044 = vmul.f32 %v3001, 0.03125
        %v3045 = vmul.f32 %v3003, 0.03125
        %v3046 = vmul.f32 %v3005, 0.03125
        %v3047 = vmul.f32 %v3007, 0.03125
        %v3048 = vmul.f32 %v3009, 0.03125
        %v3049 = vmul.f32 %v3011, 0.03125
        %v3050 = vmul.f32 %v3013, 0.03125
        %v3051 = vmul.f32 %v3015, 0.03125
        %v3052 = vmul.f32 %v3017, 0.03125
        %v3053 = vmul.f32 %v3019, 0.03125
        %v3054 = vmul.f32 %v3021, 0.03125
        %v3055 = vmul.f32 %v3023, 0.03125
        %v3056 = vadd.f32 %v3024, 1e-05
        %v3057 = vadd.f32 %v3025, 1e-05
        %v3058 = vadd.f32 %v3026, 1e-05
        %v3059 = vadd.f32 %v3027, 1e-05
        %v3060 = vadd.f32 %v3028, 1e-05
        %v3061 = vadd.f32 %v3029, 1e-05
        %v3062 = vadd.f32 %v3030, 1e-05
        %v3063 = vadd.f32 %v3031, 1e-05
        %v3064 = vadd.f32 %v3032, 1e-05
        %v3065 = vadd.f32 %v3033, 1e-05
        %v3066 = vadd.f32 %v3034, 1e-05
        %v3067 = vadd.f32 %v3035, 1e-05
        %v3068 = vadd.f32 %v3036, 1e-05
        %v3069 = vadd.f32 %v3037, 1e-05
        %v3070 = vadd.f32 %v3038, 1e-05
        %v3071 = vadd.f32 %v3039, 1e-05
        %v3072 = vadd.f32 %v3040, 1e-05
        %v3073 = vadd.f32 %v3041, 1e-05
        %v3074 = vadd.f32 %v3042, 1e-05
        %v3075 = vadd.f32 %v3043, 1e-05
        %v3076 = vadd.f32 %v3044, 1e-05
        %v3077 = vadd.f32 %v3045, 1e-05
        %v3078 = vadd.f32 %v3046, 1e-05
        %v3079 = vadd.f32 %v3047, 1e-05
        %v3080 = vadd.f32 %v3048, 1e-05
        %v3081 = vadd.f32 %v3049, 1e-05
        %v3082 = vadd.f32 %v3050, 1e-05
        %v3083 = vadd.f32 %v3051, 1e-05
        %v3084 = vadd.f32 %v3052, 1e-05
        %v3085 = vadd.f32 %v3053, 1e-05
        %v3086 = vadd.f32 %v3054, 1e-05
        %v3087 = vadd.f32 %v3055, 1e-05
        %v3088 = vrsqrt.pop %v3056
        %v3089 = vmul.f32 %v3088, %v3056
        %v3090 = vmul.f32 %v3089, %v3088
        %v3091 = vmul.f32 0.5, %v3090
        %v3092 = vsub.f32 1.5, %v3091
        %v3093 = vmul.f32 %v3088, %v3092
        %vm3094 = vweird.f32 %v3056
        %vm3095 = vweird.f32 %v3088
        %vm3096 = vmor %vm3094, %vm3095
        %v3097 = vsel %vm3096, %v3088, %v3093
        %v3098 = vrsqrt.pop %v3057
        %v3099 = vmul.f32 %v3098, %v3057
        %v3100 = vmul.f32 %v3099, %v3098
        %v3101 = vmul.f32 0.5, %v3100
        %v3102 = vsub.f32 1.5, %v3101
        %v3103 = vmul.f32 %v3098, %v3102
        %vm3104 = vweird.f32 %v3057
        %vm3105 = vweird.f32 %v3098
        %vm3106 = vmor %vm3104, %vm3105
        %v3107 = vsel %vm3106, %v3098, %v3103
        %v3108 = vrsqrt.pop %v3058
        %v3109 = vmul.f32 %v3108, %v3058
        %v3110 = vmul.f32 %v3109, %v3108
        %v3111 = vmul.f32 0.5, %v3110
        %v3112 = vsub.f32 1.5, %v3111
        %v3113 = vmul.f32 %v3108, %v3112
        %vm3114 = vweird.f32 %v3058
        %vm3115 = vweird.f32 %v3108
        %vm3116 = vmor %vm3114, %vm3115
        %v3117 = vsel %vm3116, %v3108, %v3113
        %v3118 = vrsqrt.pop %v3059
        %v3119 = vmul.f32 %v3118, %v3059
        %v3120 = vmul.f32 %v3119, %v3118
        %v3121 = vmul.f32 0.5, %v3120
        %v3122 = vsub.f32 1.5, %v3121
        %v3123 = vmul.f32 %v3118, %v3122
        %vm3124 = vweird.f32 %v3059
        %vm3125 = vweird.f32 %v3118
        %vm3126 = vmor %vm3124, %vm3125
        %v3127 = vsel %vm3126, %v3118, %v3123
        %v3128 = vrsqrt.pop %v3060
        %v3129 = vmul.f32 %v3128, %v3060
        %v3130 = vmul.f32 %v3129, %v3128
        %v3131 = vmul.f32 0.5, %v3130
        %v3132 = vsub.f32 1.5, %v3131
        %v3133 = vmul.f32 %v3128, %v3132
        %vm3134 = vweird.f32 %v3060
        %vm3135 = vweird.f32 %v3128
        %vm3136 = vmor %vm3134, %vm3135
        %v3137 = vsel %vm3136, %v3128, %v3133
        %v3138 = vrsqrt.pop %v3061
        %v3139 = vmul.f32 %v3138, %v3061
        %v3140 = vmul.f32 %v3139, %v3138
        %v3141 = vmul.f32 0.5, %v3140
        %v3142 = vsub.f32 1.5, %v3141
        %v3143 = vmul.f32 %v3138, %v3142
        %vm3144 = vweird.f32 %v3061
        %vm3145 = vweird.f32 %v3138
        %vm3146 = vmor %vm3144, %vm3145
        %v3147 = vsel %vm3146, %v3138, %v3143
        %v3148 = vrsqrt.pop %v3062
        %v3149 = vmul.f32 %v3148, %v3062
        %v3150 = vmul.f32 %v3149, %v3148
        %v3151 = vmul.f32 0.5, %v3150
        %v3152 = vsub.f32 1.5, %v3151
        %v3153 = vmul.f32 %v3148, %v3152
        %vm3154 = vweird.f32 %v3062
        %vm3155 = vweird.f32 %v3148
        %vm3156 = vmor %vm3154, %vm3155
        %v3157 = vsel %vm3156, %v3148, %v3153
        %v3158 = vrsqrt.pop %v3063
        %v3159 = vmul.f32 %v3158, %v3063
        %v3160 = vmul.f32 %v3159, %v3158
        %v3161 = vmul.f32 0.5, %v3160
        %v3162 = vsub.f32 1.5, %v3161
        %v3163 = vmul.f32 %v3158, %v3162
        %vm3164 = vweird.f32 %v3063
        %vm3165 = vweird.f32 %v3158
        %vm3166 = vmor %vm3164, %vm3165
        %v3167 = vsel %vm3166, %v3158, %v3163
        %v3168 = vrsqrt.pop %v3064
        %v3169 = vmul.f32 %v3168, %v3064
        %v3170 = vmul.f32 %v3169, %v3168
        %v3171 = vmul.f32 0.5, %v3170
        %v3172 = vsub.f32 1.5, %v3171
        %v3173 = vmul.f32 %v3168, %v3172
        %vm3174 = vweird.f32 %v3064
        %vm3175 = vweird.f32 %v3168
        %vm3176 = vmor %vm3174, %vm3175
        %v3177 = vsel %vm3176, %v3168, %v3173
        %v3178 = vrsqrt.pop %v3065
        %v3179 = vmul.f32 %v3178, %v3065
        %v3180 = vmul.f32 %v3179, %v3178
        %v3181 = vmul.f32 0.5, %v3180
        %v3182 = vsub.f32 1.5, %v3181
        %v3183 = vmul.f32 %v3178, %v3182
        %vm3184 = vweird.f32 %v3065
        %vm3185 = vweird.f32 %v3178
        %vm3186 = vmor %vm3184, %vm3185
        %v3187 = vsel %vm3186, %v3178, %v3183
        %v3188 = vrsqrt.pop %v3066
        %v3189 = vmul.f32 %v3188, %v3066
        %v3190 = vmul.f32 %v3189, %v3188
        %v3191 = vmul.f32 0.5, %v3190
        %v3192 = vsub.f32 1.5, %v3191
        %v3193 = vmul.f32 %v3188, %v3192
        %vm3194 = vweird.f32 %v3066
        %vm3195 = vweird.f32 %v3188
        %vm3196 = vmor %vm3194, %vm3195
        %v3197 = vsel %vm3196, %v3188, %v3193
        %v3198 = vrsqrt.pop %v3067
        %v3199 = vmul.f32 %v3198, %v3067
        %v3200 = vmul.f32 %v3199, %v3198
        %v3201 = vmul.f32 0.5, %v3200
        %v3202 = vsub.f32 1.5, %v3201
        %v3203 = vmul.f32 %v3198, %v3202
        %vm3204 = vweird.f32 %v3067
        %vm3205 = vweird.f32 %v3198
        %vm3206 = vmor %vm3204, %vm3205
        %v3207 = vsel %vm3206, %v3198, %v3203
        %v3208 = vrsqrt.pop %v3068
        %v3209 = vmul.f32 %v3208, %v3068
        %v3210 = vmul.f32 %v3209, %v3208
        %v3211 = vmul.f32 0.5, %v3210
        %v3212 = vsub.f32 1.5, %v3211
        %v3213 = vmul.f32 %v3208, %v3212
        %vm3214 = vweird.f32 %v3068
        %vm3215 = vweird.f32 %v3208
        %vm3216 = vmor %vm3214, %vm3215
        %v3217 = vsel %vm3216, %v3208, %v3213
        %v3218 = vrsqrt.pop %v3069
        %v3219 = vmul.f32 %v3218, %v3069
        %v3220 = vmul.f32 %v3219, %v3218
        %v3221 = vmul.f32 0.5, %v3220
        %v3222 = vsub.f32 1.5, %v3221
        %v3223 = vmul.f32 %v3218, %v3222
        %vm3224 = vweird.f32 %v3069
        %vm3225 = vweird.f32 %v3218
        %vm3226 = vmor %vm3224, %vm3225
        %v3227 = vsel %vm3226, %v3218, %v3223
        %v3228 = vrsqrt.pop %v3070
        %v3229 = vmul.f32 %v3228, %v3070
        %v3230 = vmul.f32 %v3229, %v3228
        %v3231 = vmul.f32 0.5, %v3230
        %v3232 = vsub.f32 1.5, %v3231
        %v3233 = vmul.f32 %v3228, %v3232
        %vm3234 = vweird.f32 %v3070
        %vm3235 = vweird.f32 %v3228
        %vm3236 = vmor %vm3234, %vm3235
        %v3237 = vsel %vm3236, %v3228, %v3233
        %v3238 = vrsqrt.pop %v3071
        %v3239 = vmul.f32 %v3238, %v3071
        %v3240 = vmul.f32 %v3239, %v3238
        %v3241 = vmul.f32 0.5, %v3240
        %v3242 = vsub.f32 1.5, %v3241
        %v3243 = vmul.f32 %v3238, %v3242
        %vm3244 = vweird.f32 %v3071
        %vm3245 = vweird.f32 %v3238
        %vm3246 = vmor %vm3244, %vm3245
        %v3247 = vsel %vm3246, %v3238, %v3243
        %v3248 = vrsqrt.pop %v3072
        %v3249 = vmul.f32 %v3248, %v3072
        %v3250 = vmul.f32 %v3249, %v3248
        %v3251 = vmul.f32 0.5, %v3250
        %v3252 = vsub.f32 1.5, %v3251
        %v3253 = vmul.f32 %v3248, %v3252
        %vm3254 = vweird.f32 %v3072
        %vm3255 = vweird.f32 %v3248
        %vm3256 = vmor %vm3254, %vm3255
        %v3257 = vsel %vm3256, %v3248, %v3253
        %v3258 = vrsqrt.pop %v3073
        %v3259 = vmul.f32 %v3258, %v3073
        %v3260 = vmul.f32 %v3259, %v3258
        %v3261 = vmul.f32 0.5, %v3260
        %v3262 = vsub.f32 1.5, %v3261
        %v3263 = vmul.f32 %v3258, %v3262
        %vm3264 = vweird.f32 %v3073
        %vm3265 = vweird.f32 %v3258
        %vm3266 = vmor %vm3264, %vm3265
        %v3267 = vsel %vm3266, %v3258, %v3263
        %v3268 = vrsqrt.pop %v3074
        %v3269 = vmul.f32 %v3268, %v3074
        %v3270 = vmul.f32 %v3269, %v3268
        %v3271 = vmul.f32 0.5, %v3270
        %v3272 = vsub.f32 1.5, %v3271
        %v3273 = vmul.f32 %v3268, %v3272
        %vm3274 = vweird.f32 %v3074
        %vm3275 = vweird.f32 %v3268
        %vm3276 = vmor %vm3274, %vm3275
        %v3277 = vsel %vm3276, %v3268, %v3273
        %v3278 = vrsqrt.pop %v3075
        %v3279 = vmul.f32 %v3278, %v3075
        %v3280 = vmul.f32 %v3279, %v3278
        %v3281 = vmul.f32 0.5, %v3280
        %v3282 = vsub.f32 1.5, %v3281
        %v3283 = vmul.f32 %v3278, %v3282
        %vm3284 = vweird.f32 %v3075
        %vm3285 = vweird.f32 %v3278
        %vm3286 = vmor %vm3284, %vm3285
        %v3287 = vsel %vm3286, %v3278, %v3283
        %v3288 = vrsqrt.pop %v3076
        %v3289 = vmul.f32 %v3288, %v3076
        %v3290 = vmul.f32 %v3289, %v3288
        %v3291 = vmul.f32 0.5, %v3290
        %v3292 = vsub.f32 1.5, %v3291
        %v3293 = vmul.f32 %v3288, %v3292
        %vm3294 = vweird.f32 %v3076
        %vm3295 = vweird.f32 %v3288
        %vm3296 = vmor %vm3294, %vm3295
        %v3297 = vsel %vm3296, %v3288, %v3293
        %v3298 = vrsqrt.pop %v3077
        %v3299 = vmul.f32 %v3298, %v3077
        %v3300 = vmul.f32 %v3299, %v3298
        %v3301 = vmul.f32 0.5, %v3300
        %v3302 = vsub.f32 1.5, %v3301
        %v3303 = vmul.f32 %v3298, %v3302
        %vm3304 = vweird.f32 %v3077
        %vm3305 = vweird.f32 %v3298
        %vm3306 = vmor %vm3304, %vm3305
        %v3307 = vsel %vm3306, %v3298, %v3303
        %v3308 = vrsqrt.pop %v3078
        %v3309 = vmul.f32 %v3308, %v3078
        %v3310 = vmul.f32 %v3309, %v3308
        %v3311 = vmul.f32 0.5, %v3310
        %v3312 = vsub.f32 1.5, %v3311
        %v3313 = vmul.f32 %v3308, %v3312
        %vm3314 = vweird.f32 %v3078
        %vm3315 = vweird.f32 %v3308
        %vm3316 = vmor %vm3314, %vm3315
        %v3317 = vsel %vm3316, %v3308, %v3313
        %v3318 = vrsqrt.pop %v3079
        %v3319 = vmul.f32 %v3318, %v3079
        %v3320 = vmul.f32 %v3319, %v3318
        %v3321 = vmul.f32 0.5, %v3320
        %v3322 = vsub.f32 1.5, %v3321
        %v3323 = vmul.f32 %v3318, %v3322
        %vm3324 = vweird.f32 %v3079
        %vm3325 = vweird.f32 %v3318
        %vm3326 = vmor %vm3324, %vm3325
        %v3327 = vsel %vm3326, %v3318, %v3323
        %v3328 = vrsqrt.pop %v3080
        %v3329 = vmul.f32 %v3328, %v3080
        %v3330 = vmul.f32 %v3329, %v3328
        %v3331 = vmul.f32 0.5, %v3330
        %v3332 = vsub.f32 1.5, %v3331
        %v3333 = vmul.f32 %v3328, %v3332
        %vm3334 = vweird.f32 %v3080
        %vm3335 = vweird.f32 %v3328
        %vm3336 = vmor %vm3334, %vm3335
        %v3337 = vsel %vm3336, %v3328, %v3333
        %v3338 = vrsqrt.pop %v3081
        %v3339 = vmul.f32 %v3338, %v3081
        %v3340 = vmul.f32 %v3339, %v3338
        %v3341 = vmul.f32 0.5, %v3340
        %v3342 = vsub.f32 1.5, %v3341
        %v3343 = vmul.f32 %v3338, %v3342
        %vm3344 = vweird.f32 %v3081
        %vm3345 = vweird.f32 %v3338
        %vm3346 = vmor %vm3344, %vm3345
        %v3347 = vsel %vm3346, %v3338, %v3343
        %v3348 = vrsqrt.pop %v3082
        %v3349 = vmul.f32 %v3348, %v3082
        %v3350 = vmul.f32 %v3349, %v3348
        %v3351 = vmul.f32 0.5, %v3350
        %v3352 = vsub.f32 1.5, %v3351
        %v3353 = vmul.f32 %v3348, %v3352
        %vm3354 = vweird.f32 %v3082
        %vm3355 = vweird.f32 %v3348
        %vm3356 = vmor %vm3354, %vm3355
        %v3357 = vsel %vm3356, %v3348, %v3353
        %v3358 = vrsqrt.pop %v3083
        %v3359 = vmul.f32 %v3358, %v3083
        %v3360 = vmul.f32 %v3359, %v3358
        %v3361 = vmul.f32 0.5, %v3360
        %v3362 = vsub.f32 1.5, %v3361
        %v3363 = vmul.f32 %v3358, %v3362
        %vm3364 = vweird.f32 %v3083
        %vm3365 = vweird.f32 %v3358
        %vm3366 = vmor %vm3364, %vm3365
        %v3367 = vsel %vm3366, %v3358, %v3363
        %v3368 = vrsqrt.pop %v3084
        %v3369 = vmul.f32 %v3368, %v3084
        %v3370 = vmul.f32 %v3369, %v3368
        %v3371 = vmul.f32 0.5, %v3370
        %v3372 = vsub.f32 1.5, %v3371
        %v3373 = vmul.f32 %v3368, %v3372
        %vm3374 = vweird.f32 %v3084
        %vm3375 = vweird.f32 %v3368
        %vm3376 = vmor %vm3374, %vm3375
        %v3377 = vsel %vm3376, %v3368, %v3373
        %v3378 = vrsqrt.pop %v3085
        %v3379 = vmul.f32 %v3378, %v3085
        %v3380 = vmul.f32 %v3379, %v3378
        %v3381 = vmul.f32 0.5, %v3380
        %v3382 = vsub.f32 1.5, %v3381
        %v3383 = vmul.f32 %v3378, %v3382
        %vm3384 = vweird.f32 %v3085
        %vm3385 = vweird.f32 %v3378
        %vm3386 = vmor %vm3384, %vm3385
        %v3387 = vsel %vm3386, %v3378, %v3383
        %v3388 = vrsqrt.pop %v3086
        %v3389 = vmul.f32 %v3388, %v3086
        %v3390 = vmul.f32 %v3389, %v3388
        %v3391 = vmul.f32 0.5, %v3390
        %v3392 = vsub.f32 1.5, %v3391
        %v3393 = vmul.f32 %v3388, %v3392
        %vm3394 = vweird.f32 %v3086
        %vm3395 = vweird.f32 %v3388
        %vm3396 = vmor %vm3394, %vm3395
        %v3397 = vsel %vm3396, %v3388, %v3393
        %v3398 = vrsqrt.pop %v3087
        %v3399 = vmul.f32 %v3398, %v3087
        %v3400 = vmul.f32 %v3399, %v3398
        %v3401 = vmul.f32 0.5, %v3400
        %v3402 = vsub.f32 1.5, %v3401
        %v3403 = vmul.f32 %v3398, %v3402
        %vm3404 = vweird.f32 %v3087
        %vm3405 = vweird.f32 %v3398
        %vm3406 = vmor %vm3404, %vm3405
        %v3407 = vsel %vm3406, %v3398, %v3403
        %v3408 = vmul.f32 %v2896, %v3097
        %v3409 = vmul.f32 %v2897, %v3107
        %v3410 = vmul.f32 %v2898, %v3117
        %v3411 = vmul.f32 %v2899, %v3127
        %v3412 = vmul.f32 %v2900, %v3137
        %v3413 = vmul.f32 %v2901, %v3147
        %v3414 = vmul.f32 %v2902, %v3157
        %v3415 = vmul.f32 %v2903, %v3167
        %v3416 = vmul.f32 %v2904, %v3177
        %v3417 = vmul.f32 %v2905, %v3187
        %v3418 = vmul.f32 %v2906, %v3197
        %v3419 = vmul.f32 %v2907, %v3207
        %v3420 = vmul.f32 %v2908, %v3217
        %v3421 = vmul.f32 %v2909, %v3227
        %v3422 = vmul.f32 %v2910, %v3237
        %v3423 = vmul.f32 %v2911, %v3247
        %v3424 = vmul.f32 %v2912, %v3257
        %v3425 = vmul.f32 %v2913, %v3267
        %v3426 = vmul.f32 %v2914, %v3277
        %v3427 = vmul.f32 %v2915, %v3287
        %v3428 = vmul.f32 %v2916, %v3297
        %v3429 = vmul.f32 %v2917, %v3307
        %v3430 = vmul.f32 %v2918, %v3317
        %v3431 = vmul.f32 %v2919, %v3327
        %v3432 = vmul.f32 %v2920, %v3337
        %v3433 = vmul.f32 %v2921, %v3347
        %v3434 = vmul.f32 %v2922, %v3357
        %v3435 = vmul.f32 %v2923, %v3367
        %v3436 = vmul.f32 %v2924, %v3377
        %v3437 = vmul.f32 %v2925, %v3387
        %v3438 = vmul.f32 %v2926, %v3397
        %v3439 = vmul.f32 %v2927, %v3407
        %v3440 = vperm.slane %v2766, 0
        %v3441 = vmul.f32 %v3408, %v3440
        %v3442 = vmul.f32 %v3409, %v3440
        %v3443 = vmul.f32 %v3410, %v3440
        %v3444 = vmul.f32 %v3411, %v3440
        %v3445 = vmul.f32 %v3412, %v3440
        %v3446 = vmul.f32 %v3413, %v3440
        %v3447 = vmul.f32 %v3414, %v3440
        %v3448 = vmul.f32 %v3415, %v3440
        %v3449 = vmul.f32 %v3416, %v3440
        %v3450 = vmul.f32 %v3417, %v3440
        %v3451 = vmul.f32 %v3418, %v3440
        %v3452 = vmul.f32 %v3419, %v3440
        %v3453 = vmul.f32 %v3420, %v3440
        %v3454 = vmul.f32 %v3421, %v3440
        %v3455 = vmul.f32 %v3422, %v3440
        %v3456 = vmul.f32 %v3423, %v3440
        %v3457 = vmul.f32 %v3424, %v3440
        %v3458 = vmul.f32 %v3425, %v3440
        %v3459 = vmul.f32 %v3426, %v3440
        %v3460 = vmul.f32 %v3427, %v3440
        %v3461 = vmul.f32 %v3428, %v3440
        %v3462 = vmul.f32 %v3429, %v3440
        %v3463 = vmul.f32 %v3430, %v3440
        %v3464 = vmul.f32 %v3431, %v3440
        %v3465 = vmul.f32 %v3432, %v3440
        %v3466 = vmul.f32 %v3433, %v3440
        %v3467 = vmul.f32 %v3434, %v3440
        %v3468 = vmul.f32 %v3435, %v3440
        %v3469 = vmul.f32 %v3436, %v3440
        %v3470 = vmul.f32 %v3437, %v3440
        %v3471 = vmul.f32 %v3438, %v3440
        %v3472 = vmul.f32 %v3439, %v3440
        %v3473 = vperm.slane %v2767, 0
        %v3474 = vadd.f32 %v3441, %v3473
        %v3475 = vadd.f32 %v3442, %v3473
        %v3476 = vadd.f32 %v3443, %v3473
        %v3477 = vadd.f32 %v3444, %v3473
        %v3478 = vadd.f32 %v3445, %v3473
        %v3479 = vadd.f32 %v3446, %v3473
        %v3480 = vadd.f32 %v3447, %v3473
        %v3481 = vadd.f32 %v3448, %v3473
        %v3482 = vadd.f32 %v3449, %v3473
        %v3483 = vadd.f32 %v3450, %v3473
        %v3484 = vadd.f32 %v3451, %v3473
        %v3485 = vadd.f32 %v3452, %v3473
        %v3486 = vadd.f32 %v3453, %v3473
        %v3487 = vadd.f32 %v3454, %v3473
        %v3488 = vadd.f32 %v3455, %v3473
        %v3489 = vadd.f32 %v3456, %v3473
        %v3490 = vadd.f32 %v3457, %v3473
        %v3491 = vadd.f32 %v3458, %v3473
        %v3492 = vadd.f32 %v3459, %v3473
        %v3493 = vadd.f32 %v3460, %v3473
        %v3494 = vadd.f32 %v3461, %v3473
        %v3495 = vadd.f32 %v3462, %v3473
        %v3496 = vadd.f32 %v3463, %v3473
        %v3497 = vadd.f32 %v3464, %v3473
        %v3498 = vadd.f32 %v3465, %v3473
        %v3499 = vadd.f32 %v3466, %v3473
        %v3500 = vadd.f32 %v3467, %v3473
        %v3501 = vadd.f32 %v3468, %v3473
        %v3502 = vadd.f32 %v3469, %v3473
        %v3503 = vadd.f32 %v3470, %v3473
        %v3504 = vadd.f32 %v3471, %v3473
        %v3505 = vadd.f32 %v3472, %v3473
        %v3506 = vld [vmem:[%s2 + $0x4] sm:$0x1]
        %v3507 = vld [vmem:[%s2 + $0x5] sm:$0x1]
        %3508 = vadd.xlane.f32.xlu0 %v3474
        %v3509 = vpop.xlane.xlu0 %3508
        %3510 = vadd.xlane.f32.xlu0 %v3475
        %v3511 = vpop.xlane.xlu0 %3510
        %3512 = vadd.xlane.f32.xlu0 %v3476
        %v3513 = vpop.xlane.xlu0 %3512
        %3514 = vadd.xlane.f32.xlu0 %v3477
        %v3515 = vpop.xlane.xlu0 %3514
        %3516 = vadd.xlane.f32.xlu0 %v3478
        %v3517 = vpop.xlane.xlu0 %3516
        %3518 = vadd.xlane.f32.xlu0 %v3479
        %v3519 = vpop.xlane.xlu0 %3518
        %3520 = vadd.xlane.f32.xlu0 %v3480
        %v3521 = vpop.xlane.xlu0 %3520
        %3522 = vadd.xlane.f32.xlu0 %v3481
        %v3523 = vpop.xlane.xlu0 %3522
        %3524 = vadd.xlane.f32.xlu0 %v3482
        %v3525 = vpop.xlane.xlu0 %3524
        %3526 = vadd.xlane.f32.xlu0 %v3483
        %v3527 = vpop.xlane.xlu0 %3526
        %3528 = vadd.xlane.f32.xlu0 %v3484
        %v3529 = vpop.xlane.xlu0 %3528
        %3530 = vadd.xlane.f32.xlu0 %v3485
        %v3531 = vpop.xlane.xlu0 %3530
        %3532 = vadd.xlane.f32.xlu0 %v3486
        %v3533 = vpop.xlane.xlu0 %3532
        %3534 = vadd.xlane.f32.xlu0 %v3487
        %v3535 = vpop.xlane.xlu0 %3534
        %3536 = vadd.xlane.f32.xlu0 %v3488
        %v3537 = vpop.xlane.xlu0 %3536
        %3538 = vadd.xlane.f32.xlu0 %v3489
        %v3539 = vpop.xlane.xlu0 %3538
        %3540 = vadd.xlane.f32.xlu0 %v3490
        %v3541 = vpop.xlane.xlu0 %3540
        %3542 = vadd.xlane.f32.xlu0 %v3491
        %v3543 = vpop.xlane.xlu0 %3542
        %3544 = vadd.xlane.f32.xlu0 %v3492
        %v3545 = vpop.xlane.xlu0 %3544
        %3546 = vadd.xlane.f32.xlu0 %v3493
        %v3547 = vpop.xlane.xlu0 %3546
        %3548 = vadd.xlane.f32.xlu0 %v3494
        %v3549 = vpop.xlane.xlu0 %3548
        %3550 = vadd.xlane.f32.xlu0 %v3495
        %v3551 = vpop.xlane.xlu0 %3550
        %3552 = vadd.xlane.f32.xlu0 %v3496
        %v3553 = vpop.xlane.xlu0 %3552
        %3554 = vadd.xlane.f32.xlu0 %v3497
        %v3555 = vpop.xlane.xlu0 %3554
        %3556 = vadd.xlane.f32.xlu0 %v3498
        %v3557 = vpop.xlane.xlu0 %3556
        %3558 = vadd.xlane.f32.xlu0 %v3499
        %v3559 = vpop.xlane.xlu0 %3558
        %3560 = vadd.xlane.f32.xlu0 %v3500
        %v3561 = vpop.xlane.xlu0 %3560
        %3562 = vadd.xlane.f32.xlu0 %v3501
        %v3563 = vpop.xlane.xlu0 %3562
        %3564 = vadd.xlane.f32.xlu0 %v3502
        %v3565 = vpop.xlane.xlu0 %3564
        %3566 = vadd.xlane.f32.xlu0 %v3503
        %v3567 = vpop.xlane.xlu0 %3566
        %3568 = vadd.xlane.f32.xlu0 %v3504
        %v3569 = vpop.xlane.xlu0 %3568
        %3570 = vadd.xlane.f32.xlu0 %v3505
        %v3571 = vpop.xlane.xlu0 %3570
        %v3572 = vmul.f32 %v3509, 0.03125
        %v3573 = vmul.f32 %v3511, 0.03125
        %v3574 = vmul.f32 %v3513, 0.03125
        %v3575 = vmul.f32 %v3515, 0.03125
        %v3576 = vmul.f32 %v3517, 0.03125
        %v3577 = vmul.f32 %v3519, 0.03125
        %v3578 = vmul.f32 %v3521, 0.03125
        %v3579 = vmul.f32 %v3523, 0.03125
        %v3580 = vmul.f32 %v3525, 0.03125
        %v3581 = vmul.f32 %v3527, 0.03125
        %v3582 = vmul.f32 %v3529, 0.03125
        %v3583 = vmul.f32 %v3531, 0.03125
        %v3584 = vmul.f32 %v3533, 0.03125
        %v3585 = vmul.f32 %v3535, 0.03125
        %v3586 = vmul.f32 %v3537, 0.03125
        %v3587 = vmul.f32 %v3539, 0.03125
        %v3588 = vmul.f32 %v3541, 0.03125
        %v3589 = vmul.f32 %v3543, 0.03125
        %v3590 = vmul.f32 %v3545, 0.03125
        %v3591 = vmul.f32 %v3547, 0.03125
        %v3592 = vmul.f32 %v3549, 0.03125
        %v3593 = vmul.f32 %v3551, 0.03125
        %v3594 = vmul.f32 %v3553, 0.03125
        %v3595 = vmul.f32 %v3555, 0.03125
        %v3596 = vmul.f32 %v3557, 0.03125
        %v3597 = vmul.f32 %v3559, 0.03125
        %v3598 = vmul.f32 %v3561, 0.03125
        %v3599 = vmul.f32 %v3563, 0.03125
        %v3600 = vmul.f32 %v3565, 0.03125
        %v3601 = vmul.f32 %v3567, 0.03125
        %v3602 = vmul.f32 %v3569, 0.03125
        %v3603 = vmul.f32 %v3571, 0.03125
        %v3604 = vsub.f32 %v3474, %v3572
        %v3605 = vsub.f32 %v3475, %v3573
        %v3606 = vsub.f32 %v3476, %v3574
        %v3607 = vsub.f32 %v3477, %v3575
        %v3608 = vsub.f32 %v3478, %v3576
        %v3609 = vsub.f32 %v3479, %v3577
        %v3610 = vsub.f32 %v3480, %v3578
        %v3611 = vsub.f32 %v3481, %v3579
        %v3612 = vsub.f32 %v3482, %v3580
        %v3613 = vsub.f32 %v3483, %v3581
        %v3614 = vsub.f32 %v3484, %v3582
        %v3615 = vsub.f32 %v3485, %v3583
        %v3616 = vsub.f32 %v3486, %v3584
        %v3617 = vsub.f32 %v3487, %v3585
        %v3618 = vsub.f32 %v3488, %v3586
        %v3619 = vsub.f32 %v3489, %v3587
        %v3620 = vsub.f32 %v3490, %v3588
        %v3621 = vsub.f32 %v3491, %v3589
        %v3622 = vsub.f32 %v3492, %v3590
        %v3623 = vsub.f32 %v3493, %v3591
        %v3624 = vsub.f32 %v3494, %v3592
        %v3625 = vsub.f32 %v3495, %v3593
        %v3626 = vsub.f32 %v3496, %v3594
        %v3627 = vsub.f32 %v3497, %v3595
        %v3628 = vsub.f32 %v3498, %v3596
        %v3629 = vsub.f32 %v3499, %v3597
        %v3630 = vsub.f32 %v3500, %v3598
        %v3631 = vsub.f32 %v3501, %v3599
        %v3632 = vsub.f32 %v3502, %v3600
        %v3633 = vsub.f32 %v3503, %v3601
        %v3634 = vsub.f32 %v3504, %v3602
        %v3635 = vsub.f32 %v3505, %v3603
        %v3636 = vsel %vm1143, %v3604, 0.0
        %v3637 = vsel %vm1143, %v3605, 0.0
        %v3638 = vsel %vm1143, %v3606, 0.0
        %v3639 = vsel %vm1143, %v3607, 0.0
        %v3640 = vsel %vm1143, %v3608, 0.0
        %v3641 = vsel %vm1143, %v3609, 0.0
        %v3642 = vsel %vm1143, %v3610, 0.0
        %v3643 = vsel %vm1143, %v3611, 0.0
        %v3644 = vsel %vm1143, %v3612, 0.0
        %v3645 = vsel %vm1143, %v3613, 0.0
        %v3646 = vsel %vm1143, %v3614, 0.0
        %v3647 = vsel %vm1143, %v3615, 0.0
        %v3648 = vsel %vm1143, %v3616, 0.0
        %v3649 = vsel %vm1143, %v3617, 0.0
        %v3650 = vsel %vm1143, %v3618, 0.0
        %v3651 = vsel %vm1143, %v3619, 0.0
        %v3652 = vsel %vm1143, %v3620, 0.0
        %v3653 = vsel %vm1143, %v3621, 0.0
        %v3654 = vsel %vm1143, %v3622, 0.0
        %v3655 = vsel %vm1143, %v3623, 0.0
        %v3656 = vsel %vm1143, %v3624, 0.0
        %v3657 = vsel %vm1143, %v3625, 0.0
        %v3658 = vsel %vm1143, %v3626, 0.0
        %v3659 = vsel %vm1143, %v3627, 0.0
        %v3660 = vsel %vm1143, %v3628, 0.0
        %v3661 = vsel %vm1143, %v3629, 0.0
        %v3662 = vsel %vm1143, %v3630, 0.0
        %v3663 = vsel %vm1143, %v3631, 0.0
        %v3664 = vsel %vm1143, %v3632, 0.0
        %v3665 = vsel %vm1143, %v3633, 0.0
        %v3666 = vsel %vm1143, %v3634, 0.0
        %v3667 = vsel %vm1143, %v3635, 0.0
        %v3668 = vmul.f32 %v3636, %v3636
        %v3669 = vmul.f32 %v3637, %v3637
        %v3670 = vmul.f32 %v3638, %v3638
        %v3671 = vmul.f32 %v3639, %v3639
        %v3672 = vmul.f32 %v3640, %v3640
        %v3673 = vmul.f32 %v3641, %v3641
        %v3674 = vmul.f32 %v3642, %v3642
        %v3675 = vmul.f32 %v3643, %v3643
        %v3676 = vmul.f32 %v3644, %v3644
        %v3677 = vmul.f32 %v3645, %v3645
        %v3678 = vmul.f32 %v3646, %v3646
        %v3679 = vmul.f32 %v3647, %v3647
        %v3680 = vmul.f32 %v3648, %v3648
        %v3681 = vmul.f32 %v3649, %v3649
        %v3682 = vmul.f32 %v3650, %v3650
        %v3683 = vmul.f32 %v3651, %v3651
        %v3684 = vmul.f32 %v3652, %v3652
        %v3685 = vmul.f32 %v3653, %v3653
        %v3686 = vmul.f32 %v3654, %v3654
        %v3687 = vmul.f32 %v3655, %v3655
        %v3688 = vmul.f32 %v3656, %v3656
        %v3689 = vmul.f32 %v3657, %v3657
        %v3690 = vmul.f32 %v3658, %v3658
        %v3691 = vmul.f32 %v3659, %v3659
        %v3692 = vmul.f32 %v3660, %v3660
        %v3693 = vmul.f32 %v3661, %v3661
        %v3694 = vmul.f32 %v3662, %v3662
        %v3695 = vmul.f32 %v3663, %v3663
        %v3696 = vmul.f32 %v3664, %v3664
        %v3697 = vmul.f32 %v3665, %v3665
        %v3698 = vmul.f32 %v3666, %v3666
        %v3699 = vmul.f32 %v3667, %v3667
        %3700 = vadd.xlane.f32.xlu0 %v3668
        %v3701 = vpop.xlane.xlu0 %3700
        %3702 = vadd.xlane.f32.xlu0 %v3669
        %v3703 = vpop.xlane.xlu0 %3702
        %3704 = vadd.xlane.f32.xlu0 %v3670
        %v3705 = vpop.xlane.xlu0 %3704
        %3706 = vadd.xlane.f32.xlu0 %v3671
        %v3707 = vpop.xlane.xlu0 %3706
        %3708 = vadd.xlane.f32.xlu0 %v3672
        %v3709 = vpop.xlane.xlu0 %3708
        %3710 = vadd.xlane.f32.xlu0 %v3673
        %v3711 = vpop.xlane.xlu0 %3710
        %3712 = vadd.xlane.f32.xlu0 %v3674
        %v3713 = vpop.xlane.xlu0 %3712
        %3714 = vadd.xlane.f32.xlu0 %v3675
        %v3715 = vpop.xlane.xlu0 %3714
        %3716 = vadd.xlane.f32.xlu0 %v3676
        %v3717 = vpop.xlane.xlu0 %3716
        %3718 = vadd.xlane.f32.xlu0 %v3677
        %v3719 = vpop.xlane.xlu0 %3718
        %3720 = vadd.xlane.f32.xlu0 %v3678
        %v3721 = vpop.xlane.xlu0 %3720
        %3722 = vadd.xlane.f32.xlu0 %v3679
        %v3723 = vpop.xlane.xlu0 %3722
        %3724 = vadd.xlane.f32.xlu0 %v3680
        %v3725 = vpop.xlane.xlu0 %3724
        %3726 = vadd.xlane.f32.xlu0 %v3681
        %v3727 = vpop.xlane.xlu0 %3726
        %3728 = vadd.xlane.f32.xlu0 %v3682
        %v3729 = vpop.xlane.xlu0 %3728
        %3730 = vadd.xlane.f32.xlu0 %v3683
        %v3731 = vpop.xlane.xlu0 %3730
        %3732 = vadd.xlane.f32.xlu0 %v3684
        %v3733 = vpop.xlane.xlu0 %3732
        %3734 = vadd.xlane.f32.xlu0 %v3685
        %v3735 = vpop.xlane.xlu0 %3734
        %3736 = vadd.xlane.f32.xlu0 %v3686
        %v3737 = vpop.xlane.xlu0 %3736
        %3738 = vadd.xlane.f32.xlu0 %v3687
        %v3739 = vpop.xlane.xlu0 %3738
        %3740 = vadd.xlane.f32.xlu0 %v3688
        %v3741 = vpop.xlane.xlu0 %3740
        %3742 = vadd.xlane.f32.xlu0 %v3689
        %v3743 = vpop.xlane.xlu0 %3742
        %3744 = vadd.xlane.f32.xlu0 %v3690
        %v3745 = vpop.xlane.xlu0 %3744
        %3746 = vadd.xlane.f32.xlu0 %v3691
        %v3747 = vpop.xlane.xlu0 %3746
        %3748 = vadd.xlane.f32.xlu0 %v3692
        %v3749 = vpop.xlane.xlu0 %3748
        %3750 = vadd.xlane.f32.xlu0 %v3693
        %v3751 = vpop.xlane.xlu0 %3750
        %3752 = vadd.xlane.f32.xlu0 %v3694
        %v3753 = vpop.xlane.xlu0 %3752
        %3754 = vadd.xlane.f32.xlu0 %v3695
        %v3755 = vpop.xlane.xlu0 %3754
        %3756 = vadd.xlane.f32.xlu0 %v3696
        %v3757 = vpop.xlane.xlu0 %3756
        %3758 = vadd.xlane.f32.xlu0 %v3697
        %v3759 = vpop.xlane.xlu0 %3758
        %3760 = vadd.xlane.f32.xlu0 %v3698
        %v3761 = vpop.xlane.xlu0 %3760
        %3762 = vadd.xlane.f32.xlu0 %v3699
        %v3763 = vpop.xlane.xlu0 %3762
        %v3764 = vmul.f32 %v3701, 0.03125
        %v3765 = vmul.f32 %v3703, 0.03125
        %v3766 = vmul.f32 %v3705, 0.03125
        %v3767 = vmul.f32 %v3707, 0.03125
        %v3768 = vmul.f32 %v3709, 0.03125
        %v3769 = vmul.f32 %v3711, 0.03125
        %v3770 = vmul.f32 %v3713, 0.03125
        %v3771 = vmul.f32 %v3715, 0.03125
        %v3772 = vmul.f32 %v3717, 0.03125
        %v3773 = vmul.f32 %v3719, 0.03125
        %v3774 = vmul.f32 %v3721, 0.03125
        %v3775 = vmul.f32 %v3723, 0.03125
        %v3776 = vmul.f32 %v3725, 0.03125
        %v3777 = vmul.f32 %v3727, 0.03125
        %v3778 = vmul.f32 %v3729, 0.03125
        %v3779 = vmul.f32 %v3731, 0.03125
        %v3780 = vmul.f32 %v3733, 0.03125
        %v3781 = vmul.f32 %v3735, 0.03125
        %v3782 = vmul.f32 %v3737, 0.03125
        %v3783 = vmul.f32 %v3739, 0.03125
        %v3784 = vmul.f32 %v3741, 0.03125
        %v3785 = vmul.f32 %v3743, 0.03125
        %v3786 = vmul.f32 %v3745, 0.03125
        %v3787 = vmul.f32 %v3747, 0.03125
        %v3788 = vmul.f32 %v3749, 0.03125
        %v3789 = vmul.f32 %v3751, 0.03125
        %v3790 = vmul.f32 %v3753, 0.03125
        %v3791 = vmul.f32 %v3755, 0.03125
        %v3792 = vmul.f32 %v3757, 0.03125
        %v3793 = vmul.f32 %v3759, 0.03125
        %v3794 = vmul.f32 %v3761, 0.03125
        %v3795 = vmul.f32 %v3763, 0.03125
        %v3796 = vadd.f32 %v3764, 1e-05
        %v3797 = vadd.f32 %v3765, 1e-05
        %v3798 = vadd.f32 %v3766, 1e-05
        %v3799 = vadd.f32 %v3767, 1e-05
        %v3800 = vadd.f32 %v3768, 1e-05
        %v3801 = vadd.f32 %v3769, 1e-05
        %v3802 = vadd.f32 %v3770, 1e-05
        %v3803 = vadd.f32 %v3771, 1e-05
        %v3804 = vadd.f32 %v3772, 1e-05
        %v3805 = vadd.f32 %v3773, 1e-05
        %v3806 = vadd.f32 %v3774, 1e-05
        %v3807 = vadd.f32 %v3775, 1e-05
        %v3808 = vadd.f32 %v3776, 1e-05
        %v3809 = vadd.f32 %v3777, 1e-05
        %v3810 = vadd.f32 %v3778, 1e-05
        %v3811 = vadd.f32 %v3779, 1e-05
        %v3812 = vadd.f32 %v3780, 1e-05
        %v3813 = vadd.f32 %v3781, 1e-05
        %v3814 = vadd.f32 %v3782, 1e-05
        %v3815 = vadd.f32 %v3783, 1e-05
        %v3816 = vadd.f32 %v3784, 1e-05
        %v3817 = vadd.f32 %v3785, 1e-05
        %v3818 = vadd.f32 %v3786, 1e-05
        %v3819 = vadd.f32 %v3787, 1e-05
        %v3820 = vadd.f32 %v3788, 1e-05
        %v3821 = vadd.f32 %v3789, 1e-05
        %v3822 = vadd.f32 %v3790, 1e-05
        %v3823 = vadd.f32 %v3791, 1e-05
        %v3824 = vadd.f32 %v3792, 1e-05
        %v3825 = vadd.f32 %v3793, 1e-05
        %v3826 = vadd.f32 %v3794, 1e-05
        %v3827 = vadd.f32 %v3795, 1e-05
        %v3828 = vrsqrt.pop %v3796
        %v3829 = vmul.f32 %v3828, %v3796
        %v3830 = vmul.f32 %v3829, %v3828
        %v3831 = vmul.f32 0.5, %v3830
        %v3832 = vsub.f32 1.5, %v3831
        %v3833 = vmul.f32 %v3828, %v3832
        %vm3834 = vweird.f32 %v3796
        %vm3835 = vweird.f32 %v3828
        %vm3836 = vmor %vm3834, %vm3835
        %v3837 = vsel %vm3836, %v3828, %v3833
        %v3838 = vrsqrt.pop %v3797
        %v3839 = vmul.f32 %v3838, %v3797
        %v3840 = vmul.f32 %v3839, %v3838
        %v3841 = vmul.f32 0.5, %v3840
        %v3842 = vsub.f32 1.5, %v3841
        %v3843 = vmul.f32 %v3838, %v3842
        %vm3844 = vweird.f32 %v3797
        %vm3845 = vweird.f32 %v3838
        %vm3846 = vmor %vm3844, %vm3845
        %v3847 = vsel %vm3846, %v3838, %v3843
        %v3848 = vrsqrt.pop %v3798
        %v3849 = vmul.f32 %v3848, %v3798
        %v3850 = vmul.f32 %v3849, %v3848
        %v3851 = vmul.f32 0.5, %v3850
        %v3852 = vsub.f32 1.5, %v3851
        %v3853 = vmul.f32 %v3848, %v3852
        %vm3854 = vweird.f32 %v3798
        %vm3855 = vweird.f32 %v3848
        %vm3856 = vmor %vm3854, %vm3855
        %v3857 = vsel %vm3856, %v3848, %v3853
        %v3858 = vrsqrt.pop %v3799
        %v3859 = vmul.f32 %v3858, %v3799
        %v3860 = vmul.f32 %v3859, %v3858
        %v3861 = vmul.f32 0.5, %v3860
        %v3862 = vsub.f32 1.5, %v3861
        %v3863 = vmul.f32 %v3858, %v3862
        %vm3864 = vweird.f32 %v3799
        %vm3865 = vweird.f32 %v3858
        %vm3866 = vmor %vm3864, %vm3865
        %v3867 = vsel %vm3866, %v3858, %v3863
        %v3868 = vrsqrt.pop %v3800
        %v3869 = vmul.f32 %v3868, %v3800
        %v3870 = vmul.f32 %v3869, %v3868
        %v3871 = vmul.f32 0.5, %v3870
        %v3872 = vsub.f32 1.5, %v3871
        %v3873 = vmul.f32 %v3868, %v3872
        %vm3874 = vweird.f32 %v3800
        %vm3875 = vweird.f32 %v3868
        %vm3876 = vmor %vm3874, %vm3875
        %v3877 = vsel %vm3876, %v3868, %v3873
        %v3878 = vrsqrt.pop %v3801
        %v3879 = vmul.f32 %v3878, %v3801
        %v3880 = vmul.f32 %v3879, %v3878
        %v3881 = vmul.f32 0.5, %v3880
        %v3882 = vsub.f32 1.5, %v3881
        %v3883 = vmul.f32 %v3878, %v3882
        %vm3884 = vweird.f32 %v3801
        %vm3885 = vweird.f32 %v3878
        %vm3886 = vmor %vm3884, %vm3885
        %v3887 = vsel %vm3886, %v3878, %v3883
        %v3888 = vrsqrt.pop %v3802
        %v3889 = vmul.f32 %v3888, %v3802
        %v3890 = vmul.f32 %v3889, %v3888
        %v3891 = vmul.f32 0.5, %v3890
        %v3892 = vsub.f32 1.5, %v3891
        %v3893 = vmul.f32 %v3888, %v3892
        %vm3894 = vweird.f32 %v3802
        %vm3895 = vweird.f32 %v3888
        %vm3896 = vmor %vm3894, %vm3895
        %v3897 = vsel %vm3896, %v3888, %v3893
        %v3898 = vrsqrt.pop %v3803
        %v3899 = vmul.f32 %v3898, %v3803
        %v3900 = vmul.f32 %v3899, %v3898
        %v3901 = vmul.f32 0.5, %v3900
        %v3902 = vsub.f32 1.5, %v3901
        %v3903 = vmul.f32 %v3898, %v3902
        %vm3904 = vweird.f32 %v3803
        %vm3905 = vweird.f32 %v3898
        %vm3906 = vmor %vm3904, %vm3905
        %v3907 = vsel %vm3906, %v3898, %v3903
        %v3908 = vrsqrt.pop %v3804
        %v3909 = vmul.f32 %v3908, %v3804
        %v3910 = vmul.f32 %v3909, %v3908
        %v3911 = vmul.f32 0.5, %v3910
        %v3912 = vsub.f32 1.5, %v3911
        %v3913 = vmul.f32 %v3908, %v3912
        %vm3914 = vweird.f32 %v3804
        %vm3915 = vweird.f32 %v3908
        %vm3916 = vmor %vm3914, %vm3915
        %v3917 = vsel %vm3916, %v3908, %v3913
        %v3918 = vrsqrt.pop %v3805
        %v3919 = vmul.f32 %v3918, %v3805
        %v3920 = vmul.f32 %v3919, %v3918
        %v3921 = vmul.f32 0.5, %v3920
        %v3922 = vsub.f32 1.5, %v3921
        %v3923 = vmul.f32 %v3918, %v3922
        %vm3924 = vweird.f32 %v3805
        %vm3925 = vweird.f32 %v3918
        %vm3926 = vmor %vm3924, %vm3925
        %v3927 = vsel %vm3926, %v3918, %v3923
        %v3928 = vrsqrt.pop %v3806
        %v3929 = vmul.f32 %v3928, %v3806
        %v3930 = vmul.f32 %v3929, %v3928
        %v3931 = vmul.f32 0.5, %v3930
        %v3932 = vsub.f32 1.5, %v3931
        %v3933 = vmul.f32 %v3928, %v3932
        %vm3934 = vweird.f32 %v3806
        %vm3935 = vweird.f32 %v3928
        %vm3936 = vmor %vm3934, %vm3935
        %v3937 = vsel %vm3936, %v3928, %v3933
        %v3938 = vrsqrt.pop %v3807
        %v3939 = vmul.f32 %v3938, %v3807
        %v3940 = vmul.f32 %v3939, %v3938
        %v3941 = vmul.f32 0.5, %v3940
        %v3942 = vsub.f32 1.5, %v3941
        %v3943 = vmul.f32 %v3938, %v3942
        %vm3944 = vweird.f32 %v3807
        %vm3945 = vweird.f32 %v3938
        %vm3946 = vmor %vm3944, %vm3945
        %v3947 = vsel %vm3946, %v3938, %v3943
        %v3948 = vrsqrt.pop %v3808
        %v3949 = vmul.f32 %v3948, %v3808
        %v3950 = vmul.f32 %v3949, %v3948
        %v3951 = vmul.f32 0.5, %v3950
        %v3952 = vsub.f32 1.5, %v3951
        %v3953 = vmul.f32 %v3948, %v3952
        %vm3954 = vweird.f32 %v3808
        %vm3955 = vweird.f32 %v3948
        %vm3956 = vmor %vm3954, %vm3955
        %v3957 = vsel %vm3956, %v3948, %v3953
        %v3958 = vrsqrt.pop %v3809
        %v3959 = vmul.f32 %v3958, %v3809
        %v3960 = vmul.f32 %v3959, %v3958
        %v3961 = vmul.f32 0.5, %v3960
        %v3962 = vsub.f32 1.5, %v3961
        %v3963 = vmul.f32 %v3958, %v3962
        %vm3964 = vweird.f32 %v3809
        %vm3965 = vweird.f32 %v3958
        %vm3966 = vmor %vm3964, %vm3965
        %v3967 = vsel %vm3966, %v3958, %v3963
        %v3968 = vrsqrt.pop %v3810
        %v3969 = vmul.f32 %v3968, %v3810
        %v3970 = vmul.f32 %v3969, %v3968
        %v3971 = vmul.f32 0.5, %v3970
        %v3972 = vsub.f32 1.5, %v3971
        %v3973 = vmul.f32 %v3968, %v3972
        %vm3974 = vweird.f32 %v3810
        %vm3975 = vweird.f32 %v3968
        %vm3976 = vmor %vm3974, %vm3975
        %v3977 = vsel %vm3976, %v3968, %v3973
        %v3978 = vrsqrt.pop %v3811
        %v3979 = vmul.f32 %v3978, %v3811
        %v3980 = vmul.f32 %v3979, %v3978
        %v3981 = vmul.f32 0.5, %v3980
        %v3982 = vsub.f32 1.5, %v3981
        %v3983 = vmul.f32 %v3978, %v3982
        %vm3984 = vweird.f32 %v3811
        %vm3985 = vweird.f32 %v3978
        %vm3986 = vmor %vm3984, %vm3985
        %v3987 = vsel %vm3986, %v3978, %v3983
        %v3988 = vrsqrt.pop %v3812
        %v3989 = vmul.f32 %v3988, %v3812
        %v3990 = vmul.f32 %v3989, %v3988
        %v3991 = vmul.f32 0.5, %v3990
        %v3992 = vsub.f32 1.5, %v3991
        %v3993 = vmul.f32 %v3988, %v3992
        %vm3994 = vweird.f32 %v3812
        %vm3995 = vweird.f32 %v3988
        %vm3996 = vmor %vm3994, %vm3995
        %v3997 = vsel %vm3996, %v3988, %v3993
        %v3998 = vrsqrt.pop %v3813
        %v3999 = vmul.f32 %v3998, %v3813
        %v4000 = vmul.f32 %v3999, %v3998
        %v4001 = vmul.f32 0.5, %v4000
        %v4002 = vsub.f32 1.5, %v4001
        %v4003 = vmul.f32 %v3998, %v4002
        %vm4004 = vweird.f32 %v3813
        %vm4005 = vweird.f32 %v3998
        %vm4006 = vmor %vm4004, %vm4005
        %v4007 = vsel %vm4006, %v3998, %v4003
        %v4008 = vrsqrt.pop %v3814
        %v4009 = vmul.f32 %v4008, %v3814
        %v4010 = vmul.f32 %v4009, %v4008
        %v4011 = vmul.f32 0.5, %v4010
        %v4012 = vsub.f32 1.5, %v4011
        %v4013 = vmul.f32 %v4008, %v4012
        %vm4014 = vweird.f32 %v3814
        %vm4015 = vweird.f32 %v4008
        %vm4016 = vmor %vm4014, %vm4015
        %v4017 = vsel %vm4016, %v4008, %v4013
        %v4018 = vrsqrt.pop %v3815
        %v4019 = vmul.f32 %v4018, %v3815
        %v4020 = vmul.f32 %v4019, %v4018
        %v4021 = vmul.f32 0.5, %v4020
        %v4022 = vsub.f32 1.5, %v4021
        %v4023 = vmul.f32 %v4018, %v4022
        %vm4024 = vweird.f32 %v3815
        %vm4025 = vweird.f32 %v4018
        %vm4026 = vmor %vm4024, %vm4025
        %v4027 = vsel %vm4026, %v4018, %v4023
        %v4028 = vrsqrt.pop %v3816
        %v4029 = vmul.f32 %v4028, %v3816
        %v4030 = vmul.f32 %v4029, %v4028
        %v4031 = vmul.f32 0.5, %v4030
        %v4032 = vsub.f32 1.5, %v4031
        %v4033 = vmul.f32 %v4028, %v4032
        %vm4034 = vweird.f32 %v3816
        %vm4035 = vweird.f32 %v4028
        %vm4036 = vmor %vm4034, %vm4035
        %v4037 = vsel %vm4036, %v4028, %v4033
        %v4038 = vrsqrt.pop %v3817
        %v4039 = vmul.f32 %v4038, %v3817
        %v4040 = vmul.f32 %v4039, %v4038
        %v4041 = vmul.f32 0.5, %v4040
        %v4042 = vsub.f32 1.5, %v4041
        %v4043 = vmul.f32 %v4038, %v4042
        %vm4044 = vweird.f32 %v3817
        %vm4045 = vweird.f32 %v4038
        %vm4046 = vmor %vm4044, %vm4045
        %v4047 = vsel %vm4046, %v4038, %v4043
        %v4048 = vrsqrt.pop %v3818
        %v4049 = vmul.f32 %v4048, %v3818
        %v4050 = vmul.f32 %v4049, %v4048
        %v4051 = vmul.f32 0.5, %v4050
        %v4052 = vsub.f32 1.5, %v4051
        %v4053 = vmul.f32 %v4048, %v4052
        %vm4054 = vweird.f32 %v3818
        %vm4055 = vweird.f32 %v4048
        %vm4056 = vmor %vm4054, %vm4055
        %v4057 = vsel %vm4056, %v4048, %v4053
        %v4058 = vrsqrt.pop %v3819
        %v4059 = vmul.f32 %v4058, %v3819
        %v4060 = vmul.f32 %v4059, %v4058
        %v4061 = vmul.f32 0.5, %v4060
        %v4062 = vsub.f32 1.5, %v4061
        %v4063 = vmul.f32 %v4058, %v4062
        %vm4064 = vweird.f32 %v3819
        %vm4065 = vweird.f32 %v4058
        %vm4066 = vmor %vm4064, %vm4065
        %v4067 = vsel %vm4066, %v4058, %v4063
        %v4068 = vrsqrt.pop %v3820
        %v4069 = vmul.f32 %v4068, %v3820
        %v4070 = vmul.f32 %v4069, %v4068
        %v4071 = vmul.f32 0.5, %v4070
        %v4072 = vsub.f32 1.5, %v4071
        %v4073 = vmul.f32 %v4068, %v4072
        %vm4074 = vweird.f32 %v3820
        %vm4075 = vweird.f32 %v4068
        %vm4076 = vmor %vm4074, %vm4075
        %v4077 = vsel %vm4076, %v4068, %v4073
        %v4078 = vrsqrt.pop %v3821
        %v4079 = vmul.f32 %v4078, %v3821
        %v4080 = vmul.f32 %v4079, %v4078
        %v4081 = vmul.f32 0.5, %v4080
        %v4082 = vsub.f32 1.5, %v4081
        %v4083 = vmul.f32 %v4078, %v4082
        %vm4084 = vweird.f32 %v3821
        %vm4085 = vweird.f32 %v4078
        %vm4086 = vmor %vm4084, %vm4085
        %v4087 = vsel %vm4086, %v4078, %v4083
        %v4088 = vrsqrt.pop %v3822
        %v4089 = vmul.f32 %v4088, %v3822
        %v4090 = vmul.f32 %v4089, %v4088
        %v4091 = vmul.f32 0.5, %v4090
        %v4092 = vsub.f32 1.5, %v4091
        %v4093 = vmul.f32 %v4088, %v4092
        %vm4094 = vweird.f32 %v3822
        %vm4095 = vweird.f32 %v4088
        %vm4096 = vmor %vm4094, %vm4095
        %v4097 = vsel %vm4096, %v4088, %v4093
        %v4098 = vrsqrt.pop %v3823
        %v4099 = vmul.f32 %v4098, %v3823
        %v4100 = vmul.f32 %v4099, %v4098
        %v4101 = vmul.f32 0.5, %v4100
        %v4102 = vsub.f32 1.5, %v4101
        %v4103 = vmul.f32 %v4098, %v4102
        %vm4104 = vweird.f32 %v3823
        %vm4105 = vweird.f32 %v4098
        %vm4106 = vmor %vm4104, %vm4105
        %v4107 = vsel %vm4106, %v4098, %v4103
        %v4108 = vrsqrt.pop %v3824
        %v4109 = vmul.f32 %v4108, %v3824
        %v4110 = vmul.f32 %v4109, %v4108
        %v4111 = vmul.f32 0.5, %v4110
        %v4112 = vsub.f32 1.5, %v4111
        %v4113 = vmul.f32 %v4108, %v4112
        %vm4114 = vweird.f32 %v3824
        %vm4115 = vweird.f32 %v4108
        %vm4116 = vmor %vm4114, %vm4115
        %v4117 = vsel %vm4116, %v4108, %v4113
        %v4118 = vrsqrt.pop %v3825
        %v4119 = vmul.f32 %v4118, %v3825
        %v4120 = vmul.f32 %v4119, %v4118
        %v4121 = vmul.f32 0.5, %v4120
        %v4122 = vsub.f32 1.5, %v4121
        %v4123 = vmul.f32 %v4118, %v4122
        %vm4124 = vweird.f32 %v3825
        %vm4125 = vweird.f32 %v4118
        %vm4126 = vmor %vm4124, %vm4125
        %v4127 = vsel %vm4126, %v4118, %v4123
        %v4128 = vrsqrt.pop %v3826
        %v4129 = vmul.f32 %v4128, %v3826
        %v4130 = vmul.f32 %v4129, %v4128
        %v4131 = vmul.f32 0.5, %v4130
        %v4132 = vsub.f32 1.5, %v4131
        %v4133 = vmul.f32 %v4128, %v4132
        %vm4134 = vweird.f32 %v3826
        %vm4135 = vweird.f32 %v4128
        %vm4136 = vmor %vm4134, %vm4135
        %v4137 = vsel %vm4136, %v4128, %v4133
        %v4138 = vrsqrt.pop %v3827
        %v4139 = vmul.f32 %v4138, %v3827
        %v4140 = vmul.f32 %v4139, %v4138
        %v4141 = vmul.f32 0.5, %v4140
        %v4142 = vsub.f32 1.5, %v4141
        %v4143 = vmul.f32 %v4138, %v4142
        %vm4144 = vweird.f32 %v3827
        %vm4145 = vweird.f32 %v4138
        %vm4146 = vmor %vm4144, %vm4145
        %v4147 = vsel %vm4146, %v4138, %v4143
        %v4148 = vmul.f32 %v3636, %v3837
        %v4149 = vmul.f32 %v3637, %v3847
        %v4150 = vmul.f32 %v3638, %v3857
        %v4151 = vmul.f32 %v3639, %v3867
        %v4152 = vmul.f32 %v3640, %v3877
        %v4153 = vmul.f32 %v3641, %v3887
        %v4154 = vmul.f32 %v3642, %v3897
        %v4155 = vmul.f32 %v3643, %v3907
        %v4156 = vmul.f32 %v3644, %v3917
        %v4157 = vmul.f32 %v3645, %v3927
        %v4158 = vmul.f32 %v3646, %v3937
        %v4159 = vmul.f32 %v3647, %v3947
        %v4160 = vmul.f32 %v3648, %v3957
        %v4161 = vmul.f32 %v3649, %v3967
        %v4162 = vmul.f32 %v3650, %v3977
        %v4163 = vmul.f32 %v3651, %v3987
        %v4164 = vmul.f32 %v3652, %v3997
        %v4165 = vmul.f32 %v3653, %v4007
        %v4166 = vmul.f32 %v3654, %v4017
        %v4167 = vmul.f32 %v3655, %v4027
        %v4168 = vmul.f32 %v3656, %v4037
        %v4169 = vmul.f32 %v3657, %v4047
        %v4170 = vmul.f32 %v3658, %v4057
        %v4171 = vmul.f32 %v3659, %v4067
        %v4172 = vmul.f32 %v3660, %v4077
        %v4173 = vmul.f32 %v3661, %v4087
        %v4174 = vmul.f32 %v3662, %v4097
        %v4175 = vmul.f32 %v3663, %v4107
        %v4176 = vmul.f32 %v3664, %v4117
        %v4177 = vmul.f32 %v3665, %v4127
        %v4178 = vmul.f32 %v3666, %v4137
        %v4179 = vmul.f32 %v3667, %v4147
        %v4180 = vperm.slane %v3506, 0
        %v4181 = vmul.f32 %v4148, %v4180
        %v4182 = vmul.f32 %v4149, %v4180
        %v4183 = vmul.f32 %v4150, %v4180
        %v4184 = vmul.f32 %v4151, %v4180
        %v4185 = vmul.f32 %v4152, %v4180
        %v4186 = vmul.f32 %v4153, %v4180
        %v4187 = vmul.f32 %v4154, %v4180
        %v4188 = vmul.f32 %v4155, %v4180
        %v4189 = vmul.f32 %v4156, %v4180
        %v4190 = vmul.f32 %v4157, %v4180
        %v4191 = vmul.f32 %v4158, %v4180
        %v4192 = vmul.f32 %v4159, %v4180
        %v4193 = vmul.f32 %v4160, %v4180
        %v4194 = vmul.f32 %v4161, %v4180
        %v4195 = vmul.f32 %v4162, %v4180
        %v4196 = vmul.f32 %v4163, %v4180
        %v4197 = vmul.f32 %v4164, %v4180
        %v4198 = vmul.f32 %v4165, %v4180
        %v4199 = vmul.f32 %v4166, %v4180
        %v4200 = vmul.f32 %v4167, %v4180
        %v4201 = vmul.f32 %v4168, %v4180
        %v4202 = vmul.f32 %v4169, %v4180
        %v4203 = vmul.f32 %v4170, %v4180
        %v4204 = vmul.f32 %v4171, %v4180
        %v4205 = vmul.f32 %v4172, %v4180
        %v4206 = vmul.f32 %v4173, %v4180
        %v4207 = vmul.f32 %v4174, %v4180
        %v4208 = vmul.f32 %v4175, %v4180
        %v4209 = vmul.f32 %v4176, %v4180
        %v4210 = vmul.f32 %v4177, %v4180
        %v4211 = vmul.f32 %v4178, %v4180
        %v4212 = vmul.f32 %v4179, %v4180
        %v4213 = vperm.slane %v3507, 0
        %v4214 = vadd.f32 %v4181, %v4213
        %v4215 = vadd.f32 %v4182, %v4213
        %v4216 = vadd.f32 %v4183, %v4213
        %v4217 = vadd.f32 %v4184, %v4213
        %v4218 = vadd.f32 %v4185, %v4213
        %v4219 = vadd.f32 %v4186, %v4213
        %v4220 = vadd.f32 %v4187, %v4213
        %v4221 = vadd.f32 %v4188, %v4213
        %v4222 = vadd.f32 %v4189, %v4213
        %v4223 = vadd.f32 %v4190, %v4213
        %v4224 = vadd.f32 %v4191, %v4213
        %v4225 = vadd.f32 %v4192, %v4213
        %v4226 = vadd.f32 %v4193, %v4213
        %v4227 = vadd.f32 %v4194, %v4213
        %v4228 = vadd.f32 %v4195, %v4213
        %v4229 = vadd.f32 %v4196, %v4213
        %v4230 = vadd.f32 %v4197, %v4213
        %v4231 = vadd.f32 %v4198, %v4213
        %v4232 = vadd.f32 %v4199, %v4213
        %v4233 = vadd.f32 %v4200, %v4213
        %v4234 = vadd.f32 %v4201, %v4213
        %v4235 = vadd.f32 %v4202, %v4213
        %v4236 = vadd.f32 %v4203, %v4213
        %v4237 = vadd.f32 %v4204, %v4213
        %v4238 = vadd.f32 %v4205, %v4213
        %v4239 = vadd.f32 %v4206, %v4213
        %v4240 = vadd.f32 %v4207, %v4213
        %v4241 = vadd.f32 %v4208, %v4213
        %v4242 = vadd.f32 %v4209, %v4213
        %v4243 = vadd.f32 %v4210, %v4213
        %v4244 = vadd.f32 %v4211, %v4213
        %v4245 = vadd.f32 %v4212, %v4213
        %v4246 = vpack.c.bf16 %v4215, %v4214
        %v4247 = vpack.c.bf16 %v4217, %v4216
        %v4248 = vpack.c.bf16 %v4219, %v4218
        %v4249 = vpack.c.bf16 %v4221, %v4220
        %v4250 = vpack.c.bf16 %v4223, %v4222
        %v4251 = vpack.c.bf16 %v4225, %v4224
        %v4252 = vpack.c.bf16 %v4227, %v4226
        %v4253 = vpack.c.bf16 %v4229, %v4228
        %v4254 = vpack.c.bf16 %v4231, %v4230
        %v4255 = vpack.c.bf16 %v4233, %v4232
        %v4256 = vpack.c.bf16 %v4235, %v4234
        %v4257 = vpack.c.bf16 %v4237, %v4236
        %v4258 = vpack.c.bf16 %v4239, %v4238
        %v4259 = vpack.c.bf16 %v4241, %v4240
        %v4260 = vpack.c.bf16 %v4243, %v4242
        %v4261 = vpack.c.bf16 %v4245, %v4244
        %s4262 = scalar_lea.vmem %s1, 192
        %v4263 = vld [vmem:[%s4262] sm:$0xf]
        %v4264 = vld [vmem:[%s4262 + $0x4] sm:$0xf]
        %v4265 = vld [vmem:[%s4262 + $0x8] sm:$0xf]
        %v4266 = vld [vmem:[%s4262 + $0xc] sm:$0xf]
        %v4267 = vld [vmem:[%s4262 + $0x10] sm:$0xf]
        %v4268 = vld [vmem:[%s4262 + $0x14] sm:$0xf]
        %v4269 = vld [vmem:[%s4262 + $0x18] sm:$0xf]
        %v4270 = vld [vmem:[%s4262 + $0x1c] sm:$0xf]
        %v4271 = vld [vmem:[%s4262 + $0x20] sm:$0xf]
        %v4272 = vld [vmem:[%s4262 + $0x24] sm:$0xf]
        %v4273 = vld [vmem:[%s4262 + $0x28] sm:$0xf]
        %v4274 = vld [vmem:[%s4262 + $0x2c] sm:$0xf]
        %v4275 = vld [vmem:[%s4262 + $0x30] sm:$0xf]
        %v4276 = vld [vmem:[%s4262 + $0x34] sm:$0xf]
        %v4277 = vld [vmem:[%s4262 + $0x38] sm:$0xf]
        %v4278 = vld [vmem:[%s4262 + $0x3c] sm:$0xf]
        %v4295 = vunpack.c.l.b16 %v4263
        %v4296 = vunpack.c.l.b16 %v4264
        %v4297 = vunpack.c.l.b16 %v4265
        %v4298 = vunpack.c.l.b16 %v4266
        %v4299 = vunpack.c.l.b16 %v4267
        %v4300 = vunpack.c.l.b16 %v4268
        %v4301 = vunpack.c.l.b16 %v4269
        %v4302 = vunpack.c.l.b16 %v4270
        %v4303 = vunpack.c.l.b16 %v4271
        %v4304 = vunpack.c.l.b16 %v4272
        %v4305 = vunpack.c.l.b16 %v4273
        %v4306 = vunpack.c.l.b16 %v4274
        %v4307 = vunpack.c.l.b16 %v4275
        %v4308 = vunpack.c.l.b16 %v4276
        %v4309 = vunpack.c.l.b16 %v4277
        %v4310 = vunpack.c.l.b16 %v4278
        %v4311 = vpack.c.b16 %v4296, %v4295
        %v4312 = vpack.c.b16 %v4298, %v4297
        %v4313 = vpack.c.b16 %v4300, %v4299
        %v4314 = vpack.c.b16 %v4302, %v4301
        %v4315 = vpack.c.b16 %v4304, %v4303
        %v4316 = vpack.c.b16 %v4306, %v4305
        %v4317 = vpack.c.b16 %v4308, %v4307
        %v4318 = vpack.c.b16 %v4310, %v4309
        %4327 = vmatpush.bf16.msra.mxu0 %v4318
        %4328 = vmatpush.bf16.msra.mxu0 %v4317
        %4329 = vmatpush.bf16.msra.mxu0 %v4316
        %4330 = vmatpush.bf16.msra.mxu0 %v4315
        %4331 = vmatpush.bf16.msra.mxu0 %v4314
        %4332 = vmatpush.bf16.msra.mxu0 %v4313
        %4333 = vmatpush.bf16.msra.mxu0 %v4312
        %4334 = vmatpush.bf16.msra.mxu0 %v4311
        %4335 = vmatmul.bf16.gmra.mxu0 %v4246
        %v4336 = vpop.f32.mrf.mxu0
        %v4337 = vadd.f32 0.0, %v4336
        %v4338 = vpop.f32.mrf.mxu0
        %v4339 = vadd.f32 0.0, %v4338
        %4340 = vmatmul.bf16.gmra.mxu0 %v4247
        %v4341 = vpop.f32.mrf.mxu0
        %v4342 = vadd.f32 0.0, %v4341
        %v4343 = vpop.f32.mrf.mxu0
        %v4344 = vadd.f32 0.0, %v4343
        %4345 = vmatmul.bf16.gmra.mxu0 %v4248
        %v4346 = vpop.f32.mrf.mxu0
        %v4347 = vadd.f32 0.0, %v4346
        %v4348 = vpop.f32.mrf.mxu0
        %v4349 = vadd.f32 0.0, %v4348
        %4350 = vmatmul.bf16.gmra.mxu0 %v4249
        %v4351 = vpop.f32.mrf.mxu0
        %v4352 = vadd.f32 0.0, %v4351
        %v4353 = vpop.f32.mrf.mxu0
        %v4354 = vadd.f32 0.0, %v4353
        %4355 = vmatmul.bf16.gmra.mxu0 %v4250
        %v4356 = vpop.f32.mrf.mxu0
        %v4357 = vadd.f32 0.0, %v4356
        %v4358 = vpop.f32.mrf.mxu0
        %v4359 = vadd.f32 0.0, %v4358
        %4360 = vmatmul.bf16.gmra.mxu0 %v4251
        %v4361 = vpop.f32.mrf.mxu0
        %v4362 = vadd.f32 0.0, %v4361
        %v4363 = vpop.f32.mrf.mxu0
        %v4364 = vadd.f32 0.0, %v4363
        %4365 = vmatmul.bf16.gmra.mxu0 %v4252
        %v4366 = vpop.f32.mrf.mxu0
        %v4367 = vadd.f32 0.0, %v4366
        %v4368 = vpop.f32.mrf.mxu0
        %v4369 = vadd.f32 0.0, %v4368
        %4370 = vmatmul.bf16.gmra.mxu0 %v4253
        %v4371 = vpop.f32.mrf.mxu0
        %v4372 = vadd.f32 0.0, %v4371
        %v4373 = vpop.f32.mrf.mxu0
        %v4374 = vadd.f32 0.0, %v4373
        %4375 = vmatmul.bf16.gmra.mxu0 %v4254
        %v4376 = vpop.f32.mrf.mxu0
        %v4377 = vadd.f32 0.0, %v4376
        %v4378 = vpop.f32.mrf.mxu0
        %v4379 = vadd.f32 0.0, %v4378
        %4380 = vmatmul.bf16.gmra.mxu0 %v4255
        %v4381 = vpop.f32.mrf.mxu0
        %v4382 = vadd.f32 0.0, %v4381
        %v4383 = vpop.f32.mrf.mxu0
        %v4384 = vadd.f32 0.0, %v4383
        %4385 = vmatmul.bf16.gmra.mxu0 %v4256
        %v4386 = vpop.f32.mrf.mxu0
        %v4387 = vadd.f32 0.0, %v4386
        %v4388 = vpop.f32.mrf.mxu0
        %v4389 = vadd.f32 0.0, %v4388
        %4390 = vmatmul.bf16.gmra.mxu0 %v4257
        %v4391 = vpop.f32.mrf.mxu0
        %v4392 = vadd.f32 0.0, %v4391
        %v4393 = vpop.f32.mrf.mxu0
        %v4394 = vadd.f32 0.0, %v4393
        %4395 = vmatmul.bf16.gmra.mxu0 %v4258
        %v4396 = vpop.f32.mrf.mxu0
        %v4397 = vadd.f32 0.0, %v4396
        %v4398 = vpop.f32.mrf.mxu0
        %v4399 = vadd.f32 0.0, %v4398
        %4400 = vmatmul.bf16.gmra.mxu0 %v4259
        %v4401 = vpop.f32.mrf.mxu0
        %v4402 = vadd.f32 0.0, %v4401
        %v4403 = vpop.f32.mrf.mxu0
        %v4404 = vadd.f32 0.0, %v4403
        %4405 = vmatmul.bf16.gmra.mxu0 %v4260
        %v4406 = vpop.f32.mrf.mxu0
        %v4407 = vadd.f32 0.0, %v4406
        %v4408 = vpop.f32.mrf.mxu0
        %v4409 = vadd.f32 0.0, %v4408
        %4410 = vmatmul.bf16.gmra.mxu0 %v4261
        %v4411 = vpop.f32.mrf.mxu0
        %v4412 = vadd.f32 0.0, %v4411
        %v4413 = vpop.f32.mrf.mxu0
        %v4414 = vadd.f32 0.0, %v4413
        %4415 = vdwg.mxu0
        %v4416 = vxor.u32 %v4337, 2147483648
        %v4417 = vxor.u32 %v4339, 2147483648
        %v4418 = vxor.u32 %v4342, 2147483648
        %v4419 = vxor.u32 %v4344, 2147483648
        %v4420 = vxor.u32 %v4347, 2147483648
        %v4421 = vxor.u32 %v4349, 2147483648
        %v4422 = vxor.u32 %v4352, 2147483648
        %v4423 = vxor.u32 %v4354, 2147483648
        %v4424 = vxor.u32 %v4357, 2147483648
        %v4425 = vxor.u32 %v4359, 2147483648
        %v4426 = vxor.u32 %v4362, 2147483648
        %v4427 = vxor.u32 %v4364, 2147483648
        %v4428 = vxor.u32 %v4367, 2147483648
        %v4429 = vxor.u32 %v4369, 2147483648
        %v4430 = vxor.u32 %v4372, 2147483648
        %v4431 = vxor.u32 %v4374, 2147483648
        %v4432 = vxor.u32 %v4377, 2147483648
        %v4433 = vxor.u32 %v4379, 2147483648
        %v4434 = vxor.u32 %v4382, 2147483648
        %v4435 = vxor.u32 %v4384, 2147483648
        %v4436 = vxor.u32 %v4387, 2147483648
        %v4437 = vxor.u32 %v4389, 2147483648
        %v4438 = vxor.u32 %v4392, 2147483648
        %v4439 = vxor.u32 %v4394, 2147483648
        %v4440 = vxor.u32 %v4397, 2147483648
        %v4441 = vxor.u32 %v4399, 2147483648
        %v4442 = vxor.u32 %v4402, 2147483648
        %v4443 = vxor.u32 %v4404, 2147483648
        %v4444 = vxor.u32 %v4407, 2147483648
        %v4445 = vxor.u32 %v4409, 2147483648
        %v4446 = vxor.u32 %v4412, 2147483648
        %v4447 = vxor.u32 %v4414, 2147483648
        %v4448 = vmul.f32 %v4416, 1.442695
        %v4449 = vpow.pop %v4448
        %v4450 = vmul.f32 %v4417, 1.442695
        %v4451 = vpow.pop %v4450
        %v4452 = vmul.f32 %v4418, 1.442695
        %v4453 = vpow.pop %v4452
        %v4454 = vmul.f32 %v4419, 1.442695
        %v4455 = vpow.pop %v4454
        %v4456 = vmul.f32 %v4420, 1.442695
        %v4457 = vpow.pop %v4456
        %v4458 = vmul.f32 %v4421, 1.442695
        %v4459 = vpow.pop %v4458
        %v4460 = vmul.f32 %v4422, 1.442695
        %v4461 = vpow.pop %v4460
        %v4462 = vmul.f32 %v4423, 1.442695
        %v4463 = vpow.pop %v4462
        %v4464 = vmul.f32 %v4424, 1.442695
        %v4465 = vpow.pop %v4464
        %v4466 = vmul.f32 %v4425, 1.442695
        %v4467 = vpow.pop %v4466
        %v4468 = vmul.f32 %v4426, 1.442695
        %v4469 = vpow.pop %v4468
        %v4470 = vmul.f32 %v4427, 1.442695
        %v4471 = vpow.pop %v4470
        %v4472 = vmul.f32 %v4428, 1.442695
        %v4473 = vpow.pop %v4472
        %v4474 = vmul.f32 %v4429, 1.442695
        %v4475 = vpow.pop %v4474
        %v4476 = vmul.f32 %v4430, 1.442695
        %v4477 = vpow.pop %v4476
        %v4478 = vmul.f32 %v4431, 1.442695
        %v4479 = vpow.pop %v4478
        %v4480 = vmul.f32 %v4432, 1.442695
        %v4481 = vpow.pop %v4480
        %v4482 = vmul.f32 %v4433, 1.442695
        %v4483 = vpow.pop %v4482
        %v4484 = vmul.f32 %v4434, 1.442695
        %v4485 = vpow.pop %v4484
        %v4486 = vmul.f32 %v4435, 1.442695
        %v4487 = vpow.pop %v4486
        %v4488 = vmul.f32 %v4436, 1.442695
        %v4489 = vpow.pop %v4488
        %v4490 = vmul.f32 %v4437, 1.442695
        %v4491 = vpow.pop %v4490
        %v4492 = vmul.f32 %v4438, 1.442695
        %v4493 = vpow.pop %v4492
        %v4494 = vmul.f32 %v4439, 1.442695
        %v4495 = vpow.pop %v4494
        %v4496 = vmul.f32 %v4440, 1.442695
        %v4497 = vpow.pop %v4496
        %v4498 = vmul.f32 %v4441, 1.442695
        %v4499 = vpow.pop %v4498
        %v4500 = vmul.f32 %v4442, 1.442695
        %v4501 = vpow.pop %v4500
        %v4502 = vmul.f32 %v4443, 1.442695
        %v4503 = vpow.pop %v4502
        %v4504 = vmul.f32 %v4444, 1.442695
        %v4505 = vpow.pop %v4504
        %v4506 = vmul.f32 %v4445, 1.442695
        %v4507 = vpow.pop %v4506
        %v4508 = vmul.f32 %v4446, 1.442695
        %v4509 = vpow.pop %v4508
        %v4510 = vmul.f32 %v4447, 1.442695
        %v4511 = vpow.pop %v4510
        %v4512 = vadd.f32 %v4449, 1.0
        %v4513 = vadd.f32 %v4451, 1.0
        %v4514 = vadd.f32 %v4453, 1.0
        %v4515 = vadd.f32 %v4455, 1.0
        %v4516 = vadd.f32 %v4457, 1.0
        %v4517 = vadd.f32 %v4459, 1.0
        %v4518 = vadd.f32 %v4461, 1.0
        %v4519 = vadd.f32 %v4463, 1.0
        %v4520 = vadd.f32 %v4465, 1.0
        %v4521 = vadd.f32 %v4467, 1.0
        %v4522 = vadd.f32 %v4469, 1.0
        %v4523 = vadd.f32 %v4471, 1.0
        %v4524 = vadd.f32 %v4473, 1.0
        %v4525 = vadd.f32 %v4475, 1.0
        %v4526 = vadd.f32 %v4477, 1.0
        %v4527 = vadd.f32 %v4479, 1.0
        %v4528 = vadd.f32 %v4481, 1.0
        %v4529 = vadd.f32 %v4483, 1.0
        %v4530 = vadd.f32 %v4485, 1.0
        %v4531 = vadd.f32 %v4487, 1.0
        %v4532 = vadd.f32 %v4489, 1.0
        %v4533 = vadd.f32 %v4491, 1.0
        %v4534 = vadd.f32 %v4493, 1.0
        %v4535 = vadd.f32 %v4495, 1.0
        %v4536 = vadd.f32 %v4497, 1.0
        %v4537 = vadd.f32 %v4499, 1.0
        %v4538 = vadd.f32 %v4501, 1.0
        %v4539 = vadd.f32 %v4503, 1.0
        %v4540 = vadd.f32 %v4505, 1.0
        %v4541 = vadd.f32 %v4507, 1.0
        %v4542 = vadd.f32 %v4509, 1.0
        %v4543 = vadd.f32 %v4511, 1.0
        %v4544 = vrcp.pop %v4512
        %v4545 = vmul.f32 %v4512, %v4544
        %v4546 = vsub.f32 1.0, %v4545
        %v4547 = vmul.f32 %v4544, %v4546
        %v4548 = vadd.f32 %v4544, %v4547
        %vm4549 = vweird.f32 %v4512
        %vm4550 = vweird.f32 %v4544
        %vm4551 = vmor %vm4549, %vm4550
        %v4552 = vsel %vm4551, %v4544, %v4548
        %v4553 = vand.u32 2147483647, %v4512
        %vm4554 = vcmp.eq.f32.partialorder %v4553, 8.507059e+37
        %v4555 = vand.u32 %v4512, 2147483648
        %v4556 = vor.u32 1.1754944e-38, %v4555
        %v4557 = vsel %vm4554, %v4556, %v4552
        %v4558 = vmul.f32 1.0, %v4557
        %v4559 = vrcp.pop %v4513
        %v4560 = vmul.f32 %v4513, %v4559
        %v4561 = vsub.f32 1.0, %v4560
        %v4562 = vmul.f32 %v4559, %v4561
        %v4563 = vadd.f32 %v4559, %v4562
        %vm4564 = vweird.f32 %v4513
        %vm4565 = vweird.f32 %v4559
        %vm4566 = vmor %vm4564, %vm4565
        %v4567 = vsel %vm4566, %v4559, %v4563
        %v4568 = vand.u32 2147483647, %v4513
        %vm4569 = vcmp.eq.f32.partialorder %v4568, 8.507059e+37
        %v4570 = vand.u32 %v4513, 2147483648
        %v4571 = vor.u32 1.1754944e-38, %v4570
        %v4572 = vsel %vm4569, %v4571, %v4567
        %v4573 = vmul.f32 1.0, %v4572
        %v4574 = vrcp.pop %v4514
        %v4575 = vmul.f32 %v4514, %v4574
        %v4576 = vsub.f32 1.0, %v4575
        %v4577 = vmul.f32 %v4574, %v4576
        %v4578 = vadd.f32 %v4574, %v4577
        %vm4579 = vweird.f32 %v4514
        %vm4580 = vweird.f32 %v4574
        %vm4581 = vmor %vm4579, %vm4580
        %v4582 = vsel %vm4581, %v4574, %v4578
        %v4583 = vand.u32 2147483647, %v4514
        %vm4584 = vcmp.eq.f32.partialorder %v4583, 8.507059e+37
        %v4585 = vand.u32 %v4514, 2147483648
        %v4586 = vor.u32 1.1754944e-38, %v4585
        %v4587 = vsel %vm4584, %v4586, %v4582
        %v4588 = vmul.f32 1.0, %v4587
        %v4589 = vrcp.pop %v4515
        %v4590 = vmul.f32 %v4515, %v4589
        %v4591 = vsub.f32 1.0, %v4590
        %v4592 = vmul.f32 %v4589, %v4591
        %v4593 = vadd.f32 %v4589, %v4592
        %vm4594 = vweird.f32 %v4515
        %vm4595 = vweird.f32 %v4589
        %vm4596 = vmor %vm4594, %vm4595
        %v4597 = vsel %vm4596, %v4589, %v4593
        %v4598 = vand.u32 2147483647, %v4515
        %vm4599 = vcmp.eq.f32.partialorder %v4598, 8.507059e+37
        %v4600 = vand.u32 %v4515, 2147483648
        %v4601 = vor.u32 1.1754944e-38, %v4600
        %v4602 = vsel %vm4599, %v4601, %v4597
        %v4603 = vmul.f32 1.0, %v4602
        %v4604 = vrcp.pop %v4516
        %v4605 = vmul.f32 %v4516, %v4604
        %v4606 = vsub.f32 1.0, %v4605
        %v4607 = vmul.f32 %v4604, %v4606
        %v4608 = vadd.f32 %v4604, %v4607
        %vm4609 = vweird.f32 %v4516
        %vm4610 = vweird.f32 %v4604
        %vm4611 = vmor %vm4609, %vm4610
        %v4612 = vsel %vm4611, %v4604, %v4608
        %v4613 = vand.u32 2147483647, %v4516
        %vm4614 = vcmp.eq.f32.partialorder %v4613, 8.507059e+37
        %v4615 = vand.u32 %v4516, 2147483648
        %v4616 = vor.u32 1.1754944e-38, %v4615
        %v4617 = vsel %vm4614, %v4616, %v4612
        %v4618 = vmul.f32 1.0, %v4617
        %v4619 = vrcp.pop %v4517
        %v4620 = vmul.f32 %v4517, %v4619
        %v4621 = vsub.f32 1.0, %v4620
        %v4622 = vmul.f32 %v4619, %v4621
        %v4623 = vadd.f32 %v4619, %v4622
        %vm4624 = vweird.f32 %v4517
        %vm4625 = vweird.f32 %v4619
        %vm4626 = vmor %vm4624, %vm4625
        %v4627 = vsel %vm4626, %v4619, %v4623
        %v4628 = vand.u32 2147483647, %v4517
        %vm4629 = vcmp.eq.f32.partialorder %v4628, 8.507059e+37
        %v4630 = vand.u32 %v4517, 2147483648
        %v4631 = vor.u32 1.1754944e-38, %v4630
        %v4632 = vsel %vm4629, %v4631, %v4627
        %v4633 = vmul.f32 1.0, %v4632
        %v4634 = vrcp.pop %v4518
        %v4635 = vmul.f32 %v4518, %v4634
        %v4636 = vsub.f32 1.0, %v4635
        %v4637 = vmul.f32 %v4634, %v4636
        %v4638 = vadd.f32 %v4634, %v4637
        %vm4639 = vweird.f32 %v4518
        %vm4640 = vweird.f32 %v4634
        %vm4641 = vmor %vm4639, %vm4640
        %v4642 = vsel %vm4641, %v4634, %v4638
        %v4643 = vand.u32 2147483647, %v4518
        %vm4644 = vcmp.eq.f32.partialorder %v4643, 8.507059e+37
        %v4645 = vand.u32 %v4518, 2147483648
        %v4646 = vor.u32 1.1754944e-38, %v4645
        %v4647 = vsel %vm4644, %v4646, %v4642
        %v4648 = vmul.f32 1.0, %v4647
        %v4649 = vrcp.pop %v4519
        %v4650 = vmul.f32 %v4519, %v4649
        %v4651 = vsub.f32 1.0, %v4650
        %v4652 = vmul.f32 %v4649, %v4651
        %v4653 = vadd.f32 %v4649, %v4652
        %vm4654 = vweird.f32 %v4519
        %vm4655 = vweird.f32 %v4649
        %vm4656 = vmor %vm4654, %vm4655
        %v4657 = vsel %vm4656, %v4649, %v4653
        %v4658 = vand.u32 2147483647, %v4519
        %vm4659 = vcmp.eq.f32.partialorder %v4658, 8.507059e+37
        %v4660 = vand.u32 %v4519, 2147483648
        %v4661 = vor.u32 1.1754944e-38, %v4660
        %v4662 = vsel %vm4659, %v4661, %v4657
        %v4663 = vmul.f32 1.0, %v4662
        %v4664 = vrcp.pop %v4520
        %v4665 = vmul.f32 %v4520, %v4664
        %v4666 = vsub.f32 1.0, %v4665
        %v4667 = vmul.f32 %v4664, %v4666
        %v4668 = vadd.f32 %v4664, %v4667
        %vm4669 = vweird.f32 %v4520
        %vm4670 = vweird.f32 %v4664
        %vm4671 = vmor %vm4669, %vm4670
        %v4672 = vsel %vm4671, %v4664, %v4668
        %v4673 = vand.u32 2147483647, %v4520
        %vm4674 = vcmp.eq.f32.partialorder %v4673, 8.507059e+37
        %v4675 = vand.u32 %v4520, 2147483648
        %v4676 = vor.u32 1.1754944e-38, %v4675
        %v4677 = vsel %vm4674, %v4676, %v4672
        %v4678 = vmul.f32 1.0, %v4677
        %v4679 = vrcp.pop %v4521
        %v4680 = vmul.f32 %v4521, %v4679
        %v4681 = vsub.f32 1.0, %v4680
        %v4682 = vmul.f32 %v4679, %v4681
        %v4683 = vadd.f32 %v4679, %v4682
        %vm4684 = vweird.f32 %v4521
        %vm4685 = vweird.f32 %v4679
        %vm4686 = vmor %vm4684, %vm4685
        %v4687 = vsel %vm4686, %v4679, %v4683
        %v4688 = vand.u32 2147483647, %v4521
        %vm4689 = vcmp.eq.f32.partialorder %v4688, 8.507059e+37
        %v4690 = vand.u32 %v4521, 2147483648
        %v4691 = vor.u32 1.1754944e-38, %v4690
        %v4692 = vsel %vm4689, %v4691, %v4687
        %v4693 = vmul.f32 1.0, %v4692
        %v4694 = vrcp.pop %v4522
        %v4695 = vmul.f32 %v4522, %v4694
        %v4696 = vsub.f32 1.0, %v4695
        %v4697 = vmul.f32 %v4694, %v4696
        %v4698 = vadd.f32 %v4694, %v4697
        %vm4699 = vweird.f32 %v4522
        %vm4700 = vweird.f32 %v4694
        %vm4701 = vmor %vm4699, %vm4700
        %v4702 = vsel %vm4701, %v4694, %v4698
        %v4703 = vand.u32 2147483647, %v4522
        %vm4704 = vcmp.eq.f32.partialorder %v4703, 8.507059e+37
        %v4705 = vand.u32 %v4522, 2147483648
        %v4706 = vor.u32 1.1754944e-38, %v4705
        %v4707 = vsel %vm4704, %v4706, %v4702
        %v4708 = vmul.f32 1.0, %v4707
        %v4709 = vrcp.pop %v4523
        %v4710 = vmul.f32 %v4523, %v4709
        %v4711 = vsub.f32 1.0, %v4710
        %v4712 = vmul.f32 %v4709, %v4711
        %v4713 = vadd.f32 %v4709, %v4712
        %vm4714 = vweird.f32 %v4523
        %vm4715 = vweird.f32 %v4709
        %vm4716 = vmor %vm4714, %vm4715
        %v4717 = vsel %vm4716, %v4709, %v4713
        %v4718 = vand.u32 2147483647, %v4523
        %vm4719 = vcmp.eq.f32.partialorder %v4718, 8.507059e+37
        %v4720 = vand.u32 %v4523, 2147483648
        %v4721 = vor.u32 1.1754944e-38, %v4720
        %v4722 = vsel %vm4719, %v4721, %v4717
        %v4723 = vmul.f32 1.0, %v4722
        %v4724 = vrcp.pop %v4524
        %v4725 = vmul.f32 %v4524, %v4724
        %v4726 = vsub.f32 1.0, %v4725
        %v4727 = vmul.f32 %v4724, %v4726
        %v4728 = vadd.f32 %v4724, %v4727
        %vm4729 = vweird.f32 %v4524
        %vm4730 = vweird.f32 %v4724
        %vm4731 = vmor %vm4729, %vm4730
        %v4732 = vsel %vm4731, %v4724, %v4728
        %v4733 = vand.u32 2147483647, %v4524
        %vm4734 = vcmp.eq.f32.partialorder %v4733, 8.507059e+37
        %v4735 = vand.u32 %v4524, 2147483648
        %v4736 = vor.u32 1.1754944e-38, %v4735
        %v4737 = vsel %vm4734, %v4736, %v4732
        %v4738 = vmul.f32 1.0, %v4737
        %v4739 = vrcp.pop %v4525
        %v4740 = vmul.f32 %v4525, %v4739
        %v4741 = vsub.f32 1.0, %v4740
        %v4742 = vmul.f32 %v4739, %v4741
        %v4743 = vadd.f32 %v4739, %v4742
        %vm4744 = vweird.f32 %v4525
        %vm4745 = vweird.f32 %v4739
        %vm4746 = vmor %vm4744, %vm4745
        %v4747 = vsel %vm4746, %v4739, %v4743
        %v4748 = vand.u32 2147483647, %v4525
        %vm4749 = vcmp.eq.f32.partialorder %v4748, 8.507059e+37
        %v4750 = vand.u32 %v4525, 2147483648
        %v4751 = vor.u32 1.1754944e-38, %v4750
        %v4752 = vsel %vm4749, %v4751, %v4747
        %v4753 = vmul.f32 1.0, %v4752
        %v4754 = vrcp.pop %v4526
        %v4755 = vmul.f32 %v4526, %v4754
        %v4756 = vsub.f32 1.0, %v4755
        %v4757 = vmul.f32 %v4754, %v4756
        %v4758 = vadd.f32 %v4754, %v4757
        %vm4759 = vweird.f32 %v4526
        %vm4760 = vweird.f32 %v4754
        %vm4761 = vmor %vm4759, %vm4760
        %v4762 = vsel %vm4761, %v4754, %v4758
        %v4763 = vand.u32 2147483647, %v4526
        %vm4764 = vcmp.eq.f32.partialorder %v4763, 8.507059e+37
        %v4765 = vand.u32 %v4526, 2147483648
        %v4766 = vor.u32 1.1754944e-38, %v4765
        %v4767 = vsel %vm4764, %v4766, %v4762
        %v4768 = vmul.f32 1.0, %v4767
        %v4769 = vrcp.pop %v4527
        %v4770 = vmul.f32 %v4527, %v4769
        %v4771 = vsub.f32 1.0, %v4770
        %v4772 = vmul.f32 %v4769, %v4771
        %v4773 = vadd.f32 %v4769, %v4772
        %vm4774 = vweird.f32 %v4527
        %vm4775 = vweird.f32 %v4769
        %vm4776 = vmor %vm4774, %vm4775
        %v4777 = vsel %vm4776, %v4769, %v4773
        %v4778 = vand.u32 2147483647, %v4527
        %vm4779 = vcmp.eq.f32.partialorder %v4778, 8.507059e+37
        %v4780 = vand.u32 %v4527, 2147483648
        %v4781 = vor.u32 1.1754944e-38, %v4780
        %v4782 = vsel %vm4779, %v4781, %v4777
        %v4783 = vmul.f32 1.0, %v4782
        %v4784 = vrcp.pop %v4528
        %v4785 = vmul.f32 %v4528, %v4784
        %v4786 = vsub.f32 1.0, %v4785
        %v4787 = vmul.f32 %v4784, %v4786
        %v4788 = vadd.f32 %v4784, %v4787
        %vm4789 = vweird.f32 %v4528
        %vm4790 = vweird.f32 %v4784
        %vm4791 = vmor %vm4789, %vm4790
        %v4792 = vsel %vm4791, %v4784, %v4788
        %v4793 = vand.u32 2147483647, %v4528
        %vm4794 = vcmp.eq.f32.partialorder %v4793, 8.507059e+37
        %v4795 = vand.u32 %v4528, 2147483648
        %v4796 = vor.u32 1.1754944e-38, %v4795
        %v4797 = vsel %vm4794, %v4796, %v4792
        %v4798 = vmul.f32 1.0, %v4797
        %v4799 = vrcp.pop %v4529
        %v4800 = vmul.f32 %v4529, %v4799
        %v4801 = vsub.f32 1.0, %v4800
        %v4802 = vmul.f32 %v4799, %v4801
        %v4803 = vadd.f32 %v4799, %v4802
        %vm4804 = vweird.f32 %v4529
        %vm4805 = vweird.f32 %v4799
        %vm4806 = vmor %vm4804, %vm4805
        %v4807 = vsel %vm4806, %v4799, %v4803
        %v4808 = vand.u32 2147483647, %v4529
        %vm4809 = vcmp.eq.f32.partialorder %v4808, 8.507059e+37
        %v4810 = vand.u32 %v4529, 2147483648
        %v4811 = vor.u32 1.1754944e-38, %v4810
        %v4812 = vsel %vm4809, %v4811, %v4807
        %v4813 = vmul.f32 1.0, %v4812
        %v4814 = vrcp.pop %v4530
        %v4815 = vmul.f32 %v4530, %v4814
        %v4816 = vsub.f32 1.0, %v4815
        %v4817 = vmul.f32 %v4814, %v4816
        %v4818 = vadd.f32 %v4814, %v4817
        %vm4819 = vweird.f32 %v4530
        %vm4820 = vweird.f32 %v4814
        %vm4821 = vmor %vm4819, %vm4820
        %v4822 = vsel %vm4821, %v4814, %v4818
        %v4823 = vand.u32 2147483647, %v4530
        %vm4824 = vcmp.eq.f32.partialorder %v4823, 8.507059e+37
        %v4825 = vand.u32 %v4530, 2147483648
        %v4826 = vor.u32 1.1754944e-38, %v4825
        %v4827 = vsel %vm4824, %v4826, %v4822
        %v4828 = vmul.f32 1.0, %v4827
        %v4829 = vrcp.pop %v4531
        %v4830 = vmul.f32 %v4531, %v4829
        %v4831 = vsub.f32 1.0, %v4830
        %v4832 = vmul.f32 %v4829, %v4831
        %v4833 = vadd.f32 %v4829, %v4832
        %vm4834 = vweird.f32 %v4531
        %vm4835 = vweird.f32 %v4829
        %vm4836 = vmor %vm4834, %vm4835
        %v4837 = vsel %vm4836, %v4829, %v4833
        %v4838 = vand.u32 2147483647, %v4531
        %vm4839 = vcmp.eq.f32.partialorder %v4838, 8.507059e+37
        %v4840 = vand.u32 %v4531, 2147483648
        %v4841 = vor.u32 1.1754944e-38, %v4840
        %v4842 = vsel %vm4839, %v4841, %v4837
        %v4843 = vmul.f32 1.0, %v4842
        %v4844 = vrcp.pop %v4532
        %v4845 = vmul.f32 %v4532, %v4844
        %v4846 = vsub.f32 1.0, %v4845
        %v4847 = vmul.f32 %v4844, %v4846
        %v4848 = vadd.f32 %v4844, %v4847
        %vm4849 = vweird.f32 %v4532
        %vm4850 = vweird.f32 %v4844
        %vm4851 = vmor %vm4849, %vm4850
        %v4852 = vsel %vm4851, %v4844, %v4848
        %v4853 = vand.u32 2147483647, %v4532
        %vm4854 = vcmp.eq.f32.partialorder %v4853, 8.507059e+37
        %v4855 = vand.u32 %v4532, 2147483648
        %v4856 = vor.u32 1.1754944e-38, %v4855
        %v4857 = vsel %vm4854, %v4856, %v4852
        %v4858 = vmul.f32 1.0, %v4857
        %v4859 = vrcp.pop %v4533
        %v4860 = vmul.f32 %v4533, %v4859
        %v4861 = vsub.f32 1.0, %v4860
        %v4862 = vmul.f32 %v4859, %v4861
        %v4863 = vadd.f32 %v4859, %v4862
        %vm4864 = vweird.f32 %v4533
        %vm4865 = vweird.f32 %v4859
        %vm4866 = vmor %vm4864, %vm4865
        %v4867 = vsel %vm4866, %v4859, %v4863
        %v4868 = vand.u32 2147483647, %v4533
        %vm4869 = vcmp.eq.f32.partialorder %v4868, 8.507059e+37
        %v4870 = vand.u32 %v4533, 2147483648
        %v4871 = vor.u32 1.1754944e-38, %v4870
        %v4872 = vsel %vm4869, %v4871, %v4867
        %v4873 = vmul.f32 1.0, %v4872
        %v4874 = vrcp.pop %v4534
        %v4875 = vmul.f32 %v4534, %v4874
        %v4876 = vsub.f32 1.0, %v4875
        %v4877 = vmul.f32 %v4874, %v4876
        %v4878 = vadd.f32 %v4874, %v4877
        %vm4879 = vweird.f32 %v4534
        %vm4880 = vweird.f32 %v4874
        %vm4881 = vmor %vm4879, %vm4880
        %v4882 = vsel %vm4881, %v4874, %v4878
        %v4883 = vand.u32 2147483647, %v4534
        %vm4884 = vcmp.eq.f32.partialorder %v4883, 8.507059e+37
        %v4885 = vand.u32 %v4534, 2147483648
        %v4886 = vor.u32 1.1754944e-38, %v4885
        %v4887 = vsel %vm4884, %v4886, %v4882
        %v4888 = vmul.f32 1.0, %v4887
        %v4889 = vrcp.pop %v4535
        %v4890 = vmul.f32 %v4535, %v4889
        %v4891 = vsub.f32 1.0, %v4890
        %v4892 = vmul.f32 %v4889, %v4891
        %v4893 = vadd.f32 %v4889, %v4892
        %vm4894 = vweird.f32 %v4535
        %vm4895 = vweird.f32 %v4889
        %vm4896 = vmor %vm4894, %vm4895
        %v4897 = vsel %vm4896, %v4889, %v4893
        %v4898 = vand.u32 2147483647, %v4535
        %vm4899 = vcmp.eq.f32.partialorder %v4898, 8.507059e+37
        %v4900 = vand.u32 %v4535, 2147483648
        %v4901 = vor.u32 1.1754944e-38, %v4900
        %v4902 = vsel %vm4899, %v4901, %v4897
        %v4903 = vmul.f32 1.0, %v4902
        %v4904 = vrcp.pop %v4536
        %v4905 = vmul.f32 %v4536, %v4904
        %v4906 = vsub.f32 1.0, %v4905
        %v4907 = vmul.f32 %v4904, %v4906
        %v4908 = vadd.f32 %v4904, %v4907
        %vm4909 = vweird.f32 %v4536
        %vm4910 = vweird.f32 %v4904
        %vm4911 = vmor %vm4909, %vm4910
        %v4912 = vsel %vm4911, %v4904, %v4908
        %v4913 = vand.u32 2147483647, %v4536
        %vm4914 = vcmp.eq.f32.partialorder %v4913, 8.507059e+37
        %v4915 = vand.u32 %v4536, 2147483648
        %v4916 = vor.u32 1.1754944e-38, %v4915
        %v4917 = vsel %vm4914, %v4916, %v4912
        %v4918 = vmul.f32 1.0, %v4917
        %v4919 = vrcp.pop %v4537
        %v4920 = vmul.f32 %v4537, %v4919
        %v4921 = vsub.f32 1.0, %v4920
        %v4922 = vmul.f32 %v4919, %v4921
        %v4923 = vadd.f32 %v4919, %v4922
        %vm4924 = vweird.f32 %v4537
        %vm4925 = vweird.f32 %v4919
        %vm4926 = vmor %vm4924, %vm4925
        %v4927 = vsel %vm4926, %v4919, %v4923
        %v4928 = vand.u32 2147483647, %v4537
        %vm4929 = vcmp.eq.f32.partialorder %v4928, 8.507059e+37
        %v4930 = vand.u32 %v4537, 2147483648
        %v4931 = vor.u32 1.1754944e-38, %v4930
        %v4932 = vsel %vm4929, %v4931, %v4927
        %v4933 = vmul.f32 1.0, %v4932
        %v4934 = vrcp.pop %v4538
        %v4935 = vmul.f32 %v4538, %v4934
        %v4936 = vsub.f32 1.0, %v4935
        %v4937 = vmul.f32 %v4934, %v4936
        %v4938 = vadd.f32 %v4934, %v4937
        %vm4939 = vweird.f32 %v4538
        %vm4940 = vweird.f32 %v4934
        %vm4941 = vmor %vm4939, %vm4940
        %v4942 = vsel %vm4941, %v4934, %v4938
        %v4943 = vand.u32 2147483647, %v4538
        %vm4944 = vcmp.eq.f32.partialorder %v4943, 8.507059e+37
        %v4945 = vand.u32 %v4538, 2147483648
        %v4946 = vor.u32 1.1754944e-38, %v4945
        %v4947 = vsel %vm4944, %v4946, %v4942
        %v4948 = vmul.f32 1.0, %v4947
        %v4949 = vrcp.pop %v4539
        %v4950 = vmul.f32 %v4539, %v4949
        %v4951 = vsub.f32 1.0, %v4950
        %v4952 = vmul.f32 %v4949, %v4951
        %v4953 = vadd.f32 %v4949, %v4952
        %vm4954 = vweird.f32 %v4539
        %vm4955 = vweird.f32 %v4949
        %vm4956 = vmor %vm4954, %vm4955
        %v4957 = vsel %vm4956, %v4949, %v4953
        %v4958 = vand.u32 2147483647, %v4539
        %vm4959 = vcmp.eq.f32.partialorder %v4958, 8.507059e+37
        %v4960 = vand.u32 %v4539, 2147483648
        %v4961 = vor.u32 1.1754944e-38, %v4960
        %v4962 = vsel %vm4959, %v4961, %v4957
        %v4963 = vmul.f32 1.0, %v4962
        %v4964 = vrcp.pop %v4540
        %v4965 = vmul.f32 %v4540, %v4964
        %v4966 = vsub.f32 1.0, %v4965
        %v4967 = vmul.f32 %v4964, %v4966
        %v4968 = vadd.f32 %v4964, %v4967
        %vm4969 = vweird.f32 %v4540
        %vm4970 = vweird.f32 %v4964
        %vm4971 = vmor %vm4969, %vm4970
        %v4972 = vsel %vm4971, %v4964, %v4968
        %v4973 = vand.u32 2147483647, %v4540
        %vm4974 = vcmp.eq.f32.partialorder %v4973, 8.507059e+37
        %v4975 = vand.u32 %v4540, 2147483648
        %v4976 = vor.u32 1.1754944e-38, %v4975
        %v4977 = vsel %vm4974, %v4976, %v4972
        %v4978 = vmul.f32 1.0, %v4977
        %v4979 = vrcp.pop %v4541
        %v4980 = vmul.f32 %v4541, %v4979
        %v4981 = vsub.f32 1.0, %v4980
        %v4982 = vmul.f32 %v4979, %v4981
        %v4983 = vadd.f32 %v4979, %v4982
        %vm4984 = vweird.f32 %v4541
        %vm4985 = vweird.f32 %v4979
        %vm4986 = vmor %vm4984, %vm4985
        %v4987 = vsel %vm4986, %v4979, %v4983
        %v4988 = vand.u32 2147483647, %v4541
        %vm4989 = vcmp.eq.f32.partialorder %v4988, 8.507059e+37
        %v4990 = vand.u32 %v4541, 2147483648
        %v4991 = vor.u32 1.1754944e-38, %v4990
        %v4992 = vsel %vm4989, %v4991, %v4987
        %v4993 = vmul.f32 1.0, %v4992
        %v4994 = vrcp.pop %v4542
        %v4995 = vmul.f32 %v4542, %v4994
        %v4996 = vsub.f32 1.0, %v4995
        %v4997 = vmul.f32 %v4994, %v4996
        %v4998 = vadd.f32 %v4994, %v4997
        %vm4999 = vweird.f32 %v4542
        %vm5000 = vweird.f32 %v4994
        %vm5001 = vmor %vm4999, %vm5000
        %v5002 = vsel %vm5001, %v4994, %v4998
        %v5003 = vand.u32 2147483647, %v4542
        %vm5004 = vcmp.eq.f32.partialorder %v5003, 8.507059e+37
        %v5005 = vand.u32 %v4542, 2147483648
        %v5006 = vor.u32 1.1754944e-38, %v5005
        %v5007 = vsel %vm5004, %v5006, %v5002
        %v5008 = vmul.f32 1.0, %v5007
        %v5009 = vrcp.pop %v4543
        %v5010 = vmul.f32 %v4543, %v5009
        %v5011 = vsub.f32 1.0, %v5010
        %v5012 = vmul.f32 %v5009, %v5011
        %v5013 = vadd.f32 %v5009, %v5012
        %vm5014 = vweird.f32 %v4543
        %vm5015 = vweird.f32 %v5009
        %vm5016 = vmor %vm5014, %vm5015
        %v5017 = vsel %vm5016, %v5009, %v5013
        %v5018 = vand.u32 2147483647, %v4543
        %vm5019 = vcmp.eq.f32.partialorder %v5018, 8.507059e+37
        %v5020 = vand.u32 %v4543, 2147483648
        %v5021 = vor.u32 1.1754944e-38, %v5020
        %v5022 = vsel %vm5019, %v5021, %v5017
        %v5023 = vmul.f32 1.0, %v5022
        %v5024 = vmul.f32 %v4337, %v4558
        %v5025 = vmul.f32 %v4339, %v4573
        %v5026 = vmul.f32 %v4342, %v4588
        %v5027 = vmul.f32 %v4344, %v4603
        %v5028 = vmul.f32 %v4347, %v4618
        %v5029 = vmul.f32 %v4349, %v4633
        %v5030 = vmul.f32 %v4352, %v4648
        %v5031 = vmul.f32 %v4354, %v4663
        %v5032 = vmul.f32 %v4357, %v4678
        %v5033 = vmul.f32 %v4359, %v4693
        %v5034 = vmul.f32 %v4362, %v4708
        %v5035 = vmul.f32 %v4364, %v4723
        %v5036 = vmul.f32 %v4367, %v4738
        %v5037 = vmul.f32 %v4369, %v4753
        %v5038 = vmul.f32 %v4372, %v4768
        %v5039 = vmul.f32 %v4374, %v4783
        %v5040 = vmul.f32 %v4377, %v4798
        %v5041 = vmul.f32 %v4379, %v4813
        %v5042 = vmul.f32 %v4382, %v4828
        %v5043 = vmul.f32 %v4384, %v4843
        %v5044 = vmul.f32 %v4387, %v4858
        %v5045 = vmul.f32 %v4389, %v4873
        %v5046 = vmul.f32 %v4392, %v4888
        %v5047 = vmul.f32 %v4394, %v4903
        %v5048 = vmul.f32 %v4397, %v4918
        %v5049 = vmul.f32 %v4399, %v4933
        %v5050 = vmul.f32 %v4402, %v4948
        %v5051 = vmul.f32 %v4404, %v4963
        %v5052 = vmul.f32 %v4407, %v4978
        %v5053 = vmul.f32 %v4409, %v4993
        %v5054 = vmul.f32 %v4412, %v5008
        %v5055 = vmul.f32 %v4414, %v5023
        %v5056 = vpack.c.bf16 %v5025, %v5024
        %v5057 = vpack.c.bf16 %v5027, %v5026
        %v5058 = vpack.c.bf16 %v5029, %v5028
        %v5059 = vpack.c.bf16 %v5031, %v5030
        %v5060 = vpack.c.bf16 %v5033, %v5032
        %v5061 = vpack.c.bf16 %v5035, %v5034
        %v5062 = vpack.c.bf16 %v5037, %v5036
        %v5063 = vpack.c.bf16 %v5039, %v5038
        %v5064 = vpack.c.bf16 %v5041, %v5040
        %v5065 = vpack.c.bf16 %v5043, %v5042
        %v5066 = vpack.c.bf16 %v5045, %v5044
        %v5067 = vpack.c.bf16 %v5047, %v5046
        %v5068 = vpack.c.bf16 %v5049, %v5048
        %v5069 = vpack.c.bf16 %v5051, %v5050
        %v5070 = vpack.c.bf16 %v5053, %v5052
        %v5071 = vpack.c.bf16 %v5055, %v5054
        %s5072 = scalar_lea.vmem %s1, 256
        %v5073 = vld [vmem:[%s5072] sm:$0xf]
        %v5074 = vld [vmem:[%s5072 + $0x4] sm:$0xf]
        %v5075 = vld [vmem:[%s5072 + $0x8] sm:$0xf]
        %v5076 = vld [vmem:[%s5072 + $0xc] sm:$0xf]
        %v5077 = vld [vmem:[%s5072 + $0x10] sm:$0xf]
        %v5078 = vld [vmem:[%s5072 + $0x14] sm:$0xf]
        %v5079 = vld [vmem:[%s5072 + $0x18] sm:$0xf]
        %v5080 = vld [vmem:[%s5072 + $0x1c] sm:$0xf]
        %v5081 = vld [vmem:[%s5072 + $0x20] sm:$0xf]
        %v5082 = vld [vmem:[%s5072 + $0x24] sm:$0xf]
        %v5083 = vld [vmem:[%s5072 + $0x28] sm:$0xf]
        %v5084 = vld [vmem:[%s5072 + $0x2c] sm:$0xf]
        %v5085 = vld [vmem:[%s5072 + $0x30] sm:$0xf]
        %v5086 = vld [vmem:[%s5072 + $0x34] sm:$0xf]
        %v5087 = vld [vmem:[%s5072 + $0x38] sm:$0xf]
        %v5088 = vld [vmem:[%s5072 + $0x3c] sm:$0xf]
        %v5105 = vunpack.c.l.b16 %v5073
        %v5106 = vunpack.c.l.b16 %v5074
        %v5107 = vunpack.c.l.b16 %v5075
        %v5108 = vunpack.c.l.b16 %v5076
        %v5109 = vunpack.c.l.b16 %v5077
        %v5110 = vunpack.c.l.b16 %v5078
        %v5111 = vunpack.c.l.b16 %v5079
        %v5112 = vunpack.c.l.b16 %v5080
        %v5113 = vunpack.c.l.b16 %v5081
        %v5114 = vunpack.c.l.b16 %v5082
        %v5115 = vunpack.c.l.b16 %v5083
        %v5116 = vunpack.c.l.b16 %v5084
        %v5117 = vunpack.c.l.b16 %v5085
        %v5118 = vunpack.c.l.b16 %v5086
        %v5119 = vunpack.c.l.b16 %v5087
        %v5120 = vunpack.c.l.b16 %v5088
        %v5121 = vpack.c.b16 %v5106, %v5105
        %v5122 = vpack.c.b16 %v5108, %v5107
        %v5123 = vpack.c.b16 %v5110, %v5109
        %v5124 = vpack.c.b16 %v5112, %v5111
        %v5125 = vpack.c.b16 %v5114, %v5113
        %v5126 = vpack.c.b16 %v5116, %v5115
        %v5127 = vpack.c.b16 %v5118, %v5117
        %v5128 = vpack.c.b16 %v5120, %v5119
        %5137 = vmatpush.bf16.msra.mxu0 %v5128
        %5138 = vmatpush.bf16.msra.mxu0 %v5127
        %5139 = vmatpush.bf16.msra.mxu0 %v5126
        %5140 = vmatpush.bf16.msra.mxu0 %v5125
        %5141 = vmatpush.bf16.msra.mxu0 %v5124
        %5142 = vmatpush.bf16.msra.mxu0 %v5123
        %5143 = vmatpush.bf16.msra.mxu0 %v5122
        %5144 = vmatpush.bf16.msra.mxu0 %v5121
        %5145 = vmatmul.bf16.gmra.mxu0 %v5056
        %v5146 = vpop.f32.mrf.mxu0
        %v5147 = vadd.f32 0.0, %v5146
        %v5148 = vpop.f32.mrf.mxu0
        %v5149 = vadd.f32 0.0, %v5148
        %5150 = vmatmul.bf16.gmra.mxu0 %v5057
        %v5151 = vpop.f32.mrf.mxu0
        %v5152 = vadd.f32 0.0, %v5151
        %v5153 = vpop.f32.mrf.mxu0
        %v5154 = vadd.f32 0.0, %v5153
        %5155 = vmatmul.bf16.gmra.mxu0 %v5058
        %v5156 = vpop.f32.mrf.mxu0
        %v5157 = vadd.f32 0.0, %v5156
        %v5158 = vpop.f32.mrf.mxu0
        %v5159 = vadd.f32 0.0, %v5158
        %5160 = vmatmul.bf16.gmra.mxu0 %v5059
        %v5161 = vpop.f32.mrf.mxu0
        %v5162 = vadd.f32 0.0, %v5161
        %v5163 = vpop.f32.mrf.mxu0
        %v5164 = vadd.f32 0.0, %v5163
        %5165 = vmatmul.bf16.gmra.mxu0 %v5060
        %v5166 = vpop.f32.mrf.mxu0
        %v5167 = vadd.f32 0.0, %v5166
        %v5168 = vpop.f32.mrf.mxu0
        %v5169 = vadd.f32 0.0, %v5168
        %5170 = vmatmul.bf16.gmra.mxu0 %v5061
        %v5171 = vpop.f32.mrf.mxu0
        %v5172 = vadd.f32 0.0, %v5171
        %v5173 = vpop.f32.mrf.mxu0
        %v5174 = vadd.f32 0.0, %v5173
        %5175 = vmatmul.bf16.gmra.mxu0 %v5062
        %v5176 = vpop.f32.mrf.mxu0
        %v5177 = vadd.f32 0.0, %v5176
        %v5178 = vpop.f32.mrf.mxu0
        %v5179 = vadd.f32 0.0, %v5178
        %5180 = vmatmul.bf16.gmra.mxu0 %v5063
        %v5181 = vpop.f32.mrf.mxu0
        %v5182 = vadd.f32 0.0, %v5181
        %v5183 = vpop.f32.mrf.mxu0
        %v5184 = vadd.f32 0.0, %v5183
        %5185 = vmatmul.bf16.gmra.mxu0 %v5064
        %v5186 = vpop.f32.mrf.mxu0
        %v5187 = vadd.f32 0.0, %v5186
        %v5188 = vpop.f32.mrf.mxu0
        %v5189 = vadd.f32 0.0, %v5188
        %5190 = vmatmul.bf16.gmra.mxu0 %v5065
        %v5191 = vpop.f32.mrf.mxu0
        %v5192 = vadd.f32 0.0, %v5191
        %v5193 = vpop.f32.mrf.mxu0
        %v5194 = vadd.f32 0.0, %v5193
        %5195 = vmatmul.bf16.gmra.mxu0 %v5066
        %v5196 = vpop.f32.mrf.mxu0
        %v5197 = vadd.f32 0.0, %v5196
        %v5198 = vpop.f32.mrf.mxu0
        %v5199 = vadd.f32 0.0, %v5198
        %5200 = vmatmul.bf16.gmra.mxu0 %v5067
        %v5201 = vpop.f32.mrf.mxu0
        %v5202 = vadd.f32 0.0, %v5201
        %v5203 = vpop.f32.mrf.mxu0
        %v5204 = vadd.f32 0.0, %v5203
        %5205 = vmatmul.bf16.gmra.mxu0 %v5068
        %v5206 = vpop.f32.mrf.mxu0
        %v5207 = vadd.f32 0.0, %v5206
        %v5208 = vpop.f32.mrf.mxu0
        %v5209 = vadd.f32 0.0, %v5208
        %5210 = vmatmul.bf16.gmra.mxu0 %v5069
        %v5211 = vpop.f32.mrf.mxu0
        %v5212 = vadd.f32 0.0, %v5211
        %v5213 = vpop.f32.mrf.mxu0
        %v5214 = vadd.f32 0.0, %v5213
        %5215 = vmatmul.bf16.gmra.mxu0 %v5070
        %v5216 = vpop.f32.mrf.mxu0
        %v5217 = vadd.f32 0.0, %v5216
        %v5218 = vpop.f32.mrf.mxu0
        %v5219 = vadd.f32 0.0, %v5218
        %5220 = vmatmul.bf16.gmra.mxu0 %v5071
        %v5221 = vpop.f32.mrf.mxu0
        %v5222 = vadd.f32 0.0, %v5221
        %v5223 = vpop.f32.mrf.mxu0
        %v5224 = vadd.f32 0.0, %v5223
        %5225 = vdwg.mxu0
        %v5226 = vadd.f32 %v3474, %v5147
        %v5227 = vadd.f32 %v3475, %v5149
        %v5228 = vadd.f32 %v3476, %v5152
        %v5229 = vadd.f32 %v3477, %v5154
        %v5230 = vadd.f32 %v3478, %v5157
        %v5231 = vadd.f32 %v3479, %v5159
        %v5232 = vadd.f32 %v3480, %v5162
        %v5233 = vadd.f32 %v3481, %v5164
        %v5234 = vadd.f32 %v3482, %v5167
        %v5235 = vadd.f32 %v3483, %v5169
        %v5236 = vadd.f32 %v3484, %v5172
        %v5237 = vadd.f32 %v3485, %v5174
        %v5238 = vadd.f32 %v3486, %v5177
        %v5239 = vadd.f32 %v3487, %v5179
        %v5240 = vadd.f32 %v3488, %v5182
        %v5241 = vadd.f32 %v3489, %v5184
        %v5242 = vadd.f32 %v3490, %v5187
        %v5243 = vadd.f32 %v3491, %v5189
        %v5244 = vadd.f32 %v3492, %v5192
        %v5245 = vadd.f32 %v3493, %v5194
        %v5246 = vadd.f32 %v3494, %v5197
        %v5247 = vadd.f32 %v3495, %v5199
        %v5248 = vadd.f32 %v3496, %v5202
        %v5249 = vadd.f32 %v3497, %v5204
        %v5250 = vadd.f32 %v3498, %v5207
        %v5251 = vadd.f32 %v3499, %v5209
        %v5252 = vadd.f32 %v3500, %v5212
        %v5253 = vadd.f32 %v3501, %v5214
        %v5254 = vadd.f32 %v3502, %v5217
        %v5255 = vadd.f32 %v3503, %v5219
        %v5256 = vadd.f32 %v3504, %v5222
        %v5257 = vadd.f32 %v3505, %v5224
        %v5258 = vld [vmem:[%s2 + $0x6] sm:$0x1]
        %v5259 = vld [vmem:[%s2 + $0x7] sm:$0x1]
        %5260 = vadd.xlane.f32.xlu0 %v5226
        %v5261 = vpop.xlane.xlu0 %5260
        %5262 = vadd.xlane.f32.xlu0 %v5227
        %v5263 = vpop.xlane.xlu0 %5262
        %5264 = vadd.xlane.f32.xlu0 %v5228
        %v5265 = vpop.xlane.xlu0 %5264
        %5266 = vadd.xlane.f32.xlu0 %v5229
        %v5267 = vpop.xlane.xlu0 %5266
        %5268 = vadd.xlane.f32.xlu0 %v5230
        %v5269 = vpop.xlane.xlu0 %5268
        %5270 = vadd.xlane.f32.xlu0 %v5231
        %v5271 = vpop.xlane.xlu0 %5270
        %5272 = vadd.xlane.f32.xlu0 %v5232
        %v5273 = vpop.xlane.xlu0 %5272
        %5274 = vadd.xlane.f32.xlu0 %v5233
        %v5275 = vpop.xlane.xlu0 %5274
        %5276 = vadd.xlane.f32.xlu0 %v5234
        %v5277 = vpop.xlane.xlu0 %5276
        %5278 = vadd.xlane.f32.xlu0 %v5235
        %v5279 = vpop.xlane.xlu0 %5278
        %5280 = vadd.xlane.f32.xlu0 %v5236
        %v5281 = vpop.xlane.xlu0 %5280
        %5282 = vadd.xlane.f32.xlu0 %v5237
        %v5283 = vpop.xlane.xlu0 %5282
        %5284 = vadd.xlane.f32.xlu0 %v5238
        %v5285 = vpop.xlane.xlu0 %5284
        %5286 = vadd.xlane.f32.xlu0 %v5239
        %v5287 = vpop.xlane.xlu0 %5286
        %5288 = vadd.xlane.f32.xlu0 %v5240
        %v5289 = vpop.xlane.xlu0 %5288
        %5290 = vadd.xlane.f32.xlu0 %v5241
        %v5291 = vpop.xlane.xlu0 %5290
        %5292 = vadd.xlane.f32.xlu0 %v5242
        %v5293 = vpop.xlane.xlu0 %5292
        %5294 = vadd.xlane.f32.xlu0 %v5243
        %v5295 = vpop.xlane.xlu0 %5294
        %5296 = vadd.xlane.f32.xlu0 %v5244
        %v5297 = vpop.xlane.xlu0 %5296
        %5298 = vadd.xlane.f32.xlu0 %v5245
        %v5299 = vpop.xlane.xlu0 %5298
        %5300 = vadd.xlane.f32.xlu0 %v5246
        %v5301 = vpop.xlane.xlu0 %5300
        %5302 = vadd.xlane.f32.xlu0 %v5247
        %v5303 = vpop.xlane.xlu0 %5302
        %5304 = vadd.xlane.f32.xlu0 %v5248
        %v5305 = vpop.xlane.xlu0 %5304
        %5306 = vadd.xlane.f32.xlu0 %v5249
        %v5307 = vpop.xlane.xlu0 %5306
        %5308 = vadd.xlane.f32.xlu0 %v5250
        %v5309 = vpop.xlane.xlu0 %5308
        %5310 = vadd.xlane.f32.xlu0 %v5251
        %v5311 = vpop.xlane.xlu0 %5310
        %5312 = vadd.xlane.f32.xlu0 %v5252
        %v5313 = vpop.xlane.xlu0 %5312
        %5314 = vadd.xlane.f32.xlu0 %v5253
        %v5315 = vpop.xlane.xlu0 %5314
        %5316 = vadd.xlane.f32.xlu0 %v5254
        %v5317 = vpop.xlane.xlu0 %5316
        %5318 = vadd.xlane.f32.xlu0 %v5255
        %v5319 = vpop.xlane.xlu0 %5318
        %5320 = vadd.xlane.f32.xlu0 %v5256
        %v5321 = vpop.xlane.xlu0 %5320
        %5322 = vadd.xlane.f32.xlu0 %v5257
        %v5323 = vpop.xlane.xlu0 %5322
        %v5324 = vmul.f32 %v5261, 0.03125
        %v5325 = vmul.f32 %v5263, 0.03125
        %v5326 = vmul.f32 %v5265, 0.03125
        %v5327 = vmul.f32 %v5267, 0.03125
        %v5328 = vmul.f32 %v5269, 0.03125
        %v5329 = vmul.f32 %v5271, 0.03125
        %v5330 = vmul.f32 %v5273, 0.03125
        %v5331 = vmul.f32 %v5275, 0.03125
        %v5332 = vmul.f32 %v5277, 0.03125
        %v5333 = vmul.f32 %v5279, 0.03125
        %v5334 = vmul.f32 %v5281, 0.03125
        %v5335 = vmul.f32 %v5283, 0.03125
        %v5336 = vmul.f32 %v5285, 0.03125
        %v5337 = vmul.f32 %v5287, 0.03125
        %v5338 = vmul.f32 %v5289, 0.03125
        %v5339 = vmul.f32 %v5291, 0.03125
        %v5340 = vmul.f32 %v5293, 0.03125
        %v5341 = vmul.f32 %v5295, 0.03125
        %v5342 = vmul.f32 %v5297, 0.03125
        %v5343 = vmul.f32 %v5299, 0.03125
        %v5344 = vmul.f32 %v5301, 0.03125
        %v5345 = vmul.f32 %v5303, 0.03125
        %v5346 = vmul.f32 %v5305, 0.03125
        %v5347 = vmul.f32 %v5307, 0.03125
        %v5348 = vmul.f32 %v5309, 0.03125
        %v5349 = vmul.f32 %v5311, 0.03125
        %v5350 = vmul.f32 %v5313, 0.03125
        %v5351 = vmul.f32 %v5315, 0.03125
        %v5352 = vmul.f32 %v5317, 0.03125
        %v5353 = vmul.f32 %v5319, 0.03125
        %v5354 = vmul.f32 %v5321, 0.03125
        %v5355 = vmul.f32 %v5323, 0.03125
        %v5356 = vsub.f32 %v5226, %v5324
        %v5357 = vsub.f32 %v5227, %v5325
        %v5358 = vsub.f32 %v5228, %v5326
        %v5359 = vsub.f32 %v5229, %v5327
        %v5360 = vsub.f32 %v5230, %v5328
        %v5361 = vsub.f32 %v5231, %v5329
        %v5362 = vsub.f32 %v5232, %v5330
        %v5363 = vsub.f32 %v5233, %v5331
        %v5364 = vsub.f32 %v5234, %v5332
        %v5365 = vsub.f32 %v5235, %v5333
        %v5366 = vsub.f32 %v5236, %v5334
        %v5367 = vsub.f32 %v5237, %v5335
        %v5368 = vsub.f32 %v5238, %v5336
        %v5369 = vsub.f32 %v5239, %v5337
        %v5370 = vsub.f32 %v5240, %v5338
        %v5371 = vsub.f32 %v5241, %v5339
        %v5372 = vsub.f32 %v5242, %v5340
        %v5373 = vsub.f32 %v5243, %v5341
        %v5374 = vsub.f32 %v5244, %v5342
        %v5375 = vsub.f32 %v5245, %v5343
        %v5376 = vsub.f32 %v5246, %v5344
        %v5377 = vsub.f32 %v5247, %v5345
        %v5378 = vsub.f32 %v5248, %v5346
        %v5379 = vsub.f32 %v5249, %v5347
        %v5380 = vsub.f32 %v5250, %v5348
        %v5381 = vsub.f32 %v5251, %v5349
        %v5382 = vsub.f32 %v5252, %v5350
        %v5383 = vsub.f32 %v5253, %v5351
        %v5384 = vsub.f32 %v5254, %v5352
        %v5385 = vsub.f32 %v5255, %v5353
        %v5386 = vsub.f32 %v5256, %v5354
        %v5387 = vsub.f32 %v5257, %v5355
        %v5388 = vsel %vm1143, %v5356, 0.0
        %v5389 = vsel %vm1143, %v5357, 0.0
        %v5390 = vsel %vm1143, %v5358, 0.0
        %v5391 = vsel %vm1143, %v5359, 0.0
        %v5392 = vsel %vm1143, %v5360, 0.0
        %v5393 = vsel %vm1143, %v5361, 0.0
        %v5394 = vsel %vm1143, %v5362, 0.0
        %v5395 = vsel %vm1143, %v5363, 0.0
        %v5396 = vsel %vm1143, %v5364, 0.0
        %v5397 = vsel %vm1143, %v5365, 0.0
        %v5398 = vsel %vm1143, %v5366, 0.0
        %v5399 = vsel %vm1143, %v5367, 0.0
        %v5400 = vsel %vm1143, %v5368, 0.0
        %v5401 = vsel %vm1143, %v5369, 0.0
        %v5402 = vsel %vm1143, %v5370, 0.0
        %v5403 = vsel %vm1143, %v5371, 0.0
        %v5404 = vsel %vm1143, %v5372, 0.0
        %v5405 = vsel %vm1143, %v5373, 0.0
        %v5406 = vsel %vm1143, %v5374, 0.0
        %v5407 = vsel %vm1143, %v5375, 0.0
        %v5408 = vsel %vm1143, %v5376, 0.0
        %v5409 = vsel %vm1143, %v5377, 0.0
        %v5410 = vsel %vm1143, %v5378, 0.0
        %v5411 = vsel %vm1143, %v5379, 0.0
        %v5412 = vsel %vm1143, %v5380, 0.0
        %v5413 = vsel %vm1143, %v5381, 0.0
        %v5414 = vsel %vm1143, %v5382, 0.0
        %v5415 = vsel %vm1143, %v5383, 0.0
        %v5416 = vsel %vm1143, %v5384, 0.0
        %v5417 = vsel %vm1143, %v5385, 0.0
        %v5418 = vsel %vm1143, %v5386, 0.0
        %v5419 = vsel %vm1143, %v5387, 0.0
        %v5420 = vmul.f32 %v5388, %v5388
        %v5421 = vmul.f32 %v5389, %v5389
        %v5422 = vmul.f32 %v5390, %v5390
        %v5423 = vmul.f32 %v5391, %v5391
        %v5424 = vmul.f32 %v5392, %v5392
        %v5425 = vmul.f32 %v5393, %v5393
        %v5426 = vmul.f32 %v5394, %v5394
        %v5427 = vmul.f32 %v5395, %v5395
        %v5428 = vmul.f32 %v5396, %v5396
        %v5429 = vmul.f32 %v5397, %v5397
        %v5430 = vmul.f32 %v5398, %v5398
        %v5431 = vmul.f32 %v5399, %v5399
        %v5432 = vmul.f32 %v5400, %v5400
        %v5433 = vmul.f32 %v5401, %v5401
        %v5434 = vmul.f32 %v5402, %v5402
        %v5435 = vmul.f32 %v5403, %v5403
        %v5436 = vmul.f32 %v5404, %v5404
        %v5437 = vmul.f32 %v5405, %v5405
        %v5438 = vmul.f32 %v5406, %v5406
        %v5439 = vmul.f32 %v5407, %v5407
        %v5440 = vmul.f32 %v5408, %v5408
        %v5441 = vmul.f32 %v5409, %v5409
        %v5442 = vmul.f32 %v5410, %v5410
        %v5443 = vmul.f32 %v5411, %v5411
        %v5444 = vmul.f32 %v5412, %v5412
        %v5445 = vmul.f32 %v5413, %v5413
        %v5446 = vmul.f32 %v5414, %v5414
        %v5447 = vmul.f32 %v5415, %v5415
        %v5448 = vmul.f32 %v5416, %v5416
        %v5449 = vmul.f32 %v5417, %v5417
        %v5450 = vmul.f32 %v5418, %v5418
        %v5451 = vmul.f32 %v5419, %v5419
        %5452 = vadd.xlane.f32.xlu0 %v5420
        %v5453 = vpop.xlane.xlu0 %5452
        %5454 = vadd.xlane.f32.xlu0 %v5421
        %v5455 = vpop.xlane.xlu0 %5454
        %5456 = vadd.xlane.f32.xlu0 %v5422
        %v5457 = vpop.xlane.xlu0 %5456
        %5458 = vadd.xlane.f32.xlu0 %v5423
        %v5459 = vpop.xlane.xlu0 %5458
        %5460 = vadd.xlane.f32.xlu0 %v5424
        %v5461 = vpop.xlane.xlu0 %5460
        %5462 = vadd.xlane.f32.xlu0 %v5425
        %v5463 = vpop.xlane.xlu0 %5462
        %5464 = vadd.xlane.f32.xlu0 %v5426
        %v5465 = vpop.xlane.xlu0 %5464
        %5466 = vadd.xlane.f32.xlu0 %v5427
        %v5467 = vpop.xlane.xlu0 %5466
        %5468 = vadd.xlane.f32.xlu0 %v5428
        %v5469 = vpop.xlane.xlu0 %5468
        %5470 = vadd.xlane.f32.xlu0 %v5429
        %v5471 = vpop.xlane.xlu0 %5470
        %5472 = vadd.xlane.f32.xlu0 %v5430
        %v5473 = vpop.xlane.xlu0 %5472
        %5474 = vadd.xlane.f32.xlu0 %v5431
        %v5475 = vpop.xlane.xlu0 %5474
        %5476 = vadd.xlane.f32.xlu0 %v5432
        %v5477 = vpop.xlane.xlu0 %5476
        %5478 = vadd.xlane.f32.xlu0 %v5433
        %v5479 = vpop.xlane.xlu0 %5478
        %5480 = vadd.xlane.f32.xlu0 %v5434
        %v5481 = vpop.xlane.xlu0 %5480
        %5482 = vadd.xlane.f32.xlu0 %v5435
        %v5483 = vpop.xlane.xlu0 %5482
        %5484 = vadd.xlane.f32.xlu0 %v5436
        %v5485 = vpop.xlane.xlu0 %5484
        %5486 = vadd.xlane.f32.xlu0 %v5437
        %v5487 = vpop.xlane.xlu0 %5486
        %5488 = vadd.xlane.f32.xlu0 %v5438
        %v5489 = vpop.xlane.xlu0 %5488
        %5490 = vadd.xlane.f32.xlu0 %v5439
        %v5491 = vpop.xlane.xlu0 %5490
        %5492 = vadd.xlane.f32.xlu0 %v5440
        %v5493 = vpop.xlane.xlu0 %5492
        %5494 = vadd.xlane.f32.xlu0 %v5441
        %v5495 = vpop.xlane.xlu0 %5494
        %5496 = vadd.xlane.f32.xlu0 %v5442
        %v5497 = vpop.xlane.xlu0 %5496
        %5498 = vadd.xlane.f32.xlu0 %v5443
        %v5499 = vpop.xlane.xlu0 %5498
        %5500 = vadd.xlane.f32.xlu0 %v5444
        %v5501 = vpop.xlane.xlu0 %5500
        %5502 = vadd.xlane.f32.xlu0 %v5445
        %v5503 = vpop.xlane.xlu0 %5502
        %5504 = vadd.xlane.f32.xlu0 %v5446
        %v5505 = vpop.xlane.xlu0 %5504
        %5506 = vadd.xlane.f32.xlu0 %v5447
        %v5507 = vpop.xlane.xlu0 %5506
        %5508 = vadd.xlane.f32.xlu0 %v5448
        %v5509 = vpop.xlane.xlu0 %5508
        %5510 = vadd.xlane.f32.xlu0 %v5449
        %v5511 = vpop.xlane.xlu0 %5510
        %5512 = vadd.xlane.f32.xlu0 %v5450
        %v5513 = vpop.xlane.xlu0 %5512
        %5514 = vadd.xlane.f32.xlu0 %v5451
        %v5515 = vpop.xlane.xlu0 %5514
        %v5516 = vmul.f32 %v5453, 0.03125
        %v5517 = vmul.f32 %v5455, 0.03125
        %v5518 = vmul.f32 %v5457, 0.03125
        %v5519 = vmul.f32 %v5459, 0.03125
        %v5520 = vmul.f32 %v5461, 0.03125
        %v5521 = vmul.f32 %v5463, 0.03125
        %v5522 = vmul.f32 %v5465, 0.03125
        %v5523 = vmul.f32 %v5467, 0.03125
        %v5524 = vmul.f32 %v5469, 0.03125
        %v5525 = vmul.f32 %v5471, 0.03125
        %v5526 = vmul.f32 %v5473, 0.03125
        %v5527 = vmul.f32 %v5475, 0.03125
        %v5528 = vmul.f32 %v5477, 0.03125
        %v5529 = vmul.f32 %v5479, 0.03125
        %v5530 = vmul.f32 %v5481, 0.03125
        %v5531 = vmul.f32 %v5483, 0.03125
        %v5532 = vmul.f32 %v5485, 0.03125
        %v5533 = vmul.f32 %v5487, 0.03125
        %v5534 = vmul.f32 %v5489, 0.03125
        %v5535 = vmul.f32 %v5491, 0.03125
        %v5536 = vmul.f32 %v5493, 0.03125
        %v5537 = vmul.f32 %v5495, 0.03125
        %v5538 = vmul.f32 %v5497, 0.03125
        %v5539 = vmul.f32 %v5499, 0.03125
        %v5540 = vmul.f32 %v5501, 0.03125
        %v5541 = vmul.f32 %v5503, 0.03125
        %v5542 = vmul.f32 %v5505, 0.03125
        %v5543 = vmul.f32 %v5507, 0.03125
        %v5544 = vmul.f32 %v5509, 0.03125
        %v5545 = vmul.f32 %v5511, 0.03125
        %v5546 = vmul.f32 %v5513, 0.03125
        %v5547 = vmul.f32 %v5515, 0.03125
        %v5548 = vadd.f32 %v5516, 1e-05
        %v5549 = vadd.f32 %v5517, 1e-05
        %v5550 = vadd.f32 %v5518, 1e-05
        %v5551 = vadd.f32 %v5519, 1e-05
        %v5552 = vadd.f32 %v5520, 1e-05
        %v5553 = vadd.f32 %v5521, 1e-05
        %v5554 = vadd.f32 %v5522, 1e-05
        %v5555 = vadd.f32 %v5523, 1e-05
        %v5556 = vadd.f32 %v5524, 1e-05
        %v5557 = vadd.f32 %v5525, 1e-05
        %v5558 = vadd.f32 %v5526, 1e-05
        %v5559 = vadd.f32 %v5527, 1e-05
        %v5560 = vadd.f32 %v5528, 1e-05
        %v5561 = vadd.f32 %v5529, 1e-05
        %v5562 = vadd.f32 %v5530, 1e-05
        %v5563 = vadd.f32 %v5531, 1e-05
        %v5564 = vadd.f32 %v5532, 1e-05
        %v5565 = vadd.f32 %v5533, 1e-05
        %v5566 = vadd.f32 %v5534, 1e-05
        %v5567 = vadd.f32 %v5535, 1e-05
        %v5568 = vadd.f32 %v5536, 1e-05
        %v5569 = vadd.f32 %v5537, 1e-05
        %v5570 = vadd.f32 %v5538, 1e-05
        %v5571 = vadd.f32 %v5539, 1e-05
        %v5572 = vadd.f32 %v5540, 1e-05
        %v5573 = vadd.f32 %v5541, 1e-05
        %v5574 = vadd.f32 %v5542, 1e-05
        %v5575 = vadd.f32 %v5543, 1e-05
        %v5576 = vadd.f32 %v5544, 1e-05
        %v5577 = vadd.f32 %v5545, 1e-05
        %v5578 = vadd.f32 %v5546, 1e-05
        %v5579 = vadd.f32 %v5547, 1e-05
        %v5580 = vrsqrt.pop %v5548
        %v5581 = vmul.f32 %v5580, %v5548
        %v5582 = vmul.f32 %v5581, %v5580
        %v5583 = vmul.f32 0.5, %v5582
        %v5584 = vsub.f32 1.5, %v5583
        %v5585 = vmul.f32 %v5580, %v5584
        %vm5586 = vweird.f32 %v5548
        %vm5587 = vweird.f32 %v5580
        %vm5588 = vmor %vm5586, %vm5587
        %v5589 = vsel %vm5588, %v5580, %v5585
        %v5590 = vrsqrt.pop %v5549
        %v5591 = vmul.f32 %v5590, %v5549
        %v5592 = vmul.f32 %v5591, %v5590
        %v5593 = vmul.f32 0.5, %v5592
        %v5594 = vsub.f32 1.5, %v5593
        %v5595 = vmul.f32 %v5590, %v5594
        %vm5596 = vweird.f32 %v5549
        %vm5597 = vweird.f32 %v5590
        %vm5598 = vmor %vm5596, %vm5597
        %v5599 = vsel %vm5598, %v5590, %v5595
        %v5600 = vrsqrt.pop %v5550
        %v5601 = vmul.f32 %v5600, %v5550
        %v5602 = vmul.f32 %v5601, %v5600
        %v5603 = vmul.f32 0.5, %v5602
        %v5604 = vsub.f32 1.5, %v5603
        %v5605 = vmul.f32 %v5600, %v5604
        %vm5606 = vweird.f32 %v5550
        %vm5607 = vweird.f32 %v5600
        %vm5608 = vmor %vm5606, %vm5607
        %v5609 = vsel %vm5608, %v5600, %v5605
        %v5610 = vrsqrt.pop %v5551
        %v5611 = vmul.f32 %v5610, %v5551
        %v5612 = vmul.f32 %v5611, %v5610
        %v5613 = vmul.f32 0.5, %v5612
        %v5614 = vsub.f32 1.5, %v5613
        %v5615 = vmul.f32 %v5610, %v5614
        %vm5616 = vweird.f32 %v5551
        %vm5617 = vweird.f32 %v5610
        %vm5618 = vmor %vm5616, %vm5617
        %v5619 = vsel %vm5618, %v5610, %v5615
        %v5620 = vrsqrt.pop %v5552
        %v5621 = vmul.f32 %v5620, %v5552
        %v5622 = vmul.f32 %v5621, %v5620
        %v5623 = vmul.f32 0.5, %v5622
        %v5624 = vsub.f32 1.5, %v5623
        %v5625 = vmul.f32 %v5620, %v5624
        %vm5626 = vweird.f32 %v5552
        %vm5627 = vweird.f32 %v5620
        %vm5628 = vmor %vm5626, %vm5627
        %v5629 = vsel %vm5628, %v5620, %v5625
        %v5630 = vrsqrt.pop %v5553
        %v5631 = vmul.f32 %v5630, %v5553
        %v5632 = vmul.f32 %v5631, %v5630
        %v5633 = vmul.f32 0.5, %v5632
        %v5634 = vsub.f32 1.5, %v5633
        %v5635 = vmul.f32 %v5630, %v5634
        %vm5636 = vweird.f32 %v5553
        %vm5637 = vweird.f32 %v5630
        %vm5638 = vmor %vm5636, %vm5637
        %v5639 = vsel %vm5638, %v5630, %v5635
        %v5640 = vrsqrt.pop %v5554
        %v5641 = vmul.f32 %v5640, %v5554
        %v5642 = vmul.f32 %v5641, %v5640
        %v5643 = vmul.f32 0.5, %v5642
        %v5644 = vsub.f32 1.5, %v5643
        %v5645 = vmul.f32 %v5640, %v5644
        %vm5646 = vweird.f32 %v5554
        %vm5647 = vweird.f32 %v5640
        %vm5648 = vmor %vm5646, %vm5647
        %v5649 = vsel %vm5648, %v5640, %v5645
        %v5650 = vrsqrt.pop %v5555
        %v5651 = vmul.f32 %v5650, %v5555
        %v5652 = vmul.f32 %v5651, %v5650
        %v5653 = vmul.f32 0.5, %v5652
        %v5654 = vsub.f32 1.5, %v5653
        %v5655 = vmul.f32 %v5650, %v5654
        %vm5656 = vweird.f32 %v5555
        %vm5657 = vweird.f32 %v5650
        %vm5658 = vmor %vm5656, %vm5657
        %v5659 = vsel %vm5658, %v5650, %v5655
        %v5660 = vrsqrt.pop %v5556
        %v5661 = vmul.f32 %v5660, %v5556
        %v5662 = vmul.f32 %v5661, %v5660
        %v5663 = vmul.f32 0.5, %v5662
        %v5664 = vsub.f32 1.5, %v5663
        %v5665 = vmul.f32 %v5660, %v5664
        %vm5666 = vweird.f32 %v5556
        %vm5667 = vweird.f32 %v5660
        %vm5668 = vmor %vm5666, %vm5667
        %v5669 = vsel %vm5668, %v5660, %v5665
        %v5670 = vrsqrt.pop %v5557
        %v5671 = vmul.f32 %v5670, %v5557
        %v5672 = vmul.f32 %v5671, %v5670
        %v5673 = vmul.f32 0.5, %v5672
        %v5674 = vsub.f32 1.5, %v5673
        %v5675 = vmul.f32 %v5670, %v5674
        %vm5676 = vweird.f32 %v5557
        %vm5677 = vweird.f32 %v5670
        %vm5678 = vmor %vm5676, %vm5677
        %v5679 = vsel %vm5678, %v5670, %v5675
        %v5680 = vrsqrt.pop %v5558
        %v5681 = vmul.f32 %v5680, %v5558
        %v5682 = vmul.f32 %v5681, %v5680
        %v5683 = vmul.f32 0.5, %v5682
        %v5684 = vsub.f32 1.5, %v5683
        %v5685 = vmul.f32 %v5680, %v5684
        %vm5686 = vweird.f32 %v5558
        %vm5687 = vweird.f32 %v5680
        %vm5688 = vmor %vm5686, %vm5687
        %v5689 = vsel %vm5688, %v5680, %v5685
        %v5690 = vrsqrt.pop %v5559
        %v5691 = vmul.f32 %v5690, %v5559
        %v5692 = vmul.f32 %v5691, %v5690
        %v5693 = vmul.f32 0.5, %v5692
        %v5694 = vsub.f32 1.5, %v5693
        %v5695 = vmul.f32 %v5690, %v5694
        %vm5696 = vweird.f32 %v5559
        %vm5697 = vweird.f32 %v5690
        %vm5698 = vmor %vm5696, %vm5697
        %v5699 = vsel %vm5698, %v5690, %v5695
        %v5700 = vrsqrt.pop %v5560
        %v5701 = vmul.f32 %v5700, %v5560
        %v5702 = vmul.f32 %v5701, %v5700
        %v5703 = vmul.f32 0.5, %v5702
        %v5704 = vsub.f32 1.5, %v5703
        %v5705 = vmul.f32 %v5700, %v5704
        %vm5706 = vweird.f32 %v5560
        %vm5707 = vweird.f32 %v5700
        %vm5708 = vmor %vm5706, %vm5707
        %v5709 = vsel %vm5708, %v5700, %v5705
        %v5710 = vrsqrt.pop %v5561
        %v5711 = vmul.f32 %v5710, %v5561
        %v5712 = vmul.f32 %v5711, %v5710
        %v5713 = vmul.f32 0.5, %v5712
        %v5714 = vsub.f32 1.5, %v5713
        %v5715 = vmul.f32 %v5710, %v5714
        %vm5716 = vweird.f32 %v5561
        %vm5717 = vweird.f32 %v5710
        %vm5718 = vmor %vm5716, %vm5717
        %v5719 = vsel %vm5718, %v5710, %v5715
        %v5720 = vrsqrt.pop %v5562
        %v5721 = vmul.f32 %v5720, %v5562
        %v5722 = vmul.f32 %v5721, %v5720
        %v5723 = vmul.f32 0.5, %v5722
        %v5724 = vsub.f32 1.5, %v5723
        %v5725 = vmul.f32 %v5720, %v5724
        %vm5726 = vweird.f32 %v5562
        %vm5727 = vweird.f32 %v5720
        %vm5728 = vmor %vm5726, %vm5727
        %v5729 = vsel %vm5728, %v5720, %v5725
        %v5730 = vrsqrt.pop %v5563
        %v5731 = vmul.f32 %v5730, %v5563
        %v5732 = vmul.f32 %v5731, %v5730
        %v5733 = vmul.f32 0.5, %v5732
        %v5734 = vsub.f32 1.5, %v5733
        %v5735 = vmul.f32 %v5730, %v5734
        %vm5736 = vweird.f32 %v5563
        %vm5737 = vweird.f32 %v5730
        %vm5738 = vmor %vm5736, %vm5737
        %v5739 = vsel %vm5738, %v5730, %v5735
        %v5740 = vrsqrt.pop %v5564
        %v5741 = vmul.f32 %v5740, %v5564
        %v5742 = vmul.f32 %v5741, %v5740
        %v5743 = vmul.f32 0.5, %v5742
        %v5744 = vsub.f32 1.5, %v5743
        %v5745 = vmul.f32 %v5740, %v5744
        %vm5746 = vweird.f32 %v5564
        %vm5747 = vweird.f32 %v5740
        %vm5748 = vmor %vm5746, %vm5747
        %v5749 = vsel %vm5748, %v5740, %v5745
        %v5750 = vrsqrt.pop %v5565
        %v5751 = vmul.f32 %v5750, %v5565
        %v5752 = vmul.f32 %v5751, %v5750
        %v5753 = vmul.f32 0.5, %v5752
        %v5754 = vsub.f32 1.5, %v5753
        %v5755 = vmul.f32 %v5750, %v5754
        %vm5756 = vweird.f32 %v5565
        %vm5757 = vweird.f32 %v5750
        %vm5758 = vmor %vm5756, %vm5757
        %v5759 = vsel %vm5758, %v5750, %v5755
        %v5760 = vrsqrt.pop %v5566
        %v5761 = vmul.f32 %v5760, %v5566
        %v5762 = vmul.f32 %v5761, %v5760
        %v5763 = vmul.f32 0.5, %v5762
        %v5764 = vsub.f32 1.5, %v5763
        %v5765 = vmul.f32 %v5760, %v5764
        %vm5766 = vweird.f32 %v5566
        %vm5767 = vweird.f32 %v5760
        %vm5768 = vmor %vm5766, %vm5767
        %v5769 = vsel %vm5768, %v5760, %v5765
        %v5770 = vrsqrt.pop %v5567
        %v5771 = vmul.f32 %v5770, %v5567
        %v5772 = vmul.f32 %v5771, %v5770
        %v5773 = vmul.f32 0.5, %v5772
        %v5774 = vsub.f32 1.5, %v5773
        %v5775 = vmul.f32 %v5770, %v5774
        %vm5776 = vweird.f32 %v5567
        %vm5777 = vweird.f32 %v5770
        %vm5778 = vmor %vm5776, %vm5777
        %v5779 = vsel %vm5778, %v5770, %v5775
        %v5780 = vrsqrt.pop %v5568
        %v5781 = vmul.f32 %v5780, %v5568
        %v5782 = vmul.f32 %v5781, %v5780
        %v5783 = vmul.f32 0.5, %v5782
        %v5784 = vsub.f32 1.5, %v5783
        %v5785 = vmul.f32 %v5780, %v5784
        %vm5786 = vweird.f32 %v5568
        %vm5787 = vweird.f32 %v5780
        %vm5788 = vmor %vm5786, %vm5787
        %v5789 = vsel %vm5788, %v5780, %v5785
        %v5790 = vrsqrt.pop %v5569
        %v5791 = vmul.f32 %v5790, %v5569
        %v5792 = vmul.f32 %v5791, %v5790
        %v5793 = vmul.f32 0.5, %v5792
        %v5794 = vsub.f32 1.5, %v5793
        %v5795 = vmul.f32 %v5790, %v5794
        %vm5796 = vweird.f32 %v5569
        %vm5797 = vweird.f32 %v5790
        %vm5798 = vmor %vm5796, %vm5797
        %v5799 = vsel %vm5798, %v5790, %v5795
        %v5800 = vrsqrt.pop %v5570
        %v5801 = vmul.f32 %v5800, %v5570
        %v5802 = vmul.f32 %v5801, %v5800
        %v5803 = vmul.f32 0.5, %v5802
        %v5804 = vsub.f32 1.5, %v5803
        %v5805 = vmul.f32 %v5800, %v5804
        %vm5806 = vweird.f32 %v5570
        %vm5807 = vweird.f32 %v5800
        %vm5808 = vmor %vm5806, %vm5807
        %v5809 = vsel %vm5808, %v5800, %v5805
        %v5810 = vrsqrt.pop %v5571
        %v5811 = vmul.f32 %v5810, %v5571
        %v5812 = vmul.f32 %v5811, %v5810
        %v5813 = vmul.f32 0.5, %v5812
        %v5814 = vsub.f32 1.5, %v5813
        %v5815 = vmul.f32 %v5810, %v5814
        %vm5816 = vweird.f32 %v5571
        %vm5817 = vweird.f32 %v5810
        %vm5818 = vmor %vm5816, %vm5817
        %v5819 = vsel %vm5818, %v5810, %v5815
        %v5820 = vrsqrt.pop %v5572
        %v5821 = vmul.f32 %v5820, %v5572
        %v5822 = vmul.f32 %v5821, %v5820
        %v5823 = vmul.f32 0.5, %v5822
        %v5824 = vsub.f32 1.5, %v5823
        %v5825 = vmul.f32 %v5820, %v5824
        %vm5826 = vweird.f32 %v5572
        %vm5827 = vweird.f32 %v5820
        %vm5828 = vmor %vm5826, %vm5827
        %v5829 = vsel %vm5828, %v5820, %v5825
        %v5830 = vrsqrt.pop %v5573
        %v5831 = vmul.f32 %v5830, %v5573
        %v5832 = vmul.f32 %v5831, %v5830
        %v5833 = vmul.f32 0.5, %v5832
        %v5834 = vsub.f32 1.5, %v5833
        %v5835 = vmul.f32 %v5830, %v5834
        %vm5836 = vweird.f32 %v5573
        %vm5837 = vweird.f32 %v5830
        %vm5838 = vmor %vm5836, %vm5837
        %v5839 = vsel %vm5838, %v5830, %v5835
        %v5840 = vrsqrt.pop %v5574
        %v5841 = vmul.f32 %v5840, %v5574
        %v5842 = vmul.f32 %v5841, %v5840
        %v5843 = vmul.f32 0.5, %v5842
        %v5844 = vsub.f32 1.5, %v5843
        %v5845 = vmul.f32 %v5840, %v5844
        %vm5846 = vweird.f32 %v5574
        %vm5847 = vweird.f32 %v5840
        %vm5848 = vmor %vm5846, %vm5847
        %v5849 = vsel %vm5848, %v5840, %v5845
        %v5850 = vrsqrt.pop %v5575
        %v5851 = vmul.f32 %v5850, %v5575
        %v5852 = vmul.f32 %v5851, %v5850
        %v5853 = vmul.f32 0.5, %v5852
        %v5854 = vsub.f32 1.5, %v5853
        %v5855 = vmul.f32 %v5850, %v5854
        %vm5856 = vweird.f32 %v5575
        %vm5857 = vweird.f32 %v5850
        %vm5858 = vmor %vm5856, %vm5857
        %v5859 = vsel %vm5858, %v5850, %v5855
        %v5860 = vrsqrt.pop %v5576
        %v5861 = vmul.f32 %v5860, %v5576
        %v5862 = vmul.f32 %v5861, %v5860
        %v5863 = vmul.f32 0.5, %v5862
        %v5864 = vsub.f32 1.5, %v5863
        %v5865 = vmul.f32 %v5860, %v5864
        %vm5866 = vweird.f32 %v5576
        %vm5867 = vweird.f32 %v5860
        %vm5868 = vmor %vm5866, %vm5867
        %v5869 = vsel %vm5868, %v5860, %v5865
        %v5870 = vrsqrt.pop %v5577
        %v5871 = vmul.f32 %v5870, %v5577
        %v5872 = vmul.f32 %v5871, %v5870
        %v5873 = vmul.f32 0.5, %v5872
        %v5874 = vsub.f32 1.5, %v5873
        %v5875 = vmul.f32 %v5870, %v5874
        %vm5876 = vweird.f32 %v5577
        %vm5877 = vweird.f32 %v5870
        %vm5878 = vmor %vm5876, %vm5877
        %v5879 = vsel %vm5878, %v5870, %v5875
        %v5880 = vrsqrt.pop %v5578
        %v5881 = vmul.f32 %v5880, %v5578
        %v5882 = vmul.f32 %v5881, %v5880
        %v5883 = vmul.f32 0.5, %v5882
        %v5884 = vsub.f32 1.5, %v5883
        %v5885 = vmul.f32 %v5880, %v5884
        %vm5886 = vweird.f32 %v5578
        %vm5887 = vweird.f32 %v5880
        %vm5888 = vmor %vm5886, %vm5887
        %v5889 = vsel %vm5888, %v5880, %v5885
        %v5890 = vrsqrt.pop %v5579
        %v5891 = vmul.f32 %v5890, %v5579
        %v5892 = vmul.f32 %v5891, %v5890
        %v5893 = vmul.f32 0.5, %v5892
        %v5894 = vsub.f32 1.5, %v5893
        %v5895 = vmul.f32 %v5890, %v5894
        %vm5896 = vweird.f32 %v5579
        %vm5897 = vweird.f32 %v5890
        %vm5898 = vmor %vm5896, %vm5897
        %v5899 = vsel %vm5898, %v5890, %v5895
        %v5900 = vmul.f32 %v5388, %v5589
        %v5901 = vmul.f32 %v5389, %v5599
        %v5902 = vmul.f32 %v5390, %v5609
        %v5903 = vmul.f32 %v5391, %v5619
        %v5904 = vmul.f32 %v5392, %v5629
        %v5905 = vmul.f32 %v5393, %v5639
        %v5906 = vmul.f32 %v5394, %v5649
        %v5907 = vmul.f32 %v5395, %v5659
        %v5908 = vmul.f32 %v5396, %v5669
        %v5909 = vmul.f32 %v5397, %v5679
        %v5910 = vmul.f32 %v5398, %v5689
        %v5911 = vmul.f32 %v5399, %v5699
        %v5912 = vmul.f32 %v5400, %v5709
        %v5913 = vmul.f32 %v5401, %v5719
        %v5914 = vmul.f32 %v5402, %v5729
        %v5915 = vmul.f32 %v5403, %v5739
        %v5916 = vmul.f32 %v5404, %v5749
        %v5917 = vmul.f32 %v5405, %v5759
        %v5918 = vmul.f32 %v5406, %v5769
        %v5919 = vmul.f32 %v5407, %v5779
        %v5920 = vmul.f32 %v5408, %v5789
        %v5921 = vmul.f32 %v5409, %v5799
        %v5922 = vmul.f32 %v5410, %v5809
        %v5923 = vmul.f32 %v5411, %v5819
        %v5924 = vmul.f32 %v5412, %v5829
        %v5925 = vmul.f32 %v5413, %v5839
        %v5926 = vmul.f32 %v5414, %v5849
        %v5927 = vmul.f32 %v5415, %v5859
        %v5928 = vmul.f32 %v5416, %v5869
        %v5929 = vmul.f32 %v5417, %v5879
        %v5930 = vmul.f32 %v5418, %v5889
        %v5931 = vmul.f32 %v5419, %v5899
        %v5932 = vperm.slane %v5258, 0
        %v5933 = vmul.f32 %v5900, %v5932
        %v5934 = vmul.f32 %v5901, %v5932
        %v5935 = vmul.f32 %v5902, %v5932
        %v5936 = vmul.f32 %v5903, %v5932
        %v5937 = vmul.f32 %v5904, %v5932
        %v5938 = vmul.f32 %v5905, %v5932
        %v5939 = vmul.f32 %v5906, %v5932
        %v5940 = vmul.f32 %v5907, %v5932
        %v5941 = vmul.f32 %v5908, %v5932
        %v5942 = vmul.f32 %v5909, %v5932
        %v5943 = vmul.f32 %v5910, %v5932
        %v5944 = vmul.f32 %v5911, %v5932
        %v5945 = vmul.f32 %v5912, %v5932
        %v5946 = vmul.f32 %v5913, %v5932
        %v5947 = vmul.f32 %v5914, %v5932
        %v5948 = vmul.f32 %v5915, %v5932
        %v5949 = vmul.f32 %v5916, %v5932
        %v5950 = vmul.f32 %v5917, %v5932
        %v5951 = vmul.f32 %v5918, %v5932
        %v5952 = vmul.f32 %v5919, %v5932
        %v5953 = vmul.f32 %v5920, %v5932
        %v5954 = vmul.f32 %v5921, %v5932
        %v5955 = vmul.f32 %v5922, %v5932
        %v5956 = vmul.f32 %v5923, %v5932
        %v5957 = vmul.f32 %v5924, %v5932
        %v5958 = vmul.f32 %v5925, %v5932
        %v5959 = vmul.f32 %v5926, %v5932
        %v5960 = vmul.f32 %v5927, %v5932
        %v5961 = vmul.f32 %v5928, %v5932
        %v5962 = vmul.f32 %v5929, %v5932
        %v5963 = vmul.f32 %v5930, %v5932
        %v5964 = vmul.f32 %v5931, %v5932
        %v5965 = vperm.slane %v5259, 0
        %v5966 = vadd.f32 %v5933, %v5965
        %v5967 = vadd.f32 %v5934, %v5965
        %v5968 = vadd.f32 %v5935, %v5965
        %v5969 = vadd.f32 %v5936, %v5965
        %v5970 = vadd.f32 %v5937, %v5965
        %v5971 = vadd.f32 %v5938, %v5965
        %v5972 = vadd.f32 %v5939, %v5965
        %v5973 = vadd.f32 %v5940, %v5965
        %v5974 = vadd.f32 %v5941, %v5965
        %v5975 = vadd.f32 %v5942, %v5965
        %v5976 = vadd.f32 %v5943, %v5965
        %v5977 = vadd.f32 %v5944, %v5965
        %v5978 = vadd.f32 %v5945, %v5965
        %v5979 = vadd.f32 %v5946, %v5965
        %v5980 = vadd.f32 %v5947, %v5965
        %v5981 = vadd.f32 %v5948, %v5965
        %v5982 = vadd.f32 %v5949, %v5965
        %v5983 = vadd.f32 %v5950, %v5965
        %v5984 = vadd.f32 %v5951, %v5965
        %v5985 = vadd.f32 %v5952, %v5965
        %v5986 = vadd.f32 %v5953, %v5965
        %v5987 = vadd.f32 %v5954, %v5965
        %v5988 = vadd.f32 %v5955, %v5965
        %v5989 = vadd.f32 %v5956, %v5965
        %v5990 = vadd.f32 %v5957, %v5965
        %v5991 = vadd.f32 %v5958, %v5965
        %v5992 = vadd.f32 %v5959, %v5965
        %v5993 = vadd.f32 %v5960, %v5965
        %v5994 = vadd.f32 %v5961, %v5965
        %v5995 = vadd.f32 %v5962, %v5965
        %v5996 = vadd.f32 %v5963, %v5965
        %v5997 = vadd.f32 %v5964, %v5965
        %v5998 = vpack.c.bf16 %v5967, %v5966
        %v5999 = vpack.c.bf16 %v5969, %v5968
        %v6000 = vpack.c.bf16 %v5971, %v5970
        %v6001 = vpack.c.bf16 %v5973, %v5972
        %v6002 = vpack.c.bf16 %v5975, %v5974
        %v6003 = vpack.c.bf16 %v5977, %v5976
        %v6004 = vpack.c.bf16 %v5979, %v5978
        %v6005 = vpack.c.bf16 %v5981, %v5980
        %v6006 = vpack.c.bf16 %v5983, %v5982
        %v6007 = vpack.c.bf16 %v5985, %v5984
        %v6008 = vpack.c.bf16 %v5987, %v5986
        %v6009 = vpack.c.bf16 %v5989, %v5988
        %v6010 = vpack.c.bf16 %v5991, %v5990
        %v6011 = vpack.c.bf16 %v5993, %v5992
        %v6012 = vpack.c.bf16 %v5995, %v5994
        %v6013 = vpack.c.bf16 %v5997, %v5996
        %s6014 = scalar_lea.vmem %s1, 320
        %v6015 = vld [vmem:[%s6014] sm:$0xf]
        %v6016 = vld [vmem:[%s6014 + $0x4] sm:$0xf]
        %v6017 = vld [vmem:[%s6014 + $0x8] sm:$0xf]
        %v6018 = vld [vmem:[%s6014 + $0xc] sm:$0xf]
        %v6019 = vld [vmem:[%s6014 + $0x10] sm:$0xf]
        %v6020 = vld [vmem:[%s6014 + $0x14] sm:$0xf]
        %v6021 = vld [vmem:[%s6014 + $0x18] sm:$0xf]
        %v6022 = vld [vmem:[%s6014 + $0x1c] sm:$0xf]
        %v6023 = vld [vmem:[%s6014 + $0x20] sm:$0xf]
        %v6024 = vld [vmem:[%s6014 + $0x24] sm:$0xf]
        %v6025 = vld [vmem:[%s6014 + $0x28] sm:$0xf]
        %v6026 = vld [vmem:[%s6014 + $0x2c] sm:$0xf]
        %v6027 = vld [vmem:[%s6014 + $0x30] sm:$0xf]
        %v6028 = vld [vmem:[%s6014 + $0x34] sm:$0xf]
        %v6029 = vld [vmem:[%s6014 + $0x38] sm:$0xf]
        %v6030 = vld [vmem:[%s6014 + $0x3c] sm:$0xf]
        %v6031 = vld [vmem:[%s2 + $0x9] sm:$0x1]
        %v6032 = vperm.slane %v6031, 0
        %v6049 = vunpack.c.l.b16 %v6015
        %v6050 = vunpack.c.l.b16 %v6016
        %v6051 = vunpack.c.l.b16 %v6017
        %v6052 = vunpack.c.l.b16 %v6018
        %v6053 = vunpack.c.l.b16 %v6019
        %v6054 = vunpack.c.l.b16 %v6020
        %v6055 = vunpack.c.l.b16 %v6021
        %v6056 = vunpack.c.l.b16 %v6022
        %v6057 = vunpack.c.l.b16 %v6023
        %v6058 = vunpack.c.l.b16 %v6024
        %v6059 = vunpack.c.l.b16 %v6025
        %v6060 = vunpack.c.l.b16 %v6026
        %v6061 = vunpack.c.l.b16 %v6027
        %v6062 = vunpack.c.l.b16 %v6028
        %v6063 = vunpack.c.l.b16 %v6029
        %v6064 = vunpack.c.l.b16 %v6030
        %v6065 = vpack.c.b16 %v6050, %v6049
        %v6066 = vpack.c.b16 %v6052, %v6051
        %v6067 = vpack.c.b16 %v6054, %v6053
        %v6068 = vpack.c.b16 %v6056, %v6055
        %v6069 = vpack.c.b16 %v6058, %v6057
        %v6070 = vpack.c.b16 %v6060, %v6059
        %v6071 = vpack.c.b16 %v6062, %v6061
        %v6072 = vpack.c.b16 %v6064, %v6063
        %6081 = vmatpush.bf16.msra.mxu0 %v6072
        %6082 = vmatpush.bf16.msra.mxu0 %v6071
        %6083 = vmatpush.bf16.msra.mxu0 %v6070
        %6084 = vmatpush.bf16.msra.mxu0 %v6069
        %6085 = vmatpush.bf16.msra.mxu0 %v6068
        %6086 = vmatpush.bf16.msra.mxu0 %v6067
        %6087 = vmatpush.bf16.msra.mxu0 %v6066
        %6088 = vmatpush.bf16.msra.mxu0 %v6065
        %6089 = vmatmul.bf16.gmra.mxu0 %v5998
        %v6090 = vpop.f32.mrf.mxu0
        %v6091 = vadd.f32 %v6032, %v6090
        %v6092 = vpop.f32.mrf.mxu0
        %v6093 = vadd.f32 %v6032, %v6092
        %6094 = vmatmul.bf16.gmra.mxu0 %v5999
        %v6095 = vpop.f32.mrf.mxu0
        %v6096 = vadd.f32 %v6032, %v6095
        %v6097 = vpop.f32.mrf.mxu0
        %v6098 = vadd.f32 %v6032, %v6097
        %6099 = vmatmul.bf16.gmra.mxu0 %v6000
        %v6100 = vpop.f32.mrf.mxu0
        %v6101 = vadd.f32 %v6032, %v6100
        %v6102 = vpop.f32.mrf.mxu0
        %v6103 = vadd.f32 %v6032, %v6102
        %6104 = vmatmul.bf16.gmra.mxu0 %v6001
        %v6105 = vpop.f32.mrf.mxu0
        %v6106 = vadd.f32 %v6032, %v6105
        %v6107 = vpop.f32.mrf.mxu0
        %v6108 = vadd.f32 %v6032, %v6107
        %6109 = vmatmul.bf16.gmra.mxu0 %v6002
        %v6110 = vpop.f32.mrf.mxu0
        %v6111 = vadd.f32 %v6032, %v6110
        %v6112 = vpop.f32.mrf.mxu0
        %v6113 = vadd.f32 %v6032, %v6112
        %6114 = vmatmul.bf16.gmra.mxu0 %v6003
        %v6115 = vpop.f32.mrf.mxu0
        %v6116 = vadd.f32 %v6032, %v6115
        %v6117 = vpop.f32.mrf.mxu0
        %v6118 = vadd.f32 %v6032, %v6117
        %6119 = vmatmul.bf16.gmra.mxu0 %v6004
        %v6120 = vpop.f32.mrf.mxu0
        %v6121 = vadd.f32 %v6032, %v6120
        %v6122 = vpop.f32.mrf.mxu0
        %v6123 = vadd.f32 %v6032, %v6122
        %6124 = vmatmul.bf16.gmra.mxu0 %v6005
        %v6125 = vpop.f32.mrf.mxu0
        %v6126 = vadd.f32 %v6032, %v6125
        %v6127 = vpop.f32.mrf.mxu0
        %v6128 = vadd.f32 %v6032, %v6127
        %6129 = vmatmul.bf16.gmra.mxu0 %v6006
        %v6130 = vpop.f32.mrf.mxu0
        %v6131 = vadd.f32 %v6032, %v6130
        %v6132 = vpop.f32.mrf.mxu0
        %v6133 = vadd.f32 %v6032, %v6132
        %6134 = vmatmul.bf16.gmra.mxu0 %v6007
        %v6135 = vpop.f32.mrf.mxu0
        %v6136 = vadd.f32 %v6032, %v6135
        %v6137 = vpop.f32.mrf.mxu0
        %v6138 = vadd.f32 %v6032, %v6137
        %6139 = vmatmul.bf16.gmra.mxu0 %v6008
        %v6140 = vpop.f32.mrf.mxu0
        %v6141 = vadd.f32 %v6032, %v6140
        %v6142 = vpop.f32.mrf.mxu0
        %v6143 = vadd.f32 %v6032, %v6142
        %6144 = vmatmul.bf16.gmra.mxu0 %v6009
        %v6145 = vpop.f32.mrf.mxu0
        %v6146 = vadd.f32 %v6032, %v6145
        %v6147 = vpop.f32.mrf.mxu0
        %v6148 = vadd.f32 %v6032, %v6147
        %6149 = vmatmul.bf16.gmra.mxu0 %v6010
        %v6150 = vpop.f32.mrf.mxu0
        %v6151 = vadd.f32 %v6032, %v6150
        %v6152 = vpop.f32.mrf.mxu0
        %v6153 = vadd.f32 %v6032, %v6152
        %6154 = vmatmul.bf16.gmra.mxu0 %v6011
        %v6155 = vpop.f32.mrf.mxu0
        %v6156 = vadd.f32 %v6032, %v6155
        %v6157 = vpop.f32.mrf.mxu0
        %v6158 = vadd.f32 %v6032, %v6157
        %6159 = vmatmul.bf16.gmra.mxu0 %v6012
        %v6160 = vpop.f32.mrf.mxu0
        %v6161 = vadd.f32 %v6032, %v6160
        %v6162 = vpop.f32.mrf.mxu0
        %v6163 = vadd.f32 %v6032, %v6162
        %6164 = vmatmul.bf16.gmra.mxu0 %v6013
        %v6165 = vpop.f32.mrf.mxu0
        %v6166 = vadd.f32 %v6032, %v6165
        %v6167 = vpop.f32.mrf.mxu0
        %v6168 = vadd.f32 %v6032, %v6167
        %6169 = vdwg.mxu0
        %6170 = vst [vmem:[%s164] sm:$0xff] %v6091
        %6171 = vst [vmem:[%s164 + $0x8] sm:$0xff] %v6093
        %6172 = vst [vmem:[%s164 + $0x10] sm:$0xff] %v6096
        %6173 = vst [vmem:[%s164 + $0x18] sm:$0xff] %v6098
        %6174 = vst [vmem:[%s164 + $0x20] sm:$0xff] %v6101
        %6175 = vst [vmem:[%s164 + $0x28] sm:$0xff] %v6103
        %6176 = vst [vmem:[%s164 + $0x30] sm:$0xff] %v6106
        %6177 = vst [vmem:[%s164 + $0x38] sm:$0xff] %v6108
        %6178 = vst [vmem:[%s164 + $0x40] sm:$0xff] %v6111
        %6179 = vst [vmem:[%s164 + $0x48] sm:$0xff] %v6113
        %6180 = vst [vmem:[%s164 + $0x50] sm:$0xff] %v6116
        %6181 = vst [vmem:[%s164 + $0x58] sm:$0xff] %v6118
        %6182 = vst [vmem:[%s164 + $0x60] sm:$0xff] %v6121
        %6183 = vst [vmem:[%s164 + $0x68] sm:$0xff] %v6123
        %6184 = vst [vmem:[%s164 + $0x70] sm:$0xff] %v6126
        %6185 = vst [vmem:[%s164 + $0x78] sm:$0xff] %v6128
        %6186 = vst [vmem:[%s164 + $0x80] sm:$0xff] %v6131
        %6187 = vst [vmem:[%s164 + $0x88] sm:$0xff] %v6133
        %6188 = vst [vmem:[%s164 + $0x90] sm:$0xff] %v6136
        %6189 = vst [vmem:[%s164 + $0x98] sm:$0xff] %v6138
        %6190 = vst [vmem:[%s164 + $0xa0] sm:$0xff] %v6141
        %6191 = vst [vmem:[%s164 + $0xa8] sm:$0xff] %v6143
        %6192 = vst [vmem:[%s164 + $0xb0] sm:$0xff] %v6146
        %6193 = vst [vmem:[%s164 + $0xb8] sm:$0xff] %v6148
        %6194 = vst [vmem:[%s164 + $0xc0] sm:$0xff] %v6151
        %6195 = vst [vmem:[%s164 + $0xc8] sm:$0xff] %v6153
        %6196 = vst [vmem:[%s164 + $0xd0] sm:$0xff] %v6156
        %6197 = vst [vmem:[%s164 + $0xd8] sm:$0xff] %v6158
        %6198 = vst [vmem:[%s164 + $0xe0] sm:$0xff] %v6161
        %6199 = vst [vmem:[%s164 + $0xe8] sm:$0xff] %v6163
        %6200 = vst [vmem:[%s164 + $0xf0] sm:$0xff] %v6166
        %6201 = vst [vmem:[%s164 + $0xf8] sm:$0xff] %v6168
        %s6202 = sand.u32 %s93, 1
        %s6203 = scalar_lea.sflag [#allocation3], %s6202
        %s6204 = sand.u32 %s93, 1
        %s6205 = smul.addr %s6204, 256
        %s6206 = scalar_lea.vmem [#allocation2], %s6205
        // Predicated region
        $region33: #{tpu_custom_call.1} parent=31 // pred_check
          %p6207 = pneg %p103
        $region34: #{tpu_custom_call.1} parent=31 // pred_check_branch
          %6209 = sbr.rel (%p6207) target = $region36
        $region35: #{tpu_custom_call.1} parent=31 // pred_region
          %s6210 = smul.u32 32, %s17
          %6212 = vsyncadd %s6203, 0
          %s6213 = smul.addr %s6210, 8
          %s6214 = scalar_lea.hbm %s3, %s6213
          %s6215 = sshll.u32 %s6206, 4
          %s6216 = int_to_ptr.vmem [resolvable:$true] %s6215
          %s6217 = sshll.u32 %s6214, 4
          %s6218 = int_to_ptr.hbm [resolvable:$true] %s6217
          %6223 = dma.vmem_to_hbm [thread:$0]  %s6216, 4096, %s6218, %s6203, 128, 128, 8
        $region36: #{tpu_custom_call.1} parent=31 // pred_fallthru
          _
      $region32: #{tpu_custom_call.1} parent=5 // pred_fallthru
        _
      %p6224 = scmp.le.s32.totalorder 2, %s12
      // Predicated region
      $region37: #{tpu_custom_call.1} parent=5 // pred_check
        %p6225 = pneg %p6224
      $region38: #{tpu_custom_call.1} parent=5 // pred_check_branch
        %6227 = sbr.rel (%p6225) target = $region40
      $region39: #{tpu_custom_call.1} parent=5 // pred_region
        %s6228 = ssub.s32 %s12, 2
        // Predicated region
        $region41: #{tpu_custom_call.1} parent=39 // pred_check
          %p6229 = pneg %p109
        $region42: #{tpu_custom_call.1} parent=39 // pred_check_branch
          %6231 = sbr.rel (%p6229) target = $region44
        $region43: #{tpu_custom_call.1} parent=39 // pred_region
          %s6232 = sand.u32 %s94, 1
          %s6233 = scalar_lea.sflag [#allocation3], %s6232
          %s6234 = sand.u32 %s94, 1
          %s6235 = smul.addr %s6234, 256
          %s6236 = scalar_lea.vmem [#allocation2], %s6235
          %6238 = dma.done %s6233, 4096
        $region44: #{tpu_custom_call.1} parent=39 // pred_fallthru
          _
      $region40: #{tpu_custom_call.1} parent=5 // pred_fallthru
        _
    $region6: #{tpu_custom_call.1} parent=1 // loop_footer
      %s16 = sadd.s32 1, %s12
    $region7: #{tpu_custom_call.1} parent=1 // loop_footer_branch
      %11 = sbr.rel target = $region3
    $region8: #{tpu_custom_call.1} parent=1 // loop_exit
      _
    %6239 = vsyncpa [#allocation3], 1
    %s6240 = scalar_lea.sflag [#allocation3], 1
    %6241 = vsyncpa %s6240, 1

</llo_original>
